<compile_context>
chip_gen: v5e
topology: v5e:2x2
jax: 0.10.0
libtpu: 0.0.40
codegen_flags: <defaults>
</compile_context>

<pallas_src>
from math import ceil

import jax
import jax.numpy as jnp
from jax import lax
from jax.experimental import pallas as pl
from jax.experimental.pallas import tpu as pltpu


def _round_up(x, m):
    return ((x + m - 1) // m) * m


def _choose_tm(m):
    """Largest row tile in {2048,...,128} with >=2 grid steps, preferring divisors."""
    cands = [t for t in (2048, 1024, 512, 256, 128) if m >= 2 * t]
    if not cands:
        return 128
    for t in cands:
        if m % t == 0:
            return t
    return cands[0]


def _vmem_limit_bytes():
    """~75% of physical VMEM, capped at 96 MiB (v5e/v6e ~96 MiB, v7x ~48 MiB)."""
    try:
        cap = int(pltpu.get_tpu_info().vmem_capacity_bytes)
        return min(96 * 1024 * 1024, (cap * 3) // 4)
    except Exception:
        return 48 * 1024 * 1024


def _pad_rows(x, axis, mp):
    m = x.shape[axis]
    if m == mp:
        return x
    pads = [(0, 0)] * x.ndim
    pads[axis] = (0, mp - m)
    return jnp.pad(x, pads)


# ----------------------------------------------------------------------------
# Pallas kernels
# ----------------------------------------------------------------------------
def _ctx67_kernel(cols_ref, w_ref, rgb_ref, o_ref):
    # 7x7 conv (im2col matmul, bias-free) + ReLU, fused with RGB passthrough:
    # output lanes 0..2 = input RGB, lanes 3..66 = ReLU(conv features), bf16.
    feat = jnp.dot(cols_ref[...], w_ref[...], preferred_element_type=jnp.float32)
    feat = jnp.maximum(feat, 0.0)
    o_ref[...] = jnp.concatenate(
        [rgb_ref[...], feat.astype(o_ref.dtype)], axis=-1)


def _dfnet_kernel(i01_ref, c_ref, r_ref, g_ref, b_ref,
                  w01_ref, w6_ref, bias_ref, o_ref):
    # Fused DFNet 1x1 conv (408->96, split into I0/I1 + 6 warped-frame pieces
    # so the 408-channel concat never exists in HBM) -> channel softmax ->
    # DynFilter weighted sums for R, G, B.  Output is a small (tm, 8) slab.
    logits = jnp.dot(i01_ref[...], w01_ref[...],
                     preferred_element_type=jnp.float32)
    for f in range(6):
        logits = logits + jnp.dot(c_ref[f], w6_ref[f],
                                  preferred_element_type=jnp.float32)
    logits = logits + bias_ref[...]
    m = jnp.max(logits, axis=-1, keepdims=True)
    e = jnp.exp(logits - m)
    wgt = e / jnp.sum(e, axis=-1, keepdims=True)       # exact divide (HBM-bound)
    r = jnp.sum(r_ref[...].astype(jnp.float32) * wgt, axis=-1, keepdims=True)
    g = jnp.sum(g_ref[...].astype(jnp.float32) * wgt, axis=-1, keepdims=True)
    b = jnp.sum(b_ref[...].astype(jnp.float32) * wgt, axis=-1, keepdims=True)
    pad = jnp.zeros((r.shape[0], o_ref.shape[-1] - 3), jnp.float32)
    o_ref[...] = jnp.concatenate([r, g, b, pad], axis=-1).astype(o_ref.dtype)


# ----------------------------------------------------------------------------
# Pallas wrappers
# ----------------------------------------------------------------------------
def im2col_nhwc(x, k):
    """x: (B,H,W,C) -> (B*H*W, C*k*k); column order (c, kh, kw) = torch weight order."""
    B, H, W, C = x.shape
    p = k // 2
    xp = jnp.pad(x, ((0, 0), (p, p), (p, p), (0, 0)))
    taps = [xp[:, dy:dy + H, dx:dx + W, :] for dy in range(k) for dx in range(k)]
    cols = jnp.stack(taps, axis=-1)                      # (B,H,W,C,k*k)
    return cols.reshape(B * H * W, C * k * k)


def pallas_context_features(x_nhwc, ctx_w, vmem_limit):
    """Conv2d(3,64,7x7,pad 3,bias=False)+ReLU fused with RGB passthrough.

    x_nhwc: (B,H,W,3) f32.  Returns (B,H,W,67) bf16: [...,0:3]=RGB, [...,3:]=features.
    """
    B, H, W, _ = x_nhwc.shape
    M = B * H * W
    xb = x_nhwc.astype(jnp.bfloat16)
    # TODO(synk): im2col still materializes a 49x-expanded tensor in HBM; a
    #             halo-DMA spatial tile inside the kernel would remove it.
    cols = im2col_nhwc(xb, 7)                            # (M, 147) bf16
    rgb = xb.reshape(M, 3)
    Kc = cols.shape[1]
    w2 = jnp.transpose(ctx_w.reshape(64, Kc)).astype(jnp.bfloat16)   # (147, 64)

    tm = _choose_tm(M)
    Mp = _round_up(M, tm)
    cols = _pad_rows(cols, 0, Mp)
    rgb = _pad_rows(rgb, 0, Mp)

    out = pl.pallas_call(
        _ctx67_kernel,
        out_shape=jax.ShapeDtypeStruct((Mp, 67), jnp.bfloat16),
        grid_spec=pltpu.PrefetchScalarGridSpec(
            num_scalar_prefetch=0,
            grid=(Mp // tm,),
            in_specs=[
                pl.BlockSpec((tm, Kc), lambda i: (i, 0)),   # lane dim = full 147
                pl.BlockSpec((Kc, 64), lambda i: (0, 0)),
                pl.BlockSpec((tm, 3), lambda i: (i, 0)),
            ],
            out_specs=pl.BlockSpec((tm, 67), lambda i: (i, 0)),
        ),
        compiler_params=pltpu.CompilerParams(
            dimension_semantics=("parallel",),
            vmem_limit_bytes=vmem_limit),
    )(cols, w2, rgb)
    if Mp != M:
        out = out[:M]
    return out.reshape(B, H, W, 67)


def pallas_dfnet_dynfilter(i01_rows, warped6, r_exp, g_exp, b_exp,
                           w01, w6, bias, vmem_limit):
    """Fused DFNet(1x1, 408->96) + softmax(channels) + DynFilter.  Returns (M,3) f32."""
    M = i01_rows.shape[0]
    tm = _choose_tm(M)
    Mp = _round_up(M, tm)
    i01 = _pad_rows(i01_rows, 0, Mp)
    wrp = _pad_rows(warped6, 1, Mp)
    r = _pad_rows(r_exp, 0, Mp)
    g = _pad_rows(g_exp, 0, Mp)
    b = _pad_rows(b_exp, 0, Mp)

    out = pl.pallas_call(
        _dfnet_kernel,
        out_shape=jax.ShapeDtypeStruct((Mp, 8), jnp.float32),
        grid_spec=pltpu.PrefetchScalarGridSpec(
            num_scalar_prefetch=0,
            grid=(Mp // tm,),
            in_specs=[
                pl.BlockSpec((tm, 6), lambda i: (i, 0)),         # I0|I1 RGB rows
                pl.BlockSpec((6, tm, 67), lambda i: (0, i, 0)),  # 6 warped frames
                pl.BlockSpec((tm, 96), lambda i: (i, 0)),        # R candidates
                pl.BlockSpec((tm, 96), lambda i: (i, 0)),        # G candidates
                pl.BlockSpec((tm, 96), lambda i: (i, 0)),        # B candidates
                pl.BlockSpec((6, 96), lambda i: (0, 0)),         # DF weights (I0|I1)
                pl.BlockSpec((6, 67, 96), lambda i: (0, 0, 0)),  # DF weights (frames)
                pl.BlockSpec((1, 96), lambda i: (0, 0)),         # DF bias
            ],
            out_specs=pl.BlockSpec((tm, 8), lambda i: (i, 0)),
        ),
        compiler_params=pltpu.CompilerParams(
            dimension_semantics=("parallel",),
            vmem_limit_bytes=vmem_limit),
    )(i01, wrp, r, g, b, w01, w6, bias)
    return out[:M, :3]


# ----------------------------------------------------------------------------
# JAX glue: bilinear resize (align_corners=True), backward warp, local expand
# ----------------------------------------------------------------------------
def resize_bilinear_nhwc(x, out_h, out_w):
    B, H, W, C = x.shape
    ys = (jnp.arange(out_h, dtype=jnp.float32) * (H - 1) / (out_h - 1)
          if out_h > 1 else jnp.zeros((out_h,), jnp.float32))
    xs = (jnp.arange(out_w, dtype=jnp.float32) * (W - 1) / (out_w - 1)
          if out_w > 1 else jnp.zeros((out_w,), jnp.float32))
    y0 = jnp.floor(ys).astype(jnp.int32)
    y1 = jnp.minimum(y0 + 1, H - 1)
    wy = ys - y0.astype(jnp.float32)
    x0 = jnp.floor(xs).astype(jnp.int32)
    x1 = jnp.minimum(x0 + 1, W - 1)
    wx = xs - x0.astype(jnp.float32)
    r0 = jnp.take(x, y0, axis=1)
    r1 = jnp.take(x, y1, axis=1)
    rows = r0 * (1 - wy)[None, :, None, None] + r1 * wy[None, :, None, None]
    c0 = jnp.take(rows, x0, axis=2)
    c1 = jnp.take(rows, x1, axis=2)
    return c0 * (1 - wx)[None, None, :, None] + c1 * wx[None, None, :, None]


def warp_nhwc(x, flo):
    """Backward warp, bilinear, zero outside.  x: (B,H,W,C), flo: (B,H,W,2) = (dx,dy).

    All six per-time-step warps are batched into a single call; values stay bf16.
    """
    # TODO(synk): gather stays in XLA glue; a Pallas DMA-gather kernel is the
    #             long-term fix for HBM traffic at real resolutions.
    B, H, W, C = x.shape
    gx = jnp.arange(W, dtype=jnp.float32)[None, None, :] + flo[..., 0]
    gy = jnp.arange(H, dtype=jnp.float32)[None, :, None] + flo[..., 1]
    x0f = jnp.floor(gx)
    y0f = jnp.floor(gy)
    wx = (gx - x0f)[..., None]
    wy = (gy - y0f)[..., None]
    x2 = x.reshape(B, H * W, C)

    def sample(yf, xf):
        inb = ((xf >= 0) & (xf <= W - 1) & (yf >= 0) & (yf <= H - 1))
        yc = jnp.clip(yf, 0, H - 1).astype(jnp.int32)
        xc = jnp.clip(xf, 0, W - 1).astype(jnp.int32)
        idx = (yc * W + xc).reshape(B, H * W, 1)
        g = jnp.take_along_axis(x2, jnp.broadcast_to(idx, (B, H * W, C)), axis=1)
        return g.reshape(B, H, W, C).astype(jnp.float32) * inb[..., None].astype(jnp.float32)

    v00 = sample(y0f, x0f)
    v01 = sample(y0f, x0f + 1.0)
    v10 = sample(y0f + 1.0, x0f)
    v11 = sample(y0f + 1.0, x0f + 1.0)
    out = ((1 - wy) * ((1 - wx) * v00 + wx * v01)
           + wy * ((1 - wx) * v10 + wx * v11))
    return out.astype(x.dtype)


def local_expand_nhwc(x, k=4):
    """x: (N,H,W,C) -> (N,H,W,C*k*k), frame-major/tap-minor, asymmetric same pad."""
    N, H, W, C = x.shape
    p_lo, p_hi = (k - 1) // 2, k // 2
    xp = jnp.pad(x, ((0, 0), (p_lo, p_hi), (p_lo, p_hi), (0, 0)))
    taps = [xp[:, dy:dy + H, dx:dx + W, :] for dy in range(k) for dx in range(k)]
    t = jnp.stack(taps, axis=-1)                         # (N,H,W,C,k*k)
    return t.reshape(N, H, W, C * k * k)


# ----------------------------------------------------------------------------
# BMBC module (Pallas-backed)
# ----------------------------------------------------------------------------
class BMBCPallas:
    def __init__(self, height, width, sf, key):
        self.Hi, self.Wi = height, width
        self.H, self.W = float(height), float(width)
        self.H_i = ceil(height / 32) * 32
        self.W_i = ceil(width / 32) * 32
        self.H_, self.W_ = float(self.H_i), float(self.W_i)
        self.time_step = [kk / sf for kk in range(1, sf)]
        self.time_step_inverse = [1.0 - t for t in self.time_step]
        self.vmem_limit = _vmem_limit_bytes()

        ks = jax.random.split(key, 6)
        # context_layer: Conv2d(3, 64, 7x7, pad 3, bias=False) + ReLU
        self.ctx_w = jax.random.normal(ks[0], (64, 3, 7, 7), jnp.float32) * 0.05
        # TODO(synk): real BMNet architecture is not in the provided source;
        #             stand-in = 3x3 conv (6->2 flow) + learned time bias,
        #             run via lax.conv (Cout=2 is too narrow for a Pallas slab).
        self.bm_w = jax.random.normal(ks[1], (2, 6, 3, 3), jnp.float32) * 0.05
        self.bm_w_hwio = jnp.transpose(self.bm_w, (2, 3, 1, 0))
        self.bm_b = jax.random.normal(ks[2], (2,), jnp.float32) * 0.05
        self.bm_time = jax.random.normal(ks[3], (2,), jnp.float32) * 0.05
        # TODO(synk): real DFNet(32,4,16,6) architecture is not in the provided
        #             source; stand-in = one 1x1 conv (408 -> 6*16 = 96 channels).
        self.df_w = jax.random.normal(ks[4], (96, 408, 1, 1), jnp.float32) * 0.05
        self.df_b = jax.random.normal(ks[5], (96,), jnp.float32) * 0.05

    # --- forward --------------------------------------------------------
    def forward(self, I0, I1, target, count):
        target = target.at[count].set(I0[0])
        count += 1
        N = I0.shape[0]
        Hi, Wi = self.Hi, self.Wi
        M = N * Hi * Wi

        # NCHW -> NHWC once (3-channel inputs, tiny).
        I0n = jnp.transpose(I0, (0, 2, 3, 1))
        I1n = jnp.transpose(I1, (0, 2, 3, 1))

        # --- BMNet stand-in (computed once; per-time variants = cheap bias add)
        cat01_rs = resize_bilinear_nhwc(
            jnp.concatenate((I0n, I1n), axis=-1), self.H_i, self.W_i)
        base_flow = lax.conv_general_dilated(
            cat01_rs, self.bm_w_hwio, (1, 1), 'SAME',
            dimension_numbers=('NHWC', 'HWIO', 'NHWC')) + self.bm_b
        bm_time = self.bm_time.reshape(1, 1, 1, 2)
        variants = [base_flow * 2.0, (base_flow + bm_time) * -2.0]
        variants += [base_flow + t * bm_time for t in self.time_step]
        flow_scale = jnp.array([self.W / self.W_, self.H / self.H_],
                               jnp.float32).reshape(1, 1, 1, 2)
        flows = resize_bilinear_nhwc(jnp.concatenate(variants, axis=0),
                                     Hi, Wi) * flow_scale
        F_0_1 = flows[0:N]
        F_1_0 = flows[N:2 * N]
        BMs = [flows[(2 + i) * N:(3 + i) * N]
               for i in range(len(self.time_step))]

        # --- context features: one fused Pallas conv for I0+I1, bf16, 67 channels
        X = pallas_context_features(jnp.concatenate((I0n, I1n), axis=0),
                                    self.ctx_w, self.vmem_limit)
        X0n, X1n = X[:N], X[N:]
        # Warp inputs for C1..C6, frame-major batch: [X0, X1, X0, X1, X0, X1]
        X01_6 = jnp.concatenate([X0n, X1n] * 3, axis=0)          # (6N,H,W,67) bf16

        # DFNet input pieces that never change across time steps.
        i01_rows = jnp.concatenate((I0n, I1n), axis=-1).astype(
            jnp.bfloat16).reshape(M, 6)
        w2 = jnp.transpose(self.df_w.reshape(96, 408)).astype(jnp.bfloat16)  # (408,96)
        w01 = jnp.concatenate((w2[0:3], w2[405:408]), axis=0)                # (6,96)
        w6 = w2[3:405].reshape(6, 67, 96)                                    # (6,67,96)
        bias = self.df_b.astype(jnp.float32).reshape(1, 96)

        for i, (t, t_inv) in enumerate(zip(self.time_step, self.time_step_inverse)):
            BM = BMs[i]
            flows6 = jnp.concatenate(
                (-t * F_0_1, t_inv * F_0_1, t * F_1_0, (t - 1.0) * F_1_0,
                 BM * (-2.0 * t), BM * (2.0 * t_inv)), axis=0)   # (6N,H,W,2)
            warped = warp_nhwc(X01_6, flows6)                    # (6N,H,W,67) bf16

            # r/g/b DynFilter candidates built straight from the warped frames
            # (no 408-channel concat, no stride-67 slice).
            cands = []
            for c in range(3):
                wc = warped[..., c].reshape(6, N, Hi, Wi).transpose(1, 2, 3, 0)
                cands.append(local_expand_nhwc(wc, 4).reshape(M, 96))
            warped6 = warped.reshape(6, M, 67)

            rgb = pallas_dfnet_dynfilter(i01_rows, warped6,
                                         cands[0], cands[1], cands[2],
                                         w01, w6, bias, self.vmem_limit)  # (M,3) f32
            rgb_nchw = rgb.reshape(N, Hi, Wi, 3).transpose(0, 3, 1, 2)
            target = target.at[count, 0:3].set(rgb_nchw[0])
            count += 1
        return count, target


# ----------------------------------------------------------------------------
if __name__ == "__main__":
    height, width, sf = 16, 16, 2
    model = BMBCPallas(height, width, sf, jax.random.PRNGKey(42))

    key = jax.random.PRNGKey(0)
    k0, k1 = jax.random.split(key)
    I0 = jax.random.uniform(k0, (1, 3, height, width), jnp.float32)
    I1 = jax.random.uniform(k1, (1, 3, height, width), jnp.float32)
    target = jnp.zeros((4, 3, height, width), jnp.float32)

    fwd = jax.jit(model.forward, static_argnums=3)
    count, target = fwd(I0, I1, target, 0)
    jax.block_until_ready(target)
    assert int(count) == sf  # one keyframe + (sf-1) interpolated frames written
    print("KERNEL_OK")
</pallas_src>

<mosaic_0001>
module attributes {stable_mosaic.version = 11 : i64} {
  func.func @_ctx67_kernel(%arg0: i32, %arg1: memref<256x147xbf16, #tpu.memory_space<vmem>>, %arg2: memref<147x64xbf16, #tpu.memory_space<vmem>>, %arg3: memref<256x3xbf16, #tpu.memory_space<vmem>>, %arg4: memref<256x67xbf16, #tpu.memory_space<vmem>>) attributes {dimension_semantics = [#tpu.dimension_semantics<parallel>], iteration_bounds = array<i64: 2>, scalar_prefetch = 0 : i64, scratch_operands = 0 : i64, tpu.core_type = #tpu.core_type<tc>, window_params = [{transform_indices = @transform_0, window_bounds = array<i64: 256, 147>}, {pipeline_mode = #tpu.pipeline_mode<synchronous>, transform_indices = @transform_1, window_bounds = array<i64: 147, 64>}, {transform_indices = @transform_2, window_bounds = array<i64: 256, 3>}, {transform_indices = @transform_3, window_bounds = array<i64: 256, 67>}]} {
    %c0 = arith.constant 0 : index
    %c0_0 = arith.constant 0 : index
    %0 = vector.load %arg1[%c0, %c0_0] : memref<256x147xbf16, #tpu.memory_space<vmem>>, vector<256x147xbf16>
    %c0_1 = arith.constant 0 : index
    %c0_2 = arith.constant 0 : index
    %1 = vector.load %arg2[%c0_1, %c0_2] : memref<147x64xbf16, #tpu.memory_space<vmem>>, vector<147x64xbf16>
    %cst = arith.constant dense<0.000000e+00> : vector<256x64xf32>
    %2 = tpu.matmul %0, %1, %cst {dimension_numbers = #tpu.dot_dimension_numbers<[1], [0], [0], [1], [0, 0, 1, 1], [], []>} : vector<256x147xbf16>, vector<147x64xbf16>, vector<256x64xf32> -> vector<256x64xf32>
    %cst_3 = arith.constant 0.000000e+00 : f32
    %3 = vector.broadcast %cst_3 : f32 to vector<256x64xf32>
    %4 = arith.maximumf %2, %3 : vector<256x64xf32>
    %c0_4 = arith.constant 0 : index
    %c0_5 = arith.constant 0 : index
    %5 = vector.load %arg3[%c0_4, %c0_5] : memref<256x3xbf16, #tpu.memory_space<vmem>>, vector<256x3xbf16>
    %6 = arith.truncf %4 : vector<256x64xf32> to vector<256x64xbf16>
    %7 = tpu.concatenate %5, %6 in 1 : vector<256x3xbf16>, vector<256x64xbf16> -> vector<256x67xbf16>
    %c0_6 = arith.constant 0 : index
    %c0_7 = arith.constant 0 : index
    %8 = vector.load %arg4[%c0_6, %c0_7] : memref<256x67xbf16, #tpu.memory_space<vmem>>, vector<256x67xbf16>
    tpu.vector_store %arg4[%c0_6, %c0_7], %7 {strides = array<i32>} : memref<256x67xbf16, #tpu.memory_space<vmem>>, vector<256x67xbf16>,
    return
  }
  func.func @transform_0(%arg0: i32) -> (i32, i32) {
    %c0_i32 = arith.constant 0 : i32
    %c0_i32_0 = arith.constant 0 : i32
    return %arg0, %c0_i32 : i32, i32
  }
  func.func @transform_1(%arg0: i32) -> (i32, i32) {
    %c0_i32 = arith.constant 0 : i32
    %c0_i32_0 = arith.constant 0 : i32
    %c0_i32_1 = arith.constant 0 : i32
    return %c0_i32, %c0_i32_0 : i32, i32
  }
  func.func @transform_2(%arg0: i32) -> (i32, i32) {
    %c0_i32 = arith.constant 0 : i32
    %c0_i32_0 = arith.constant 0 : i32
    return %arg0, %c0_i32 : i32, i32
  }
  func.func @transform_3(%arg0: i32) -> (i32, i32) {
    %c0_i32 = arith.constant 0 : i32
    %c0_i32_0 = arith.constant 0 : i32
    return %arg0, %c0_i32 : i32, i32
  }
}

module attributes {stable_mosaic.version = 11 : i64} {
  func.func @_dfnet_kernel(%arg0: i32, %arg1: memref<128x6xbf16, #tpu.memory_space<vmem>>, %arg2: memref<6x128x67xbf16, #tpu.memory_space<vmem>>, %arg3: memref<128x96xbf16, #tpu.memory_space<vmem>>, %arg4: memref<128x96xbf16, #tpu.memory_space<vmem>>, %arg5: memref<128x96xbf16, #tpu.memory_space<vmem>>, %arg6: memref<6x96xbf16, #tpu.memory_space<vmem>>, %arg7: memref<6x67x96xbf16, #tpu.memory_space<vmem>>, %arg8: memref<1x96xf32, #tpu.memory_space<vmem>>, %arg9: memref<128x8xf32, #tpu.memory_space<vmem>>) attributes {dimension_semantics = [#tpu.dimension_semantics<parallel>], iteration_bounds = array<i64: 2>, scalar_prefetch = 0 : i64, scratch_operands = 0 : i64, tpu.core_type = #tpu.core_type<tc>, window_params = [{transform_indices = @transform_0, window_bounds = array<i64: 128, 6>}, {transform_indices = @transform_1, window_bounds = array<i64: 6, 128, 67>}, {transform_indices = @transform_2, window_bounds = array<i64: 128, 96>}, {transform_indices = @transform_3, window_bounds = array<i64: 128, 96>}, {transform_indices = @transform_4, window_bounds = array<i64: 128, 96>}, {pipeline_mode = #tpu.pipeline_mode<synchronous>, transform_indices = @transform_5, window_bounds = array<i64: 6, 96>}, {pipeline_mode = #tpu.pipeline_mode<synchronous>, transform_indices = @transform_6, window_bounds = array<i64: 6, 67, 96>}, {pipeline_mode = #tpu.pipeline_mode<synchronous>, transform_indices = @transform_7, window_bounds = array<i64: 1, 96>}, {transform_indices = @transform_8, window_bounds = array<i64: 128, 8>}]} {
    %c0 = arith.constant 0 : index
    %c0_0 = arith.constant 0 : index
    %0 = vector.load %arg1[%c0, %c0_0] : memref<128x6xbf16, #tpu.memory_space<vmem>>, vector<128x6xbf16>
    %c0_1 = arith.constant 0 : index
    %c0_2 = arith.constant 0 : index
    %1 = vector.load %arg6[%c0_1, %c0_2] : memref<6x96xbf16, #tpu.memory_space<vmem>>, vector<6x96xbf16>
    %cst = arith.constant dense<0.000000e+00> : vector<128x96xf32>
    %2 = tpu.matmul %0, %1, %cst {dimension_numbers = #tpu.dot_dimension_numbers<[1], [0], [0], [1], [0, 0, 1, 1], [], []>} : vector<128x6xbf16>, vector<6x96xbf16>, vector<128x96xf32> -> vector<128x96xf32>
    %c0_3 = arith.constant 0 : index
    %c0_4 = arith.constant 0 : index
    %c0_5 = arith.constant 0 : index
    %3 = vector.load %arg2[%c0_3, %c0_4, %c0_5] : memref<6x128x67xbf16, #tpu.memory_space<vmem>>, vector<1x128x67xbf16>
    %4 = vector.shape_cast %3 : vector<1x128x67xbf16> to vector<128x67xbf16>
    %c0_6 = arith.constant 0 : index
    %c0_7 = arith.constant 0 : index
    %c0_8 = arith.constant 0 : index
    %5 = vector.load %arg7[%c0_6, %c0_7, %c0_8] : memref<6x67x96xbf16, #tpu.memory_space<vmem>>, vector<1x67x96xbf16>
    %6 = vector.shape_cast %5 : vector<1x67x96xbf16> to vector<67x96xbf16>
    %cst_9 = arith.constant dense<0.000000e+00> : vector<128x96xf32>
    %7 = tpu.matmul %4, %6, %cst_9 {dimension_numbers = #tpu.dot_dimension_numbers<[1], [0], [0], [1], [0, 0, 1, 1], [], []>} : vector<128x67xbf16>, vector<67x96xbf16>, vector<128x96xf32> -> vector<128x96xf32>
    %8 = arith.addf %2, %7 : vector<128x96xf32>
    %c1 = arith.constant 1 : index
    %c0_10 = arith.constant 0 : index
    %c0_11 = arith.constant 0 : index
    %9 = vector.load %arg2[%c1, %c0_10, %c0_11] : memref<6x128x67xbf16, #tpu.memory_space<vmem>>, vector<1x128x67xbf16>
    %10 = vector.shape_cast %9 : vector<1x128x67xbf16> to vector<128x67xbf16>
    %c1_12 = arith.constant 1 : index
    %c0_13 = arith.constant 0 : index
    %c0_14 = arith.constant 0 : index
    %11 = vector.load %arg7[%c1_12, %c0_13, %c0_14] : memref<6x67x96xbf16, #tpu.memory_space<vmem>>, vector<1x67x96xbf16>
    %12 = vector.shape_cast %11 : vector<1x67x96xbf16> to vector<67x96xbf16>
    %cst_15 = arith.constant dense<0.000000e+00> : vector<128x96xf32>
    %13 = tpu.matmul %10, %12, %cst_15 {dimension_numbers = #tpu.dot_dimension_numbers<[1], [0], [0], [1], [0, 0, 1, 1], [], []>} : vector<128x67xbf16>, vector<67x96xbf16>, vector<128x96xf32> -> vector<128x96xf32>
    %14 = arith.addf %8, %13 : vector<128x96xf32>
    %c2 = arith.constant 2 : index
    %c0_16 = arith.constant 0 : index
    %c0_17 = arith.constant 0 : index
    %15 = vector.load %arg2[%c2, %c0_16, %c0_17] : memref<6x128x67xbf16, #tpu.memory_space<vmem>>, vector<1x128x67xbf16>
    %16 = vector.shape_cast %15 : vector<1x128x67xbf16> to vector<128x67xbf16>
    %c2_18 = arith.constant 2 : index
    %c0_19 = arith.constant 0 : index
    %c0_20 = arith.constant 0 : index
    %17 = vector.load %arg7[%c2_18, %c0_19, %c0_20] : memref<6x67x96xbf16, #tpu.memory_space<vmem>>, vector<1x67x96xbf16>
    %18 = vector.shape_cast %17 : vector<1x67x96xbf16> to vector<67x96xbf16>
    %cst_21 = arith.constant dense<0.000000e+00> : vector<128x96xf32>
    %19 = tpu.matmul %16, %18, %cst_21 {dimension_numbers = #tpu.dot_dimension_numbers<[1], [0], [0], [1], [0, 0, 1, 1], [], []>} : vector<128x67xbf16>, vector<67x96xbf16>, vector<128x96xf32> -> vector<128x96xf32>
    %20 = arith.addf %14, %19 : vector<128x96xf32>
    %c3 = arith.constant 3 : index
    %c0_22 = arith.constant 0 : index
    %c0_23 = arith.constant 0 : index
    %21 = vector.load %arg2[%c3, %c0_22, %c0_23] : memref<6x128x67xbf16, #tpu.memory_space<vmem>>, vector<1x128x67xbf16>
    %22 = vector.shape_cast %21 : vector<1x128x67xbf16> to vector<128x67xbf16>
    %c3_24 = arith.constant 3 : index
    %c0_25 = arith.constant 0 : index
    %c0_26 = arith.constant 0 : index
    %23 = vector.load %arg7[%c3_24, %c0_25, %c0_26] : memref<6x67x96xbf16, #tpu.memory_space<vmem>>, vector<1x67x96xbf16>
    %24 = vector.shape_cast %23 : vector<1x67x96xbf16> to vector<67x96xbf16>
    %cst_27 = arith.constant dense<0.000000e+00> : vector<128x96xf32>
    %25 = tpu.matmul %22, %24, %cst_27 {dimension_numbers = #tpu.dot_dimension_numbers<[1], [0], [0], [1], [0, 0, 1, 1], [], []>} : vector<128x67xbf16>, vector<67x96xbf16>, vector<128x96xf32> -> vector<128x96xf32>
    %26 = arith.addf %20, %25 : vector<128x96xf32>
    %c4 = arith.constant 4 : index
    %c0_28 = arith.constant 0 : index
    %c0_29 = arith.constant 0 : index
    %27 = vector.load %arg2[%c4, %c0_28, %c0_29] : memref<6x128x67xbf16, #tpu.memory_space<vmem>>, vector<1x128x67xbf16>
    %28 = vector.shape_cast %27 : vector<1x128x67xbf16> to vector<128x67xbf16>
    %c4_30 = arith.constant 4 : index
    %c0_31 = arith.constant 0 : index
    %c0_32 = arith.constant 0 : index
    %29 = vector.load %arg7[%c4_30, %c0_31, %c0_32] : memref<6x67x96xbf16, #tpu.memory_space<vmem>>, vector<1x67x96xbf16>
    %30 = vector.shape_cast %29 : vector<1x67x96xbf16> to vector<67x96xbf16>
    %cst_33 = arith.constant dense<0.000000e+00> : vector<128x96xf32>
    %31 = tpu.matmul %28, %30, %cst_33 {dimension_numbers = #tpu.dot_dimension_numbers<[1], [0], [0], [1], [0, 0, 1, 1], [], []>} : vector<128x67xbf16>, vector<67x96xbf16>, vector<128x96xf32> -> vector<128x96xf32>
    %32 = arith.addf %26, %31 : vector<128x96xf32>
    %c5 = arith.constant 5 : index
    %c0_34 = arith.constant 0 : index
    %c0_35 = arith.constant 0 : index
    %33 = vector.load %arg2[%c5, %c0_34, %c0_35] : memref<6x128x67xbf16, #tpu.memory_space<vmem>>, vector<1x128x67xbf16>
    %34 = vector.shape_cast %33 : vector<1x128x67xbf16> to vector<128x67xbf16>
    %c5_36 = arith.constant 5 : index
    %c0_37 = arith.constant 0 : index
    %c0_38 = arith.constant 0 : index
    %35 = vector.load %arg7[%c5_36, %c0_37, %c0_38] : memref<6x67x96xbf16, #tpu.memory_space<vmem>>, vector<1x67x96xbf16>
    %36 = vector.shape_cast %35 : vector<1x67x96xbf16> to vector<67x96xbf16>
    %cst_39 = arith.constant dense<0.000000e+00> : vector<128x96xf32>
    %37 = tpu.matmul %34, %36, %cst_39 {dimension_numbers = #tpu.dot_dimension_numbers<[1], [0], [0], [1], [0, 0, 1, 1], [], []>} : vector<128x67xbf16>, vector<67x96xbf16>, vector<128x96xf32> -> vector<128x96xf32>
    %38 = arith.addf %32, %37 : vector<128x96xf32>
    %c0_40 = arith.constant 0 : index
    %c0_41 = arith.constant 0 : index
    %39 = vector.load %arg8[%c0_40, %c0_41] : memref<1x96xf32, #tpu.memory_space<vmem>>, vector<1x96xf32>
    %40 = vector.broadcast %39 : vector<1x96xf32> to vector<128x96xf32>
    %41 = arith.addf %38, %40 : vector<128x96xf32>
    %cst_42 = arith.constant dense<0xFF800000> : vector<128xf32>
    %42 = vector.multi_reduction <maximumf>, %41, %cst_42 [1] : vector<128x96xf32> to vector<128xf32>
    %43 = vector.shape_cast %42 : vector<128xf32> to vector<128x1xf32>
    %44 = vector.broadcast %43 : vector<128x1xf32> to vector<128x96xf32>
    %45 = arith.subf %41, %44 : vector<128x96xf32>
    %46 = math.exp %45 : vector<128x96xf32>
    %cst_43 = arith.constant dense<0.000000e+00> : vector<128xf32>
    %47 = vector.multi_reduction <add>, %46, %cst_43 [1] : vector<128x96xf32> to vector<128xf32>
    %48 = vector.shape_cast %47 : vector<128xf32> to vector<128x1xf32>
    %49 = vector.broadcast %48 : vector<128x1xf32> to vector<128x96xf32>
    %50 = arith.divf %46, %49 : vector<128x96xf32>
    %c0_44 = arith.constant 0 : index
    %c0_45 = arith.constant 0 : index
    %51 = vector.load %arg3[%c0_44, %c0_45] : memref<128x96xbf16, #tpu.memory_space<vmem>>, vector<128x96xbf16>
    %52 = arith.extf %51 : vector<128x96xbf16> to vector<128x96xf32>
    %53 = arith.mulf %52, %50 : vector<128x96xf32>
    %cst_46 = arith.constant dense<0.000000e+00> : vector<128xf32>
    %54 = vector.multi_reduction <add>, %53, %cst_46 [1] : vector<128x96xf32> to vector<128xf32>
    %55 = vector.shape_cast %54 : vector<128xf32> to vector<128x1xf32>
    %c0_47 = arith.constant 0 : index
    %c0_48 = arith.constant 0 : index
    %56 = vector.load %arg4[%c0_47, %c0_48] : memref<128x96xbf16, #tpu.memory_space<vmem>>, vector<128x96xbf16>
    %57 = arith.extf %56 : vector<128x96xbf16> to vector<128x96xf32>
    %58 = arith.mulf %57, %50 : vector<128x96xf32>
    %cst_49 = arith.constant dense<0.000000e+00> : vector<128xf32>
    %59 = vector.multi_reduction <add>, %58, %cst_49 [1] : vector<128x96xf32> to vector<128xf32>
    %60 = vector.shape_cast %59 : vector<128xf32> to vector<128x1xf32>
    %c0_50 = arith.constant 0 : index
    %c0_51 = arith.constant 0 : index
    %61 = vector.load %arg5[%c0_50, %c0_51] : memref<128x96xbf16, #tpu.memory_space<vmem>>, vector<128x96xbf16>
    %62 = arith.extf %61 : vector<128x96xbf16> to vector<128x96xf32>
    %63 = arith.mulf %62, %50 : vector<128x96xf32>
    %cst_52 = arith.constant dense<0.000000e+00> : vector<128xf32>
    %64 = vector.multi_reduction <add>, %63, %cst_52 [1] : vector<128x96xf32> to vector<128xf32>
    %65 = vector.shape_cast %64 : vector<128xf32> to vector<128x1xf32>
    %cst_53 = arith.constant 0.000000e+00 : f32
    %66 = vector.broadcast %cst_53 : f32 to vector<128x5xf32>
    %67 = tpu.concatenate %55, %60, %65, %66 in 1 : vector<128x1xf32>, vector<128x1xf32>, vector<128x1xf32>, vector<128x5xf32> -> vector<128x8xf32>
    %c0_54 = arith.constant 0 : index
    %c0_55 = arith.constant 0 : index
    %68 = vector.load %arg9[%c0_54, %c0_55] : memref<128x8xf32, #tpu.memory_space<vmem>>, vector<128x8xf32>
    tpu.vector_store %arg9[%c0_54, %c0_55], %67 {strides = array<i32>} : memref<128x8xf32, #tpu.memory_space<vmem>>, vector<128x8xf32>,
    return
  }
  func.func @transform_0(%arg0: i32) -> (i32, i32) {
    %c0_i32 = arith.constant 0 : i32
    %c0_i32_0 = arith.constant 0 : i32
    return %arg0, %c0_i32 : i32, i32
  }
  func.func @transform_1(%arg0: i32) -> (i32, i32, i32) {
    %c0_i32 = arith.constant 0 : i32
    %c0_i32_0 = arith.constant 0 : i32
    %c0_i32_1 = arith.constant 0 : i32
    return %c0_i32, %arg0, %c0_i32_0 : i32, i32, i32
  }
  func.func @transform_2(%arg0: i32) -> (i32, i32) {
    %c0_i32 = arith.constant 0 : i32
    %c0_i32_0 = arith.constant 0 : i32
    return %arg0, %c0_i32 : i32, i32
  }
  func.func @transform_3(%arg0: i32) -> (i32, i32) {
    %c0_i32 = arith.constant 0 : i32
    %c0_i32_0 = arith.constant 0 : i32
    return %arg0, %c0_i32 : i32, i32
  }
  func.func @transform_4(%arg0: i32) -> (i32, i32) {
    %c0_i32 = arith.constant 0 : i32
    %c0_i32_0 = arith.constant 0 : i32
    return %arg0, %c0_i32 : i32, i32
  }
  func.func @transform_5(%arg0: i32) -> (i32, i32) {
    %c0_i32 = arith.constant 0 : i32
    %c0_i32_0 = arith.constant 0 : i32
    %c0_i32_1 = arith.constant 0 : i32
    return %c0_i32, %c0_i32_0 : i32, i32
  }
  func.func @transform_6(%arg0: i32) -> (i32, i32, i32) {
    %c0_i32 = arith.constant 0 : i32
    %c0_i32_0 = arith.constant 0 : i32
    %c0_i32_1 = arith.constant 0 : i32
    %c0_i32_2 = arith.constant 0 : i32
    return %c0_i32, %c0_i32_0, %c0_i32_1 : i32, i32, i32
  }
  func.func @transform_7(%arg0: i32) -> (i32, i32) {
    %c0_i32 = arith.constant 0 : i32
    %c0_i32_0 = arith.constant 0 : i32
    %c0_i32_1 = arith.constant 0 : i32
    return %c0_i32, %c0_i32_0 : i32, i32
  }
  func.func @transform_8(%arg0: i32) -> (i32, i32) {
    %c0_i32 = arith.constant 0 : i32
    %c0_i32_0 = arith.constant 0 : i32
    return %arg0, %c0_i32 : i32, i32
  }
}

</mosaic_0001>

<llo_original>
// kernel: forward.2
$region0: #{forward.2}
  #allocation0 [shape = 'u32[]', space=smem, size = 0x4, offset = 0x4, fixed_abs, tag = 'smem constant byte address 0x4 - core index']
  #allocation1 [shape = 'u32[72,128]{1,0:T(1,128)}', space=vmem, size = 0x9000, scoped, tag = 'internal scratch']
  %s0 = inlined_call_operand.vmem [shape: bf16[512,147], index: 0, kind: input, shape index: {}]
  %s1 = inlined_call_operand.vmem [shape: bf16[147,64], index: 1, kind: input, shape index: {}]
  %s2 = inlined_call_operand.vmem [shape: bf16[512,3], index: 2, kind: input, shape index: {}]
  %s3 = inlined_call_operand.vmem [shape: bf16[512,67], index: 3, kind: output, shape index: {}]
  %s4 = sld [smem:[#allocation0]]
  $region45: #{forward.2} parent=0
    _
  %s6 = ssub.s32 1, %s4
  %s7 = scalar_select 0, %s6, %s4
  loop: start=0, step=1, limit=4
  $region2: #{forward.2} parent=0 // loop_pre_header
    _
  $region3: #{forward.2} parent=0 // loop_header
    %s9 = sphi 0, %s13
    %p10 = scmp.ge.s32.totalorder %s9, 4
    %s19 = sphi 0, %s21
    %s22 = sphi 0, %s19
    %s23 = sphi 0, %s22
    %s39 = sphi 0, %s23
    %s43 = sphi 0, %s43
    %s45 = sphi 0, %s43
    %s46 = sphi 0, %s45
    %s60 = sphi 0, %s46
    %s66 = sphi 0, %s68
    %s69 = sphi 0, %s66
    %s70 = sphi 0, %s69
    %s86 = sphi 0, %s70
    %s92 = sphi 0, %s94
    %s95 = sphi 0, %s92
    %s96 = sphi 0, %s95
    %s112 = sphi 0, %s96
  $region4: #{forward.2} parent=0 // loop_header_branch
    %12 = sbr.rel (%p10) target = $region8
  $region5: #{forward.2} parent=0 // loop_body
    %s14 = ssub.s32 %s9, 1
    %s15 = ssub.s32 %s9, 2
    %s16 = sadd.s32 %s9, 1
    %s17 = ssub.s32 %s9, %s16
    %p18 = scmp.eq.s32.totalorder %s17, 0
    %s20 = sadd.s32 %s19, 1
    %s21 = scalar_select %p18, %s19, %s20
    %p24 = pneg %p18
    %p25 = scmp.eq.s32.totalorder %s9, 1
    %p26 = por %p24, %p25
    %p27 = scmp.ne.s32.totalorder %s19, %s22
    %p28 = scmp.eq.s32.totalorder %s9, 0
    %p29 = por %p27, %p28
    %p30 = scmp.ne.s32.totalorder %s19, %s22
    %p31 = scmp.eq.s32.totalorder %s14, 1
    %p32 = por %p30, %p31
    %p33 = scmp.ne.s32.totalorder %s22, %s23
    %p34 = scmp.eq.s32.totalorder %s14, 0
    %p35 = por %p33, %p34
    %p36 = scmp.ne.s32.totalorder %s22, %s23
    %p37 = scmp.eq.s32.totalorder %s15, 1
    %p38 = por %p36, %p37
    %p40 = scmp.ne.s32.totalorder %s23, %s39
    %p41 = scmp.eq.s32.totalorder %s15, 0
    %p42 = por %p40, %p41
    %s44 = sadd.s32 %s43, 1
    %p47 = scmp.eq.s32.totalorder %s9, 1
    %p48 = scmp.ne.s32.totalorder %s43, %s45
    %p49 = scmp.eq.s32.totalorder %s9, 0
    %p50 = por %p48, %p49
    %p51 = scmp.ne.s32.totalorder %s43, %s45
    %p52 = scmp.eq.s32.totalorder %s14, 1
    %p53 = por %p51, %p52
    %p54 = scmp.ne.s32.totalorder %s45, %s46
    %p55 = scmp.eq.s32.totalorder %s14, 0
    %p56 = por %p54, %p55
    %p57 = scmp.ne.s32.totalorder %s45, %s46
    %p58 = scmp.eq.s32.totalorder %s15, 1
    %p59 = por %p57, %p58
    %p61 = scmp.ne.s32.totalorder %s46, %s60
    %p62 = scmp.eq.s32.totalorder %s15, 0
    %p63 = por %p61, %p62
    %s64 = ssub.s32 %s9, %s16
    %p65 = scmp.eq.s32.totalorder %s64, 0
    %s67 = sadd.s32 %s66, 1
    %s68 = scalar_select %p65, %s66, %s67
    %p71 = pneg %p65
    %p72 = scmp.eq.s32.totalorder %s9, 1
    %p73 = por %p71, %p72
    %p74 = scmp.ne.s32.totalorder %s66, %s69
    %p75 = scmp.eq.s32.totalorder %s9, 0
    %p76 = por %p74, %p75
    %p77 = scmp.ne.s32.totalorder %s66, %s69
    %p78 = scmp.eq.s32.totalorder %s14, 1
    %p79 = por %p77, %p78
    %p80 = scmp.ne.s32.totalorder %s69, %s70
    %p81 = scmp.eq.s32.totalorder %s14, 0
    %p82 = por %p80, %p81
    %p83 = scmp.ne.s32.totalorder %s69, %s70
    %p84 = scmp.eq.s32.totalorder %s15, 1
    %p85 = por %p83, %p84
    %p87 = scmp.ne.s32.totalorder %s70, %s86
    %p88 = scmp.eq.s32.totalorder %s15, 0
    %p89 = por %p87, %p88
    %s90 = ssub.s32 %s9, %s16
    %p91 = scmp.eq.s32.totalorder %s90, 0
    %s93 = sadd.s32 %s92, 1
    %s94 = scalar_select %p91, %s92, %s93
    %p97 = pneg %p91
    %p98 = scmp.eq.s32.totalorder %s9, 1
    %p99 = por %p97, %p98
    %p100 = scmp.ne.s32.totalorder %s92, %s95
    %p101 = scmp.eq.s32.totalorder %s9, 0
    %p102 = por %p100, %p101
    %p103 = scmp.ne.s32.totalorder %s92, %s95
    %p104 = scmp.eq.s32.totalorder %s14, 1
    %p105 = por %p103, %p104
    %p106 = scmp.ne.s32.totalorder %s95, %s96
    %p107 = scmp.eq.s32.totalorder %s14, 0
    %p108 = por %p106, %p107
    %p109 = scmp.ne.s32.totalorder %s95, %s96
    %p110 = scmp.eq.s32.totalorder %s15, 1
    %p111 = por %p109, %p110
    %p113 = scmp.ne.s32.totalorder %s96, %s112
    %p114 = scmp.eq.s32.totalorder %s15, 0
    %p115 = por %p113, %p114
    %p116 = scmp.le.s32.totalorder 1, %s9
    %p117 = scmp.lt.s32.totalorder %s9, 3
    %p118 = pnand %p116, %p117
    %p119 = pneg %p118
    // Predicated region
    $region9: #{forward.2} parent=5 // pred_check
      _
    $region10: #{forward.2} parent=5 // pred_check_branch
      %121 = sbr.rel (%p118) target = $region12
    $region11: #{forward.2} parent=5 // pred_region
      %s122 = ssub.s32 %s9, 1
      // Predicated region
      $region13: #{forward.2} parent=11 // pred_check
        %p123 = pneg %p56
      $region14: #{forward.2} parent=11 // pred_check_branch
        %125 = sbr.rel (%p123) target = $region16
      $region15: #{forward.2} parent=11 // pred_region
        _
      $region16: #{forward.2} parent=11 // pred_fallthru
        _
    $region12: #{forward.2} parent=5 // pred_fallthru
      _
    %p126 = scmp.lt.s32.totalorder %s9, 2
    // Predicated region
    $region17: #{forward.2} parent=5 // pred_check
      %p127 = pneg %p126
    $region18: #{forward.2} parent=5 // pred_check_branch
      %129 = sbr.rel (%p127) target = $region20
    $region19: #{forward.2} parent=5 // pred_region
      // Predicated region
      $region21: #{forward.2} parent=19 // pred_check
        %p130 = pneg %p29
      $region22: #{forward.2} parent=19 // pred_check_branch
        %132 = sbr.rel (%p130) target = $region24
      $region23: #{forward.2} parent=19 // pred_region
        %s133 = smul.u32 32, %s9
        %p134 = scmp.lt.s32.totalorder %s133, 63
        %s135 = scalar_select %p134, %s133, 63
        %s136 = smul.addr %s135, 2
        %s137 = smul.addr %s136, 4
        %s138 = scalar_lea.vmem %s0, %s137
        %s139 = smul.u32 32, %s9
      $region24: #{forward.2} parent=19 // pred_fallthru
        _
      // Predicated region
      $region25: #{forward.2} parent=19 // pred_check
        %p140 = pneg %p76
      $region26: #{forward.2} parent=19 // pred_check_branch
        %142 = sbr.rel (%p140) target = $region28
      $region27: #{forward.2} parent=19 // pred_region
        %s143 = smul.u32 32, %s9
        %p144 = scmp.lt.s32.totalorder %s143, 63
        %s145 = scalar_select %p144, %s143, 63
        %s146 = smul.addr %s145, 4
        %s147 = scalar_lea.vmem %s2, %s146
        %s148 = smul.u32 32, %s9
      $region28: #{forward.2} parent=19 // pred_fallthru
        _
    $region20: #{forward.2} parent=5 // pred_fallthru
      _
    %p149 = scmp.le.s32.totalorder 1, %s9
    %p150 = scmp.lt.s32.totalorder %s9, 3
    %p151 = pnand %p149, %p150
    %p152 = pneg %p151
    // Predicated region
    $region29: #{forward.2} parent=5 // pred_check
      _
    $region30: #{forward.2} parent=5 // pred_check_branch
      %154 = sbr.rel (%p151) target = $region32
    $region31: #{forward.2} parent=5 // pred_region
      %s155 = ssub.s32 %s9, 1
      %s156 = smul.u32 32, %s14
      %p157 = scmp.lt.s32.totalorder %s156, 63
      %s158 = scalar_select %p157, %s156, 63
      %s159 = smul.addr %s158, 2
      %s160 = smul.addr %s159, 4
      %s161 = scalar_lea.vmem %s0, %s160
      %p162 = pneg %p35
      %p163 = pneg %p32
      %p164 = pneg %p56
      %p165 = pneg %p53
      %s166 = smul.u32 32, %s14
      %p167 = scmp.lt.s32.totalorder %s166, 63
      %s168 = scalar_select %p167, %s166, 63
      %s169 = smul.addr %s168, 4
      %s170 = scalar_lea.vmem %s2, %s169
      %p171 = pneg %p82
      %p172 = pneg %p79
      %p173 = pneg %p108
      %p174 = pneg %p105
      %s175 = smul.u32 32, %s14
      %p176 = scmp.lt.s32.totalorder %s175, 63
      %s177 = scalar_select %p176, %s175, 63
      %s178 = smul.addr %s177, 4
      %s179 = scalar_lea.vmem %s3, %s178
      %s180 = smul.u32 32, %s14
      %p181 = scmp.lt.s32.totalorder %s180, 63
      %s182 = scalar_select %p181, %s180, 63
      %s183 = smul.addr %s182, 2
      %s184 = smul.addr %s183, 4
      %s185 = scalar_lea.vmem %s0, %s184
      %s186 = smul.u32 32, %s14
      %s187 = smul.u32 32, %s14
      %p188 = scmp.lt.s32.totalorder %s187, 63
      %s189 = scalar_select %p188, %s187, 63
      %s190 = smul.addr %s189, 4
      %s191 = scalar_lea.vmem %s2, %s190
      %s192 = smul.u32 32, %s14
      %s193 = smul.u32 32, %s14
      %p194 = scmp.lt.s32.totalorder %s193, 63
      %s195 = scalar_select %p194, %s193, 63
      %s196 = smul.addr %s195, 4
      %s197 = scalar_lea.vmem %s3, %s196
      %s198 = smul.u32 32, %s14
      %v200 = vld [vmem:[%s185] sm:$0xff]
      %v201 = vld [vmem:[%s185 + $0x8] sm:$0xff]
      %v202 = vld [vmem:[%s185 + $0x10] sm:$0xff]
      %v203 = vld [vmem:[%s185 + $0x18] sm:$0xff]
      %v204 = vld [vmem:[%s185 + $0x20] sm:$0xff]
      %v205 = vld [vmem:[%s185 + $0x28] sm:$0xff]
      %v206 = vld [vmem:[%s185 + $0x30] sm:$0xff]
      %v207 = vld [vmem:[%s185 + $0x38] sm:$0xff]
      %v208 = vld [vmem:[%s185 + $0x40] sm:$0xff]
      %v209 = vld [vmem:[%s185 + $0x48] sm:$0xff]
      %v210 = vld [vmem:[%s185 + $0x50] sm:$0xff]
      %v211 = vld [vmem:[%s185 + $0x58] sm:$0xff]
      %v212 = vld [vmem:[%s185 + $0x60] sm:$0xff]
      %v213 = vld [vmem:[%s185 + $0x68] sm:$0xff]
      %v214 = vld [vmem:[%s185 + $0x70] sm:$0xff]
      %v215 = vld [vmem:[%s185 + $0x78] sm:$0xff]
      %v216 = vld [vmem:[%s185 + $0x80] sm:$0xff]
      %v217 = vld [vmem:[%s185 + $0x88] sm:$0xff]
      %v218 = vld [vmem:[%s185 + $0x90] sm:$0xff]
      %v219 = vld [vmem:[%s185 + $0x98] sm:$0xff]
      %v220 = vld [vmem:[%s185 + $0xa0] sm:$0xff]
      %v221 = vld [vmem:[%s185 + $0xa8] sm:$0xff]
      %v222 = vld [vmem:[%s185 + $0xb0] sm:$0xff]
      %v223 = vld [vmem:[%s185 + $0xb8] sm:$0xff]
      %v224 = vld [vmem:[%s185 + $0xc0] sm:$0xff]
      %v225 = vld [vmem:[%s185 + $0xc8] sm:$0xff]
      %v226 = vld [vmem:[%s185 + $0xd0] sm:$0xff]
      %v227 = vld [vmem:[%s185 + $0xd8] sm:$0xff]
      %v228 = vld [vmem:[%s185 + $0xe0] sm:$0xff]
      %v229 = vld [vmem:[%s185 + $0xe8] sm:$0xff]
      %v230 = vld [vmem:[%s185 + $0xf0] sm:$0xff]
      %v231 = vld [vmem:[%s185 + $0xf8] sm:$0xff]
      %v232 = vld [vmem:[%s1] sm:$0xf]
      %v233 = vld [vmem:[%s1 + $0x4] sm:$0xf]
      %v234 = vld [vmem:[%s1 + $0x8] sm:$0xf]
      %v235 = vld [vmem:[%s1 + $0xc] sm:$0xf]
      %v236 = vld [vmem:[%s1 + $0x10] sm:$0xf]
      %v237 = vld [vmem:[%s1 + $0x14] sm:$0xf]
      %v238 = vld [vmem:[%s1 + $0x18] sm:$0xf]
      %v239 = vld [vmem:[%s1 + $0x1c] sm:$0xf]
      %v240 = vld [vmem:[%s1 + $0x20] sm:$0xf]
      %v241 = vld [vmem:[%s1 + $0x24] sm:$0xf]
      %v242 = vld [vmem:[%s1 + $0x28] sm:$0xf]
      %v243 = vld [vmem:[%s1 + $0x2c] sm:$0xf]
      %v244 = vld [vmem:[%s1 + $0x30] sm:$0xf]
      %v245 = vld [vmem:[%s1 + $0x34] sm:$0xf]
      %v246 = vld [vmem:[%s1 + $0x38] sm:$0xf]
      %v247 = vld [vmem:[%s1 + $0x3c] sm:$0xf]
      %v248 = vld [vmem:[%s1 + $0x40] sm:$0xf]
      %v249 = vld [vmem:[%s1 + $0x44] sm:$0xf]
      %v250 = vld [vmem:[%s1 + $0x48] sm:$0x3]
      %v283 = vunpack.c.l.b16 %v200
      %v284 = vunpack.c.h.b16 %v200
      %v285 = vunpack.c.l.b16 %v201
      %v286 = vunpack.c.h.b16 %v201
      %v287 = vunpack.c.l.b16 %v202
      %v288 = vunpack.c.h.b16 %v202
      %v289 = vunpack.c.l.b16 %v203
      %v290 = vunpack.c.h.b16 %v203
      %v291 = vunpack.c.l.b16 %v204
      %v292 = vunpack.c.h.b16 %v204
      %v293 = vunpack.c.l.b16 %v205
      %v294 = vunpack.c.h.b16 %v205
      %v295 = vunpack.c.l.b16 %v206
      %v296 = vunpack.c.h.b16 %v206
      %v297 = vunpack.c.l.b16 %v207
      %v298 = vunpack.c.h.b16 %v207
      %v299 = vunpack.c.l.b16 %v208
      %v300 = vunpack.c.h.b16 %v208
      %v301 = vunpack.c.l.b16 %v209
      %v302 = vunpack.c.h.b16 %v209
      %v303 = vunpack.c.l.b16 %v210
      %v304 = vunpack.c.h.b16 %v210
      %v305 = vunpack.c.l.b16 %v211
      %v306 = vunpack.c.h.b16 %v211
      %v307 = vunpack.c.l.b16 %v212
      %v308 = vunpack.c.h.b16 %v212
      %v309 = vunpack.c.l.b16 %v213
      %v310 = vunpack.c.h.b16 %v213
      %v311 = vunpack.c.l.b16 %v214
      %v312 = vunpack.c.h.b16 %v214
      %v313 = vunpack.c.l.b16 %v215
      %v314 = vunpack.c.h.b16 %v215
      %v315 = vunpack.c.l.b16 %v216
      %v316 = vunpack.c.h.b16 %v216
      %v317 = vunpack.c.l.b16 %v217
      %v318 = vunpack.c.h.b16 %v217
      %v319 = vunpack.c.l.b16 %v218
      %v320 = vunpack.c.h.b16 %v218
      %v321 = vunpack.c.l.b16 %v219
      %v322 = vunpack.c.h.b16 %v219
      %v323 = vunpack.c.l.b16 %v220
      %v324 = vunpack.c.h.b16 %v220
      %v325 = vunpack.c.l.b16 %v221
      %v326 = vunpack.c.h.b16 %v221
      %v327 = vunpack.c.l.b16 %v222
      %v328 = vunpack.c.h.b16 %v222
      %v329 = vunpack.c.l.b16 %v223
      %v330 = vunpack.c.h.b16 %v223
      %v331 = vunpack.c.l.b16 %v224
      %v332 = vunpack.c.h.b16 %v224
      %v333 = vunpack.c.l.b16 %v225
      %v334 = vunpack.c.h.b16 %v225
      %v335 = vunpack.c.l.b16 %v226
      %v336 = vunpack.c.h.b16 %v226
      %v337 = vunpack.c.l.b16 %v227
      %v338 = vunpack.c.h.b16 %v227
      %v339 = vunpack.c.l.b16 %v228
      %v340 = vunpack.c.h.b16 %v228
      %v341 = vunpack.c.l.b16 %v229
      %v342 = vunpack.c.h.b16 %v229
      %v343 = vunpack.c.l.b16 %v230
      %v344 = vunpack.c.h.b16 %v230
      %v345 = vunpack.c.l.b16 %v231
      %v346 = vunpack.c.h.b16 %v231
      %v347 = vpack.c.b16 %v285, %v283
      %v348 = vpack.c.b16 %v286, %v284
      %v349 = vpack.c.b16 %v289, %v287
      %v350 = vpack.c.b16 %v290, %v288
      %v351 = vpack.c.b16 %v293, %v291
      %v352 = vpack.c.b16 %v294, %v292
      %v353 = vpack.c.b16 %v297, %v295
      %v354 = vpack.c.b16 %v298, %v296
      %v355 = vpack.c.b16 %v301, %v299
      %v356 = vpack.c.b16 %v302, %v300
      %v357 = vpack.c.b16 %v305, %v303
      %v358 = vpack.c.b16 %v306, %v304
      %v359 = vpack.c.b16 %v309, %v307
      %v360 = vpack.c.b16 %v310, %v308
      %v361 = vpack.c.b16 %v313, %v311
      %v362 = vpack.c.b16 %v314, %v312
      %v363 = vpack.c.b16 %v317, %v315
      %v364 = vpack.c.b16 %v318, %v316
      %v365 = vpack.c.b16 %v321, %v319
      %v366 = vpack.c.b16 %v322, %v320
      %v367 = vpack.c.b16 %v325, %v323
      %v368 = vpack.c.b16 %v326, %v324
      %v369 = vpack.c.b16 %v329, %v327
      %v370 = vpack.c.b16 %v330, %v328
      %v371 = vpack.c.b16 %v333, %v331
      %v372 = vpack.c.b16 %v334, %v332
      %v373 = vpack.c.b16 %v337, %v335
      %v374 = vpack.c.b16 %v338, %v336
      %v375 = vpack.c.b16 %v341, %v339
      %v376 = vpack.c.b16 %v342, %v340
      %v377 = vpack.c.b16 %v345, %v343
      %v378 = vpack.c.b16 %v346, %v344
      %v414 = vunpack.c.l.b16 %v232
      %v415 = vunpack.c.l.b16 %v233
      %v416 = vunpack.c.l.b16 %v234
      %v417 = vunpack.c.l.b16 %v235
      %v418 = vunpack.c.l.b16 %v236
      %v419 = vunpack.c.l.b16 %v237
      %v420 = vunpack.c.l.b16 %v238
      %v421 = vunpack.c.l.b16 %v239
      %v422 = vunpack.c.l.b16 %v240
      %v423 = vunpack.c.l.b16 %v241
      %v424 = vunpack.c.l.b16 %v242
      %v425 = vunpack.c.l.b16 %v243
      %v426 = vunpack.c.l.b16 %v244
      %v427 = vunpack.c.l.b16 %v245
      %v428 = vunpack.c.l.b16 %v246
      %v429 = vunpack.c.l.b16 %v247
      %v430 = vunpack.c.l.b16 %v248
      %v431 = vunpack.c.l.b16 %v249
      %v432 = vunpack.c.l.b16 %v250
      %v433 = vpack.c.b16 %v415, %v414
      %v434 = vpack.c.b16 %v417, %v416
      %v435 = vpack.c.b16 %v419, %v418
      %v436 = vpack.c.b16 %v421, %v420
      %v437 = vpack.c.b16 %v423, %v422
      %v438 = vpack.c.b16 %v425, %v424
      %v439 = vpack.c.b16 %v427, %v426
      %v440 = vpack.c.b16 %v429, %v428
      %v441 = vpack.c.b16 %v431, %v430
      %v442 = vpack.c.b16 %v432, %v432
      %vm452 = vcmask 154624
      %v454 = vsel %vm452, %v348, 0
      %v457 = vsel %vm452, %v350, 0
      %v460 = vsel %vm452, %v352, 0
      %v463 = vsel %vm452, %v354, 0
      %v466 = vsel %vm452, %v356, 0
      %v469 = vsel %vm452, %v358, 0
      %v472 = vsel %vm452, %v360, 0
      %v475 = vsel %vm452, %v362, 0
      %v478 = vsel %vm452, %v364, 0
      %v481 = vsel %vm452, %v366, 0
      %v484 = vsel %vm452, %v368, 0
      %v487 = vsel %vm452, %v370, 0
      %v490 = vsel %vm452, %v372, 0
      %v493 = vsel %vm452, %v374, 0
      %v496 = vsel %vm452, %v376, 0
      %v499 = vsel %vm452, %v378, 0
      %vm501 = vcmask 1040384
      %vm502 = vcmask 1041408
      %v503 = vsel %vm501, 4294967295, 65535
      %v504 = vsel %vm502, %v503, 0
      %v506 = vand.u32 %v442, %v504
      %508 = vmatpush.bf16.msra.mxu0 %v440
      %509 = vmatpush.bf16.msra.mxu0 %v439
      %510 = vmatpush.bf16.msra.mxu0 %v438
      %511 = vmatpush.bf16.msra.mxu0 %v437
      %512 = vmatpush.bf16.msra.mxu0 %v436
      %513 = vmatpush.bf16.msra.mxu0 %v435
      %514 = vmatpush.bf16.msra.mxu0 %v434
      %515 = vmatpush.bf16.msra.mxu0 %v433
      %516 = vmatmul.bf16.gmra.mxu0 %v347
      %v517 = vpop.f32.mrf.mxu0
      %v518 = vadd.f32 0.0, %v517
      %v519 = vpop.f32.mrf.mxu0
      %v520 = vadd.f32 0.0, %v519
      %521 = vmatmul.bf16.gmra.mxu0 %v349
      %v522 = vpop.f32.mrf.mxu0
      %v523 = vadd.f32 0.0, %v522
      %v524 = vpop.f32.mrf.mxu0
      %v525 = vadd.f32 0.0, %v524
      %526 = vmatmul.bf16.gmra.mxu0 %v351
      %v527 = vpop.f32.mrf.mxu0
      %v528 = vadd.f32 0.0, %v527
      %v529 = vpop.f32.mrf.mxu0
      %v530 = vadd.f32 0.0, %v529
      %531 = vmatmul.bf16.gmra.mxu0 %v353
      %v532 = vpop.f32.mrf.mxu0
      %v533 = vadd.f32 0.0, %v532
      %v534 = vpop.f32.mrf.mxu0
      %v535 = vadd.f32 0.0, %v534
      %536 = vmatmul.bf16.gmra.mxu0 %v355
      %v537 = vpop.f32.mrf.mxu0
      %v538 = vadd.f32 0.0, %v537
      %v539 = vpop.f32.mrf.mxu0
      %v540 = vadd.f32 0.0, %v539
      %541 = vmatmul.bf16.gmra.mxu0 %v357
      %v542 = vpop.f32.mrf.mxu0
      %v543 = vadd.f32 0.0, %v542
      %v544 = vpop.f32.mrf.mxu0
      %v545 = vadd.f32 0.0, %v544
      %546 = vmatmul.bf16.gmra.mxu0 %v359
      %v547 = vpop.f32.mrf.mxu0
      %v548 = vadd.f32 0.0, %v547
      %v549 = vpop.f32.mrf.mxu0
      %v550 = vadd.f32 0.0, %v549
      %551 = vmatmul.bf16.gmra.mxu0 %v361
      %v552 = vpop.f32.mrf.mxu0
      %v553 = vadd.f32 0.0, %v552
      %v554 = vpop.f32.mrf.mxu0
      %v555 = vadd.f32 0.0, %v554
      %556 = vmatmul.bf16.gmra.mxu0 %v363
      %v557 = vpop.f32.mrf.mxu0
      %v558 = vadd.f32 0.0, %v557
      %v559 = vpop.f32.mrf.mxu0
      %v560 = vadd.f32 0.0, %v559
      %561 = vmatmul.bf16.gmra.mxu0 %v365
      %v562 = vpop.f32.mrf.mxu0
      %v563 = vadd.f32 0.0, %v562
      %v564 = vpop.f32.mrf.mxu0
      %v565 = vadd.f32 0.0, %v564
      %566 = vmatmul.bf16.gmra.mxu0 %v367
      %v567 = vpop.f32.mrf.mxu0
      %v568 = vadd.f32 0.0, %v567
      %v569 = vpop.f32.mrf.mxu0
      %v570 = vadd.f32 0.0, %v569
      %571 = vmatmul.bf16.gmra.mxu0 %v369
      %v572 = vpop.f32.mrf.mxu0
      %v573 = vadd.f32 0.0, %v572
      %v574 = vpop.f32.mrf.mxu0
      %v575 = vadd.f32 0.0, %v574
      %576 = vmatmul.bf16.gmra.mxu0 %v371
      %v577 = vpop.f32.mrf.mxu0
      %v578 = vadd.f32 0.0, %v577
      %v579 = vpop.f32.mrf.mxu0
      %v580 = vadd.f32 0.0, %v579
      %581 = vmatmul.bf16.gmra.mxu0 %v373
      %v582 = vpop.f32.mrf.mxu0
      %v583 = vadd.f32 0.0, %v582
      %v584 = vpop.f32.mrf.mxu0
      %v585 = vadd.f32 0.0, %v584
      %586 = vmatmul.bf16.gmra.mxu0 %v375
      %v587 = vpop.f32.mrf.mxu0
      %v588 = vadd.f32 0.0, %v587
      %v589 = vpop.f32.mrf.mxu0
      %v590 = vadd.f32 0.0, %v589
      %591 = vmatmul.bf16.gmra.mxu0 %v377
      %v592 = vpop.f32.mrf.mxu0
      %v593 = vadd.f32 0.0, %v592
      %v594 = vpop.f32.mrf.mxu0
      %v595 = vadd.f32 0.0, %v594
      %596 = vdwg.mxu0
      %597 = vmatpush.bf16.msra.mxu0 0
      %598 = vmatpush.bf16.msra.mxu0 0
      %599 = vmatpush.bf16.msra.mxu0 0
      %600 = vmatpush.bf16.msra.mxu0 0
      %601 = vmatpush.bf16.msra.mxu0 0
      %602 = vmatpush.bf16.msra.mxu0 0
      %603 = vmatpush.bf16.msra.mxu0 %v506
      %604 = vmatpush.bf16.msra.mxu0 %v441
      %605 = vmatmul.bf16.gmra.mxu0 %v454
      %v606 = vpop.f32.mrf.mxu0
      %v607 = vadd.f32 %v518, %v606
      %v608 = vpop.f32.mrf.mxu0
      %v609 = vadd.f32 %v520, %v608
      %610 = vmatmul.bf16.gmra.mxu0 %v457
      %v611 = vpop.f32.mrf.mxu0
      %v612 = vadd.f32 %v523, %v611
      %v613 = vpop.f32.mrf.mxu0
      %v614 = vadd.f32 %v525, %v613
      %615 = vmatmul.bf16.gmra.mxu0 %v460
      %v616 = vpop.f32.mrf.mxu0
      %v617 = vadd.f32 %v528, %v616
      %v618 = vpop.f32.mrf.mxu0
      %v619 = vadd.f32 %v530, %v618
      %620 = vmatmul.bf16.gmra.mxu0 %v463
      %v621 = vpop.f32.mrf.mxu0
      %v622 = vadd.f32 %v533, %v621
      %v623 = vpop.f32.mrf.mxu0
      %v624 = vadd.f32 %v535, %v623
      %625 = vmatmul.bf16.gmra.mxu0 %v466
      %v626 = vpop.f32.mrf.mxu0
      %v627 = vadd.f32 %v538, %v626
      %v628 = vpop.f32.mrf.mxu0
      %v629 = vadd.f32 %v540, %v628
      %630 = vmatmul.bf16.gmra.mxu0 %v469
      %v631 = vpop.f32.mrf.mxu0
      %v632 = vadd.f32 %v543, %v631
      %v633 = vpop.f32.mrf.mxu0
      %v634 = vadd.f32 %v545, %v633
      %635 = vmatmul.bf16.gmra.mxu0 %v472
      %v636 = vpop.f32.mrf.mxu0
      %v637 = vadd.f32 %v548, %v636
      %v638 = vpop.f32.mrf.mxu0
      %v639 = vadd.f32 %v550, %v638
      %640 = vmatmul.bf16.gmra.mxu0 %v475
      %v641 = vpop.f32.mrf.mxu0
      %v642 = vadd.f32 %v553, %v641
      %v643 = vpop.f32.mrf.mxu0
      %v644 = vadd.f32 %v555, %v643
      %645 = vmatmul.bf16.gmra.mxu0 %v478
      %v646 = vpop.f32.mrf.mxu0
      %v647 = vadd.f32 %v558, %v646
      %v648 = vpop.f32.mrf.mxu0
      %v649 = vadd.f32 %v560, %v648
      %650 = vmatmul.bf16.gmra.mxu0 %v481
      %v651 = vpop.f32.mrf.mxu0
      %v652 = vadd.f32 %v563, %v651
      %v653 = vpop.f32.mrf.mxu0
      %v654 = vadd.f32 %v565, %v653
      %655 = vmatmul.bf16.gmra.mxu0 %v484
      %v656 = vpop.f32.mrf.mxu0
      %v657 = vadd.f32 %v568, %v656
      %v658 = vpop.f32.mrf.mxu0
      %v659 = vadd.f32 %v570, %v658
      %660 = vmatmul.bf16.gmra.mxu0 %v487
      %v661 = vpop.f32.mrf.mxu0
      %v662 = vadd.f32 %v573, %v661
      %v663 = vpop.f32.mrf.mxu0
      %v664 = vadd.f32 %v575, %v663
      %665 = vmatmul.bf16.gmra.mxu0 %v490
      %v666 = vpop.f32.mrf.mxu0
      %v667 = vadd.f32 %v578, %v666
      %v668 = vpop.f32.mrf.mxu0
      %v669 = vadd.f32 %v580, %v668
      %670 = vmatmul.bf16.gmra.mxu0 %v493
      %v671 = vpop.f32.mrf.mxu0
      %v672 = vadd.f32 %v583, %v671
      %v673 = vpop.f32.mrf.mxu0
      %v674 = vadd.f32 %v585, %v673
      %675 = vmatmul.bf16.gmra.mxu0 %v496
      %v676 = vpop.f32.mrf.mxu0
      %v677 = vadd.f32 %v588, %v676
      %v678 = vpop.f32.mrf.mxu0
      %v679 = vadd.f32 %v590, %v678
      %680 = vmatmul.bf16.gmra.mxu0 %v499
      %v681 = vpop.f32.mrf.mxu0
      %v682 = vadd.f32 %v593, %v681
      %v683 = vpop.f32.mrf.mxu0
      %v684 = vadd.f32 %v595, %v683
      %685 = vdwg.mxu0
      %v686 = vmax.f32 %v607, 0.0
      %v687 = vmax.f32 %v609, 0.0
      %v688 = vmax.f32 %v612, 0.0
      %v689 = vmax.f32 %v614, 0.0
      %v690 = vmax.f32 %v617, 0.0
      %v691 = vmax.f32 %v619, 0.0
      %v692 = vmax.f32 %v622, 0.0
      %v693 = vmax.f32 %v624, 0.0
      %v694 = vmax.f32 %v627, 0.0
      %v695 = vmax.f32 %v629, 0.0
      %v696 = vmax.f32 %v632, 0.0
      %v697 = vmax.f32 %v634, 0.0
      %v698 = vmax.f32 %v637, 0.0
      %v699 = vmax.f32 %v639, 0.0
      %v700 = vmax.f32 %v642, 0.0
      %v701 = vmax.f32 %v644, 0.0
      %v702 = vmax.f32 %v647, 0.0
      %v703 = vmax.f32 %v649, 0.0
      %v704 = vmax.f32 %v652, 0.0
      %v705 = vmax.f32 %v654, 0.0
      %v706 = vmax.f32 %v657, 0.0
      %v707 = vmax.f32 %v659, 0.0
      %v708 = vmax.f32 %v662, 0.0
      %v709 = vmax.f32 %v664, 0.0
      %v710 = vmax.f32 %v667, 0.0
      %v711 = vmax.f32 %v669, 0.0
      %v712 = vmax.f32 %v672, 0.0
      %v713 = vmax.f32 %v674, 0.0
      %v714 = vmax.f32 %v677, 0.0
      %v715 = vmax.f32 %v679, 0.0
      %v716 = vmax.f32 %v682, 0.0
      %v717 = vmax.f32 %v684, 0.0
      %v718 = vld [vmem:[%s191] sm:$0xf]
      %v719 = vld [vmem:[%s191 + $0x4] sm:$0xf]
      %v720 = vld [vmem:[%s191 + $0x8] sm:$0xf]
      %v721 = vld [vmem:[%s191 + $0xc] sm:$0xf]
      %v722 = vld [vmem:[%s191 + $0x10] sm:$0xf]
      %v723 = vld [vmem:[%s191 + $0x14] sm:$0xf]
      %v724 = vld [vmem:[%s191 + $0x18] sm:$0xf]
      %v725 = vld [vmem:[%s191 + $0x1c] sm:$0xf]
      %v726 = vld [vmem:[%s191 + $0x20] sm:$0xf]
      %v727 = vld [vmem:[%s191 + $0x24] sm:$0xf]
      %v728 = vld [vmem:[%s191 + $0x28] sm:$0xf]
      %v729 = vld [vmem:[%s191 + $0x2c] sm:$0xf]
      %v730 = vld [vmem:[%s191 + $0x30] sm:$0xf]
      %v731 = vld [vmem:[%s191 + $0x34] sm:$0xf]
      %v732 = vld [vmem:[%s191 + $0x38] sm:$0xf]
      %v733 = vld [vmem:[%s191 + $0x3c] sm:$0xf]
      %v734 = vld [vmem:[%s191 + $0x40] sm:$0xf]
      %v735 = vld [vmem:[%s191 + $0x44] sm:$0xf]
      %v736 = vld [vmem:[%s191 + $0x48] sm:$0xf]
      %v737 = vld [vmem:[%s191 + $0x4c] sm:$0xf]
      %v738 = vld [vmem:[%s191 + $0x50] sm:$0xf]
      %v739 = vld [vmem:[%s191 + $0x54] sm:$0xf]
      %v740 = vld [vmem:[%s191 + $0x58] sm:$0xf]
      %v741 = vld [vmem:[%s191 + $0x5c] sm:$0xf]
      %v742 = vld [vmem:[%s191 + $0x60] sm:$0xf]
      %v743 = vld [vmem:[%s191 + $0x64] sm:$0xf]
      %v744 = vld [vmem:[%s191 + $0x68] sm:$0xf]
      %v745 = vld [vmem:[%s191 + $0x6c] sm:$0xf]
      %v746 = vld [vmem:[%s191 + $0x70] sm:$0xf]
      %v747 = vld [vmem:[%s191 + $0x74] sm:$0xf]
      %v748 = vld [vmem:[%s191 + $0x78] sm:$0xf]
      %v749 = vld [vmem:[%s191 + $0x7c] sm:$0xf]
      %v750 = vpack.c.bf16 %v686, %v686
      %v751 = vpack.c.bf16 %v687, %v687
      %v752 = vpack.c.bf16 %v688, %v688
      %v753 = vpack.c.bf16 %v689, %v689
      %v754 = vpack.c.bf16 %v690, %v690
      %v755 = vpack.c.bf16 %v691, %v691
      %v756 = vpack.c.bf16 %v692, %v692
      %v757 = vpack.c.bf16 %v693, %v693
      %v758 = vpack.c.bf16 %v694, %v694
      %v759 = vpack.c.bf16 %v695, %v695
      %v760 = vpack.c.bf16 %v696, %v696
      %v761 = vpack.c.bf16 %v697, %v697
      %v762 = vpack.c.bf16 %v698, %v698
      %v763 = vpack.c.bf16 %v699, %v699
      %v764 = vpack.c.bf16 %v700, %v700
      %v765 = vpack.c.bf16 %v701, %v701
      %v766 = vpack.c.bf16 %v702, %v702
      %v767 = vpack.c.bf16 %v703, %v703
      %v768 = vpack.c.bf16 %v704, %v704
      %v769 = vpack.c.bf16 %v705, %v705
      %v770 = vpack.c.bf16 %v706, %v706
      %v771 = vpack.c.bf16 %v707, %v707
      %v772 = vpack.c.bf16 %v708, %v708
      %v773 = vpack.c.bf16 %v709, %v709
      %v774 = vpack.c.bf16 %v710, %v710
      %v775 = vpack.c.bf16 %v711, %v711
      %v776 = vpack.c.bf16 %v712, %v712
      %v777 = vpack.c.bf16 %v713, %v713
      %v778 = vpack.c.bf16 %v714, %v714
      %v779 = vpack.c.bf16 %v715, %v715
      %v780 = vpack.c.bf16 %v716, %v716
      %v781 = vpack.c.bf16 %v717, %v717
      %v814 = vunpack.c.l.b16 %v718
      %v815 = vunpack.c.l.b16 %v719
      %v816 = vunpack.c.l.b16 %v720
      %v817 = vunpack.c.l.b16 %v721
      %v818 = vunpack.c.l.b16 %v722
      %v819 = vunpack.c.l.b16 %v723
      %v820 = vunpack.c.l.b16 %v724
      %v821 = vunpack.c.l.b16 %v725
      %v822 = vunpack.c.l.b16 %v726
      %v823 = vunpack.c.l.b16 %v727
      %v824 = vunpack.c.l.b16 %v728
      %v825 = vunpack.c.l.b16 %v729
      %v826 = vunpack.c.l.b16 %v730
      %v827 = vunpack.c.l.b16 %v731
      %v828 = vunpack.c.l.b16 %v732
      %v829 = vunpack.c.l.b16 %v733
      %v830 = vunpack.c.l.b16 %v734
      %v831 = vunpack.c.l.b16 %v735
      %v832 = vunpack.c.l.b16 %v736
      %v833 = vunpack.c.l.b16 %v737
      %v834 = vunpack.c.l.b16 %v738
      %v835 = vunpack.c.l.b16 %v739
      %v836 = vunpack.c.l.b16 %v740
      %v837 = vunpack.c.l.b16 %v741
      %v838 = vunpack.c.l.b16 %v742
      %v839 = vunpack.c.l.b16 %v743
      %v840 = vunpack.c.l.b16 %v744
      %v841 = vunpack.c.l.b16 %v745
      %v842 = vunpack.c.l.b16 %v746
      %v843 = vunpack.c.l.b16 %v747
      %v844 = vunpack.c.l.b16 %v748
      %v845 = vunpack.c.l.b16 %v749
      %v846 = vpack.c.b16 %v815, %v814
      %v847 = vpack.c.b16 %v817, %v816
      %v848 = vpack.c.b16 %v819, %v818
      %v849 = vpack.c.b16 %v821, %v820
      %v850 = vpack.c.b16 %v823, %v822
      %v851 = vpack.c.b16 %v825, %v824
      %v852 = vpack.c.b16 %v827, %v826
      %v853 = vpack.c.b16 %v829, %v828
      %v854 = vpack.c.b16 %v831, %v830
      %v855 = vpack.c.b16 %v833, %v832
      %v856 = vpack.c.b16 %v835, %v834
      %v857 = vpack.c.b16 %v837, %v836
      %v858 = vpack.c.b16 %v839, %v838
      %v859 = vpack.c.b16 %v841, %v840
      %v860 = vpack.c.b16 %v843, %v842
      %v861 = vpack.c.b16 %v845, %v844
      %v894 = vunpack.c.l.b16 %v750
      %v895 = vunpack.c.l.b16 %v751
      %v896 = vunpack.c.l.b16 %v752
      %v897 = vunpack.c.l.b16 %v753
      %v898 = vunpack.c.l.b16 %v754
      %v899 = vunpack.c.l.b16 %v755
      %v900 = vunpack.c.l.b16 %v756
      %v901 = vunpack.c.l.b16 %v757
      %v902 = vunpack.c.l.b16 %v758
      %v903 = vunpack.c.l.b16 %v759
      %v904 = vunpack.c.l.b16 %v760
      %v905 = vunpack.c.l.b16 %v761
      %v906 = vunpack.c.l.b16 %v762
      %v907 = vunpack.c.l.b16 %v763
      %v908 = vunpack.c.l.b16 %v764
      %v909 = vunpack.c.l.b16 %v765
      %v910 = vunpack.c.l.b16 %v766
      %v911 = vunpack.c.l.b16 %v767
      %v912 = vunpack.c.l.b16 %v768
      %v913 = vunpack.c.l.b16 %v769
      %v914 = vunpack.c.l.b16 %v770
      %v915 = vunpack.c.l.b16 %v771
      %v916 = vunpack.c.l.b16 %v772
      %v917 = vunpack.c.l.b16 %v773
      %v918 = vunpack.c.l.b16 %v774
      %v919 = vunpack.c.l.b16 %v775
      %v920 = vunpack.c.l.b16 %v776
      %v921 = vunpack.c.l.b16 %v777
      %v922 = vunpack.c.l.b16 %v778
      %v923 = vunpack.c.l.b16 %v779
      %v924 = vunpack.c.l.b16 %v780
      %v925 = vunpack.c.l.b16 %v781
      %v926 = vpack.c.b16 %v895, %v894
      %v927 = vpack.c.b16 %v897, %v896
      %v928 = vpack.c.b16 %v899, %v898
      %v929 = vpack.c.b16 %v901, %v900
      %v930 = vpack.c.b16 %v903, %v902
      %v931 = vpack.c.b16 %v905, %v904
      %v932 = vpack.c.b16 %v907, %v906
      %v933 = vpack.c.b16 %v909, %v908
      %v934 = vpack.c.b16 %v911, %v910
      %v935 = vpack.c.b16 %v913, %v912
      %v936 = vpack.c.b16 %v915, %v914
      %v937 = vpack.c.b16 %v917, %v916
      %v938 = vpack.c.b16 %v919, %v918
      %v939 = vpack.c.b16 %v921, %v920
      %v940 = vpack.c.b16 %v923, %v922
      %v941 = vpack.c.b16 %v925, %v924
      %942 = vrot.lane.b32.xlu0 %v926, 3
      %v943 = vpop.permute.xlu0 %942
      %944 = vrot.lane.b32.xlu0 %v927, 3
      %v945 = vpop.permute.xlu0 %944
      %946 = vrot.lane.b32.xlu0 %v928, 3
      %v947 = vpop.permute.xlu0 %946
      %948 = vrot.lane.b32.xlu0 %v929, 3
      %v949 = vpop.permute.xlu0 %948
      %950 = vrot.lane.b32.xlu0 %v930, 3
      %v951 = vpop.permute.xlu0 %950
      %952 = vrot.lane.b32.xlu0 %v931, 3
      %v953 = vpop.permute.xlu0 %952
      %954 = vrot.lane.b32.xlu0 %v932, 3
      %v955 = vpop.permute.xlu0 %954
      %956 = vrot.lane.b32.xlu0 %v933, 3
      %v957 = vpop.permute.xlu0 %956
      %958 = vrot.lane.b32.xlu0 %v934, 3
      %v959 = vpop.permute.xlu0 %958
      %960 = vrot.lane.b32.xlu0 %v935, 3
      %v961 = vpop.permute.xlu0 %960
      %962 = vrot.lane.b32.xlu0 %v936, 3
      %v963 = vpop.permute.xlu0 %962
      %964 = vrot.lane.b32.xlu0 %v937, 3
      %v965 = vpop.permute.xlu0 %964
      %966 = vrot.lane.b32.xlu0 %v938, 3
      %v967 = vpop.permute.xlu0 %966
      %968 = vrot.lane.b32.xlu0 %v939, 3
      %v969 = vpop.permute.xlu0 %968
      %970 = vrot.lane.b32.xlu0 %v940, 3
      %v971 = vpop.permute.xlu0 %970
      %972 = vrot.lane.b32.xlu0 %v941, 3
      %v973 = vpop.permute.xlu0 %972
      %vm974 = vcmask 23552
      %v977 = vsel %vm974, %v846, %v943
      %v980 = vsel %vm974, %v847, %v945
      %v983 = vsel %vm974, %v848, %v947
      %v986 = vsel %vm974, %v849, %v949
      %v989 = vsel %vm974, %v850, %v951
      %v992 = vsel %vm974, %v851, %v953
      %v995 = vsel %vm974, %v852, %v955
      %v998 = vsel %vm974, %v853, %v957
      %v1001 = vsel %vm974, %v854, %v959
      %v1004 = vsel %vm974, %v855, %v961
      %v1007 = vsel %vm974, %v856, %v963
      %v1010 = vsel %vm974, %v857, %v965
      %v1013 = vsel %vm974, %v858, %v967
      %v1016 = vsel %vm974, %v859, %v969
      %v1019 = vsel %vm974, %v860, %v971
      %v1022 = vsel %vm974, %v861, %v973
      %v1039 = vunpack.c.l.b16 %v977
      %v1040 = vunpack.c.h.b16 %v977
      %v1041 = vunpack.c.l.b16 %v980
      %v1042 = vunpack.c.h.b16 %v980
      %v1043 = vunpack.c.l.b16 %v983
      %v1044 = vunpack.c.h.b16 %v983
      %v1045 = vunpack.c.l.b16 %v986
      %v1046 = vunpack.c.h.b16 %v986
      %v1047 = vunpack.c.l.b16 %v989
      %v1048 = vunpack.c.h.b16 %v989
      %v1049 = vunpack.c.l.b16 %v992
      %v1050 = vunpack.c.h.b16 %v992
      %v1051 = vunpack.c.l.b16 %v995
      %v1052 = vunpack.c.h.b16 %v995
      %v1053 = vunpack.c.l.b16 %v998
      %v1054 = vunpack.c.h.b16 %v998
      %v1055 = vunpack.c.l.b16 %v1001
      %v1056 = vunpack.c.h.b16 %v1001
      %v1057 = vunpack.c.l.b16 %v1004
      %v1058 = vunpack.c.h.b16 %v1004
      %v1059 = vunpack.c.l.b16 %v1007
      %v1060 = vunpack.c.h.b16 %v1007
      %v1061 = vunpack.c.l.b16 %v1010
      %v1062 = vunpack.c.h.b16 %v1010
      %v1063 = vunpack.c.l.b16 %v1013
      %v1064 = vunpack.c.h.b16 %v1013
      %v1065 = vunpack.c.l.b16 %v1016
      %v1066 = vunpack.c.h.b16 %v1016
      %v1067 = vunpack.c.l.b16 %v1019
      %v1068 = vunpack.c.h.b16 %v1019
      %v1069 = vunpack.c.l.b16 %v1022
      %v1070 = vunpack.c.h.b16 %v1022
      %v1071 = vpack.c.b16 %v1039, %v1039
      %v1072 = vpack.c.b16 %v1040, %v1040
      %v1073 = vpack.c.b16 %v1041, %v1041
      %v1074 = vpack.c.b16 %v1042, %v1042
      %v1075 = vpack.c.b16 %v1043, %v1043
      %v1076 = vpack.c.b16 %v1044, %v1044
      %v1077 = vpack.c.b16 %v1045, %v1045
      %v1078 = vpack.c.b16 %v1046, %v1046
      %v1079 = vpack.c.b16 %v1047, %v1047
      %v1080 = vpack.c.b16 %v1048, %v1048
      %v1081 = vpack.c.b16 %v1049, %v1049
      %v1082 = vpack.c.b16 %v1050, %v1050
      %v1083 = vpack.c.b16 %v1051, %v1051
      %v1084 = vpack.c.b16 %v1052, %v1052
      %v1085 = vpack.c.b16 %v1053, %v1053
      %v1086 = vpack.c.b16 %v1054, %v1054
      %v1087 = vpack.c.b16 %v1055, %v1055
      %v1088 = vpack.c.b16 %v1056, %v1056
      %v1089 = vpack.c.b16 %v1057, %v1057
      %v1090 = vpack.c.b16 %v1058, %v1058
      %v1091 = vpack.c.b16 %v1059, %v1059
      %v1092 = vpack.c.b16 %v1060, %v1060
      %v1093 = vpack.c.b16 %v1061, %v1061
      %v1094 = vpack.c.b16 %v1062, %v1062
      %v1095 = vpack.c.b16 %v1063, %v1063
      %v1096 = vpack.c.b16 %v1064, %v1064
      %v1097 = vpack.c.b16 %v1065, %v1065
      %v1098 = vpack.c.b16 %v1066, %v1066
      %v1099 = vpack.c.b16 %v1067, %v1067
      %v1100 = vpack.c.b16 %v1068, %v1068
      %v1101 = vpack.c.b16 %v1069, %v1069
      %v1102 = vpack.c.b16 %v1070, %v1070
      %vm1135 = vcmask 543744
      %1136 = vst.msk [vmem:[%s197] sm:$0xf] %vm1135, %v1071
      %1137 = vst.msk [vmem:[%s197 + $0x4] sm:$0xf] %vm1135, %v1072
      %1138 = vst.msk [vmem:[%s197 + $0x8] sm:$0xf] %vm1135, %v1073
      %1139 = vst.msk [vmem:[%s197 + $0xc] sm:$0xf] %vm1135, %v1074
      %1140 = vst.msk [vmem:[%s197 + $0x10] sm:$0xf] %vm1135, %v1075
      %1141 = vst.msk [vmem:[%s197 + $0x14] sm:$0xf] %vm1135, %v1076
      %1142 = vst.msk [vmem:[%s197 + $0x18] sm:$0xf] %vm1135, %v1077
      %1143 = vst.msk [vmem:[%s197 + $0x1c] sm:$0xf] %vm1135, %v1078
      %1144 = vst.msk [vmem:[%s197 + $0x20] sm:$0xf] %vm1135, %v1079
      %1145 = vst.msk [vmem:[%s197 + $0x24] sm:$0xf] %vm1135, %v1080
      %1146 = vst.msk [vmem:[%s197 + $0x28] sm:$0xf] %vm1135, %v1081
      %1147 = vst.msk [vmem:[%s197 + $0x2c] sm:$0xf] %vm1135, %v1082
      %1148 = vst.msk [vmem:[%s197 + $0x30] sm:$0xf] %vm1135, %v1083
      %1149 = vst.msk [vmem:[%s197 + $0x34] sm:$0xf] %vm1135, %v1084
      %1150 = vst.msk [vmem:[%s197 + $0x38] sm:$0xf] %vm1135, %v1085
      %1151 = vst.msk [vmem:[%s197 + $0x3c] sm:$0xf] %vm1135, %v1086
      %1152 = vst.msk [vmem:[%s197 + $0x40] sm:$0xf] %vm1135, %v1087
      %1153 = vst.msk [vmem:[%s197 + $0x44] sm:$0xf] %vm1135, %v1088
      %1154 = vst.msk [vmem:[%s197 + $0x48] sm:$0xf] %vm1135, %v1089
      %1155 = vst.msk [vmem:[%s197 + $0x4c] sm:$0xf] %vm1135, %v1090
      %1156 = vst.msk [vmem:[%s197 + $0x50] sm:$0xf] %vm1135, %v1091
      %1157 = vst.msk [vmem:[%s197 + $0x54] sm:$0xf] %vm1135, %v1092
      %1158 = vst.msk [vmem:[%s197 + $0x58] sm:$0xf] %vm1135, %v1093
      %1159 = vst.msk [vmem:[%s197 + $0x5c] sm:$0xf] %vm1135, %v1094
      %1160 = vst.msk [vmem:[%s197 + $0x60] sm:$0xf] %vm1135, %v1095
      %1161 = vst.msk [vmem:[%s197 + $0x64] sm:$0xf] %vm1135, %v1096
      %1162 = vst.msk [vmem:[%s197 + $0x68] sm:$0xf] %vm1135, %v1097
      %1163 = vst.msk [vmem:[%s197 + $0x6c] sm:$0xf] %vm1135, %v1098
      %1164 = vst.msk [vmem:[%s197 + $0x70] sm:$0xf] %vm1135, %v1099
      %1165 = vst.msk [vmem:[%s197 + $0x74] sm:$0xf] %vm1135, %v1100
      %1166 = vst.msk [vmem:[%s197 + $0x78] sm:$0xf] %vm1135, %v1101
      %1167 = vst.msk [vmem:[%s197 + $0x7c] sm:$0xf] %vm1135, %v1102
      %s1168 = smul.u32 32, %s14
      %p1169 = scmp.lt.s32.totalorder %s1168, 63
      %s1170 = scalar_select %p1169, %s1168, 63
      %s1171 = smul.addr %s1170, 4
      %s1172 = scalar_lea.vmem %s3, %s1171
      // Predicated region
      $region33: #{forward.2} parent=31 // pred_check
        %p1173 = pneg %p105
      $region34: #{forward.2} parent=31 // pred_check_branch
        %1175 = sbr.rel (%p1173) target = $region36
      $region35: #{forward.2} parent=31 // pred_region
        %s1176 = smul.u32 32, %s14
      $region36: #{forward.2} parent=31 // pred_fallthru
        _
    $region32: #{forward.2} parent=5 // pred_fallthru
      _
    %p1177 = scmp.le.s32.totalorder 2, %s9
    // Predicated region
    $region37: #{forward.2} parent=5 // pred_check
      %p1178 = pneg %p1177
    $region38: #{forward.2} parent=5 // pred_check_branch
      %1180 = sbr.rel (%p1178) target = $region40
    $region39: #{forward.2} parent=5 // pred_region
      %s1181 = ssub.s32 %s9, 2
      // Predicated region
      $region41: #{forward.2} parent=39 // pred_check
        %p1182 = pneg %p111
      $region42: #{forward.2} parent=39 // pred_check_branch
        %1184 = sbr.rel (%p1182) target = $region44
      $region43: #{forward.2} parent=39 // pred_region
        %s1185 = smul.u32 32, %s15
        %p1186 = scmp.lt.s32.totalorder %s1185, 63
        %s1187 = scalar_select %p1186, %s1185, 63
        %s1188 = smul.addr %s1187, 4
        %s1189 = scalar_lea.vmem %s3, %s1188
      $region44: #{forward.2} parent=39 // pred_fallthru
        _
    $region40: #{forward.2} parent=5 // pred_fallthru
      _
  $region6: #{forward.2} parent=0 // loop_footer
    %s13 = sadd.s32 1, %s9
  $region7: #{forward.2} parent=0 // loop_footer_branch
    %8 = sbr.rel target = $region3
  $region8: #{forward.2} parent=0 // loop_exit
    _

// kernel: forward.3
$region0: #{forward.3}
  #allocation0 [shape = 'u32[]', space=smem, size = 0x4, offset = 0x4, fixed_abs, tag = 'smem constant byte address 0x4 - core index']
  #allocation1 [shape = 'u32[72,128]{1,0:T(1,128)}', space=vmem, size = 0x9000, scoped, tag = 'internal scratch']
  %s0 = inlined_call_operand.vmem [shape: bf16[256,6], index: 0, kind: input, shape index: {}]
  %s1 = inlined_call_operand.vmem [shape: bf16[6,256,67], index: 1, kind: input, shape index: {}]
  %s2 = inlined_call_operand.vmem [shape: bf16[256,96], index: 2, kind: input, shape index: {}]
  %s3 = inlined_call_operand.vmem [shape: bf16[256,96], index: 3, kind: input, shape index: {}]
  %s4 = inlined_call_operand.vmem [shape: bf16[256,96], index: 4, kind: input, shape index: {}]
  %s5 = inlined_call_operand.vmem [shape: bf16[6,96], index: 5, kind: input, shape index: {}]
  %s6 = inlined_call_operand.vmem [shape: bf16[6,67,96], index: 6, kind: input, shape index: {}]
  %s7 = inlined_call_operand.vmem [shape: f32[1,96], index: 7, kind: input, shape index: {}]
  %s8 = inlined_call_operand.vmem [shape: f32[256,8], index: 8, kind: output, shape index: {}]
  %s9 = sld [smem:[#allocation0]]
  $region106: #{forward.3} parent=0
    _
  %s11 = ssub.s32 1, %s9
  %s12 = scalar_select 0, %s11, %s9
  $region1: #{forward.3} parent=0
    #allocation2 [shape = 'u8[393216]{0}', space=vmem, size = 0x60000, scoped, tag = 'input window, operand 1']
    loop: start=0, step=1, limit=4
    $region2: #{forward.3} parent=1 // loop_pre_header
      _
    $region3: #{forward.3} parent=1 // loop_header
      %s14 = sphi 0, %s18
      %p15 = scmp.ge.s32.totalorder %s14, 4
      %s24 = sphi 0, %s26
      %s27 = sphi 0, %s24
      %s28 = sphi 0, %s27
      %s44 = sphi 0, %s28
      %s50 = sphi 0, %s52
      %s53 = sphi 0, %s50
      %s54 = sphi 0, %s53
      %s70 = sphi 0, %s54
      %s76 = sphi 0, %s78
      %s79 = sphi 0, %s76
      %s80 = sphi 0, %s79
      %s96 = sphi 0, %s80
      %s102 = sphi 0, %s104
      %s105 = sphi 0, %s102
      %s106 = sphi 0, %s105
      %s122 = sphi 0, %s106
      %s128 = sphi 0, %s130
      %s131 = sphi 0, %s128
      %s132 = sphi 0, %s131
      %s148 = sphi 0, %s132
      %s152 = sphi 0, %s152
      %s154 = sphi 0, %s152
      %s155 = sphi 0, %s154
      %s169 = sphi 0, %s155
      %s173 = sphi 0, %s173
      %s175 = sphi 0, %s173
      %s176 = sphi 0, %s175
      %s190 = sphi 0, %s176
      %s194 = sphi 0, %s194
      %s196 = sphi 0, %s194
      %s197 = sphi 0, %s196
      %s211 = sphi 0, %s197
      %s217 = sphi 0, %s219
      %s220 = sphi 0, %s217
      %s221 = sphi 0, %s220
      %s237 = sphi 0, %s221
    $region4: #{forward.3} parent=1 // loop_header_branch
      %17 = sbr.rel (%p15) target = $region8
    $region5: #{forward.3} parent=1 // loop_body
      %s19 = ssub.s32 %s14, 1
      %s20 = ssub.s32 %s14, 2
      %s21 = sadd.s32 %s14, 1
      %s22 = ssub.s32 %s14, %s21
      %p23 = scmp.eq.s32.totalorder %s22, 0
      %s25 = sadd.s32 %s24, 1
      %s26 = scalar_select %p23, %s24, %s25
      %p29 = pneg %p23
      %p30 = scmp.eq.s32.totalorder %s14, 1
      %p31 = por %p29, %p30
      %p32 = scmp.ne.s32.totalorder %s24, %s27
      %p33 = scmp.eq.s32.totalorder %s14, 0
      %p34 = por %p32, %p33
      %p35 = scmp.ne.s32.totalorder %s24, %s27
      %p36 = scmp.eq.s32.totalorder %s19, 1
      %p37 = por %p35, %p36
      %p38 = scmp.ne.s32.totalorder %s27, %s28
      %p39 = scmp.eq.s32.totalorder %s19, 0
      %p40 = por %p38, %p39
      %p41 = scmp.ne.s32.totalorder %s27, %s28
      %p42 = scmp.eq.s32.totalorder %s20, 1
      %p43 = por %p41, %p42
      %p45 = scmp.ne.s32.totalorder %s28, %s44
      %p46 = scmp.eq.s32.totalorder %s20, 0
      %p47 = por %p45, %p46
      %s48 = ssub.s32 %s14, %s21
      %p49 = scmp.eq.s32.totalorder %s48, 0
      %s51 = sadd.s32 %s50, 1
      %s52 = scalar_select %p49, %s50, %s51
      %p55 = pneg %p49
      %p56 = scmp.eq.s32.totalorder %s14, 1
      %p57 = por %p55, %p56
      %p58 = scmp.ne.s32.totalorder %s50, %s53
      %p59 = scmp.eq.s32.totalorder %s14, 0
      %p60 = por %p58, %p59
      %p61 = scmp.ne.s32.totalorder %s50, %s53
      %p62 = scmp.eq.s32.totalorder %s19, 1
      %p63 = por %p61, %p62
      %p64 = scmp.ne.s32.totalorder %s53, %s54
      %p65 = scmp.eq.s32.totalorder %s19, 0
      %p66 = por %p64, %p65
      %p67 = scmp.ne.s32.totalorder %s53, %s54
      %p68 = scmp.eq.s32.totalorder %s20, 1
      %p69 = por %p67, %p68
      %p71 = scmp.ne.s32.totalorder %s54, %s70
      %p72 = scmp.eq.s32.totalorder %s20, 0
      %p73 = por %p71, %p72
      %s74 = ssub.s32 %s14, %s21
      %p75 = scmp.eq.s32.totalorder %s74, 0
      %s77 = sadd.s32 %s76, 1
      %s78 = scalar_select %p75, %s76, %s77
      %p81 = pneg %p75
      %p82 = scmp.eq.s32.totalorder %s14, 1
      %p83 = por %p81, %p82
      %p84 = scmp.ne.s32.totalorder %s76, %s79
      %p85 = scmp.eq.s32.totalorder %s14, 0
      %p86 = por %p84, %p85
      %p87 = scmp.ne.s32.totalorder %s76, %s79
      %p88 = scmp.eq.s32.totalorder %s19, 1
      %p89 = por %p87, %p88
      %p90 = scmp.ne.s32.totalorder %s79, %s80
      %p91 = scmp.eq.s32.totalorder %s19, 0
      %p92 = por %p90, %p91
      %p93 = scmp.ne.s32.totalorder %s79, %s80
      %p94 = scmp.eq.s32.totalorder %s20, 1
      %p95 = por %p93, %p94
      %p97 = scmp.ne.s32.totalorder %s80, %s96
      %p98 = scmp.eq.s32.totalorder %s20, 0
      %p99 = por %p97, %p98
      %s100 = ssub.s32 %s14, %s21
      %p101 = scmp.eq.s32.totalorder %s100, 0
      %s103 = sadd.s32 %s102, 1
      %s104 = scalar_select %p101, %s102, %s103
      %p107 = pneg %p101
      %p108 = scmp.eq.s32.totalorder %s14, 1
      %p109 = por %p107, %p108
      %p110 = scmp.ne.s32.totalorder %s102, %s105
      %p111 = scmp.eq.s32.totalorder %s14, 0
      %p112 = por %p110, %p111
      %p113 = scmp.ne.s32.totalorder %s102, %s105
      %p114 = scmp.eq.s32.totalorder %s19, 1
      %p115 = por %p113, %p114
      %p116 = scmp.ne.s32.totalorder %s105, %s106
      %p117 = scmp.eq.s32.totalorder %s19, 0
      %p118 = por %p116, %p117
      %p119 = scmp.ne.s32.totalorder %s105, %s106
      %p120 = scmp.eq.s32.totalorder %s20, 1
      %p121 = por %p119, %p120
      %p123 = scmp.ne.s32.totalorder %s106, %s122
      %p124 = scmp.eq.s32.totalorder %s20, 0
      %p125 = por %p123, %p124
      %s126 = ssub.s32 %s14, %s21
      %p127 = scmp.eq.s32.totalorder %s126, 0
      %s129 = sadd.s32 %s128, 1
      %s130 = scalar_select %p127, %s128, %s129
      %p133 = pneg %p127
      %p134 = scmp.eq.s32.totalorder %s14, 1
      %p135 = por %p133, %p134
      %p136 = scmp.ne.s32.totalorder %s128, %s131
      %p137 = scmp.eq.s32.totalorder %s14, 0
      %p138 = por %p136, %p137
      %p139 = scmp.ne.s32.totalorder %s128, %s131
      %p140 = scmp.eq.s32.totalorder %s19, 1
      %p141 = por %p139, %p140
      %p142 = scmp.ne.s32.totalorder %s131, %s132
      %p143 = scmp.eq.s32.totalorder %s19, 0
      %p144 = por %p142, %p143
      %p145 = scmp.ne.s32.totalorder %s131, %s132
      %p146 = scmp.eq.s32.totalorder %s20, 1
      %p147 = por %p145, %p146
      %p149 = scmp.ne.s32.totalorder %s132, %s148
      %p150 = scmp.eq.s32.totalorder %s20, 0
      %p151 = por %p149, %p150
      %s153 = sadd.s32 %s152, 1
      %p156 = scmp.eq.s32.totalorder %s14, 1
      %p157 = scmp.ne.s32.totalorder %s152, %s154
      %p158 = scmp.eq.s32.totalorder %s14, 0
      %p159 = por %p157, %p158
      %p160 = scmp.ne.s32.totalorder %s152, %s154
      %p161 = scmp.eq.s32.totalorder %s19, 1
      %p162 = por %p160, %p161
      %p163 = scmp.ne.s32.totalorder %s154, %s155
      %p164 = scmp.eq.s32.totalorder %s19, 0
      %p165 = por %p163, %p164
      %p166 = scmp.ne.s32.totalorder %s154, %s155
      %p167 = scmp.eq.s32.totalorder %s20, 1
      %p168 = por %p166, %p167
      %p170 = scmp.ne.s32.totalorder %s155, %s169
      %p171 = scmp.eq.s32.totalorder %s20, 0
      %p172 = por %p170, %p171
      %s174 = sadd.s32 %s173, 1
      %p177 = scmp.eq.s32.totalorder %s14, 1
      %p178 = scmp.ne.s32.totalorder %s173, %s175
      %p179 = scmp.eq.s32.totalorder %s14, 0
      %p180 = por %p178, %p179
      %p181 = scmp.ne.s32.totalorder %s173, %s175
      %p182 = scmp.eq.s32.totalorder %s19, 1
      %p183 = por %p181, %p182
      %p184 = scmp.ne.s32.totalorder %s175, %s176
      %p185 = scmp.eq.s32.totalorder %s19, 0
      %p186 = por %p184, %p185
      %p187 = scmp.ne.s32.totalorder %s175, %s176
      %p188 = scmp.eq.s32.totalorder %s20, 1
      %p189 = por %p187, %p188
      %p191 = scmp.ne.s32.totalorder %s176, %s190
      %p192 = scmp.eq.s32.totalorder %s20, 0
      %p193 = por %p191, %p192
      %s195 = sadd.s32 %s194, 1
      %p198 = scmp.eq.s32.totalorder %s14, 1
      %p199 = scmp.ne.s32.totalorder %s194, %s196
      %p200 = scmp.eq.s32.totalorder %s14, 0
      %p201 = por %p199, %p200
      %p202 = scmp.ne.s32.totalorder %s194, %s196
      %p203 = scmp.eq.s32.totalorder %s19, 1
      %p204 = por %p202, %p203
      %p205 = scmp.ne.s32.totalorder %s196, %s197
      %p206 = scmp.eq.s32.totalorder %s19, 0
      %p207 = por %p205, %p206
      %p208 = scmp.ne.s32.totalorder %s196, %s197
      %p209 = scmp.eq.s32.totalorder %s20, 1
      %p210 = por %p208, %p209
      %p212 = scmp.ne.s32.totalorder %s197, %s211
      %p213 = scmp.eq.s32.totalorder %s20, 0
      %p214 = por %p212, %p213
      %s215 = ssub.s32 %s14, %s21
      %p216 = scmp.eq.s32.totalorder %s215, 0
      %s218 = sadd.s32 %s217, 1
      %s219 = scalar_select %p216, %s217, %s218
      %p222 = pneg %p216
      %p223 = scmp.eq.s32.totalorder %s14, 1
      %p224 = por %p222, %p223
      %p225 = scmp.ne.s32.totalorder %s217, %s220
      %p226 = scmp.eq.s32.totalorder %s14, 0
      %p227 = por %p225, %p226
      %p228 = scmp.ne.s32.totalorder %s217, %s220
      %p229 = scmp.eq.s32.totalorder %s19, 1
      %p230 = por %p228, %p229
      %p231 = scmp.ne.s32.totalorder %s220, %s221
      %p232 = scmp.eq.s32.totalorder %s19, 0
      %p233 = por %p231, %p232
      %p234 = scmp.ne.s32.totalorder %s220, %s221
      %p235 = scmp.eq.s32.totalorder %s20, 1
      %p236 = por %p234, %p235
      %p238 = scmp.ne.s32.totalorder %s221, %s237
      %p239 = scmp.eq.s32.totalorder %s20, 0
      %p240 = por %p238, %p239
      %p241 = scmp.le.s32.totalorder 1, %s14
      %p242 = scmp.lt.s32.totalorder %s14, 3
      %p243 = pnand %p241, %p242
      %p244 = pneg %p243
      // Predicated region
      $region9: #{forward.3} parent=5 // pred_check
        _
      $region10: #{forward.3} parent=5 // pred_check_branch
        %246 = sbr.rel (%p243) target = $region12
      $region11: #{forward.3} parent=5 // pred_region
        %s247 = ssub.s32 %s14, 1
        // Predicated region
        $region13: #{forward.3} parent=11 // pred_check
          %p248 = pneg %p165
        $region14: #{forward.3} parent=11 // pred_check_branch
          %250 = sbr.rel (%p248) target = $region16
        $region15: #{forward.3} parent=11 // pred_region
          _
        $region16: #{forward.3} parent=11 // pred_fallthru
          _
        // Predicated region
        $region17: #{forward.3} parent=11 // pred_check
          %p251 = pneg %p186
        $region18: #{forward.3} parent=11 // pred_check_branch
          %253 = sbr.rel (%p251) target = $region20
        $region19: #{forward.3} parent=11 // pred_region
          _
        $region20: #{forward.3} parent=11 // pred_fallthru
          _
        // Predicated region
        $region21: #{forward.3} parent=11 // pred_check
          %p254 = pneg %p207
        $region22: #{forward.3} parent=11 // pred_check_branch
          %256 = sbr.rel (%p254) target = $region24
        $region23: #{forward.3} parent=11 // pred_region
          _
        $region24: #{forward.3} parent=11 // pred_fallthru
          _
      $region12: #{forward.3} parent=5 // pred_fallthru
        _
      %p257 = scmp.lt.s32.totalorder %s14, 2
      // Predicated region
      $region25: #{forward.3} parent=5 // pred_check
        %p258 = pneg %p257
      $region26: #{forward.3} parent=5 // pred_check_branch
        %260 = sbr.rel (%p258) target = $region28
      $region27: #{forward.3} parent=5 // pred_region
        // Predicated region
        $region29: #{forward.3} parent=27 // pred_check
          %p261 = pneg %p34
        $region30: #{forward.3} parent=27 // pred_check_branch
          %263 = sbr.rel (%p261) target = $region32
        $region31: #{forward.3} parent=27 // pred_region
          %s264 = smul.u32 16, %s14
          %p265 = scmp.lt.s32.totalorder %s264, 31
          %s266 = scalar_select %p265, %s264, 31
          %s267 = smul.addr %s266, 4
          %s268 = scalar_lea.vmem %s0, %s267
          %s269 = smul.u32 16, %s14
        $region32: #{forward.3} parent=27 // pred_fallthru
          _
        // Predicated region
        $region33: #{forward.3} parent=27 // pred_check
          %p270 = pneg %p60
        $region34: #{forward.3} parent=27 // pred_check_branch
          %272 = sbr.rel (%p270) target = $region36
        $region35: #{forward.3} parent=27 // pred_region
          %s273 = sand.u32 %s50, 1
          %s274 = sand.u32 %s50, 1
          %s275 = smul.addr %s274, 384
          %s276 = scalar_lea.vmem [#allocation2], %s275
          %s277 = smul.u32 16, %s14
          %s278 = smul.addr %s277, 4
          %s279 = scalar_lea.vmem %s1, %s278
          // Predicated region
          $region37: #{forward.3} parent=35 // pred_check
            _
          $region38: #{forward.3} parent=35 // pred_check_branch
            %281 = sbr.rel (0) target = $region40
          $region39: #{forward.3} parent=35 // pred_region
            // Predicated region
            $region41: #{forward.3} parent=39 // pred_check
              _
            $region42: #{forward.3} parent=39 // pred_check_branch
              %283 = sbr.rel target = $region44
            $region43: #{forward.3} parent=39 // pred_region
              // Predicated region
              $region56: #{forward.3} parent=43 // pred_check
                _
              $region57: #{forward.3} parent=43 // pred_check_branch
                %489 = sbr.rel (0) target = $region59
              $region58: #{forward.3} parent=43 // pred_region
                loop: start=0, step=1, limit=1
                $region60: #{forward.3} parent=58 // loop_pre_header
                  _
                $region61: #{forward.3} parent=58 // loop_header
                  %s491 = sphi 0, %s495
                  %p492 = scmp.ge.s32.totalorder %s491, 1
                  %s496 = sphi %s279, %s279
                  %s497 = sphi %s276, %s276
                $region62: #{forward.3} parent=58 // loop_header_branch
                  %494 = sbr.rel (%p492) target = $region66
                $region63: #{forward.3} parent=58 // loop_body
                  _
                $region64: #{forward.3} parent=58 // loop_footer
                  %s495 = sadd.s32 1, %s491
                $region65: #{forward.3} parent=58 // loop_footer_branch
                  %490 = sbr.rel target = $region61
                $region66: #{forward.3} parent=58 // loop_exit
                  _
                %s499 = ssub.s32 16, 1
                loop: start=0, step=1, limit=1
                $region67: #{forward.3} parent=58 // loop_pre_header
                  _
                $region68: #{forward.3} parent=58 // loop_header
                  %s501 = sphi 0, %s505
                  %p502 = scmp.ge.s32.totalorder %s501, 1
                  %s506 = sphi %s279, %s279
                  %s507 = sphi %s276, %s276
                $region69: #{forward.3} parent=58 // loop_header_branch
                  %504 = sbr.rel (%p502) target = $region73
                $region70: #{forward.3} parent=58 // loop_body
                  %v508 = vld [vmem:[%s506] sm:%s499]
                  %509 = vst [vmem:[%s507] sm:%s499] %v508
                  %v510 = vld [vmem:[%s506 + $0x4] sm:%s499]
                  %511 = vst [vmem:[%s507 + $0x4] sm:%s499] %v510
                  %v512 = vld [vmem:[%s506 + $0x8] sm:%s499]
                  %513 = vst [vmem:[%s507 + $0x8] sm:%s499] %v512
                  %v514 = vld [vmem:[%s506 + $0xc] sm:%s499]
                  %515 = vst [vmem:[%s507 + $0xc] sm:%s499] %v514
                  %v516 = vld [vmem:[%s506 + $0x10] sm:%s499]
                  %517 = vst [vmem:[%s507 + $0x10] sm:%s499] %v516
                  %v518 = vld [vmem:[%s506 + $0x14] sm:%s499]
                  %519 = vst [vmem:[%s507 + $0x14] sm:%s499] %v518
                  %v520 = vld [vmem:[%s506 + $0x18] sm:%s499]
                  %521 = vst [vmem:[%s507 + $0x18] sm:%s499] %v520
                  %v522 = vld [vmem:[%s506 + $0x1c] sm:%s499]
                  %523 = vst [vmem:[%s507 + $0x1c] sm:%s499] %v522
                  %v524 = vld [vmem:[%s506 + $0x20] sm:%s499]
                  %525 = vst [vmem:[%s507 + $0x20] sm:%s499] %v524
                  %v526 = vld [vmem:[%s506 + $0x24] sm:%s499]
                  %527 = vst [vmem:[%s507 + $0x24] sm:%s499] %v526
                  %v528 = vld [vmem:[%s506 + $0x28] sm:%s499]
                  %529 = vst [vmem:[%s507 + $0x28] sm:%s499] %v528
                  %v530 = vld [vmem:[%s506 + $0x2c] sm:%s499]
                  %531 = vst [vmem:[%s507 + $0x2c] sm:%s499] %v530
                  %v532 = vld [vmem:[%s506 + $0x30] sm:%s499]
                  %533 = vst [vmem:[%s507 + $0x30] sm:%s499] %v532
                  %v534 = vld [vmem:[%s506 + $0x34] sm:%s499]
                  %535 = vst [vmem:[%s507 + $0x34] sm:%s499] %v534
                  %v536 = vld [vmem:[%s506 + $0x38] sm:%s499]
                  %537 = vst [vmem:[%s507 + $0x38] sm:%s499] %v536
                  %v538 = vld [vmem:[%s506 + $0x3c] sm:%s499]
                  %539 = vst [vmem:[%s507 + $0x3c] sm:%s499] %v538
                  %v540 = vld [vmem:[%s506 + $0x80] sm:%s499]
                  %541 = vst [vmem:[%s507 + $0x40] sm:%s499] %v540
                  %v542 = vld [vmem:[%s506 + $0x84] sm:%s499]
                  %543 = vst [vmem:[%s507 + $0x44] sm:%s499] %v542
                  %v544 = vld [vmem:[%s506 + $0x88] sm:%s499]
                  %545 = vst [vmem:[%s507 + $0x48] sm:%s499] %v544
                  %v546 = vld [vmem:[%s506 + $0x8c] sm:%s499]
                  %547 = vst [vmem:[%s507 + $0x4c] sm:%s499] %v546
                  %v548 = vld [vmem:[%s506 + $0x90] sm:%s499]
                  %549 = vst [vmem:[%s507 + $0x50] sm:%s499] %v548
                  %v550 = vld [vmem:[%s506 + $0x94] sm:%s499]
                  %551 = vst [vmem:[%s507 + $0x54] sm:%s499] %v550
                  %v552 = vld [vmem:[%s506 + $0x98] sm:%s499]
                  %553 = vst [vmem:[%s507 + $0x58] sm:%s499] %v552
                  %v554 = vld [vmem:[%s506 + $0x9c] sm:%s499]
                  %555 = vst [vmem:[%s507 + $0x5c] sm:%s499] %v554
                  %v556 = vld [vmem:[%s506 + $0xa0] sm:%s499]
                  %557 = vst [vmem:[%s507 + $0x60] sm:%s499] %v556
                  %v558 = vld [vmem:[%s506 + $0xa4] sm:%s499]
                  %559 = vst [vmem:[%s507 + $0x64] sm:%s499] %v558
                  %v560 = vld [vmem:[%s506 + $0xa8] sm:%s499]
                  %561 = vst [vmem:[%s507 + $0x68] sm:%s499] %v560
                  %v562 = vld [vmem:[%s506 + $0xac] sm:%s499]
                  %563 = vst [vmem:[%s507 + $0x6c] sm:%s499] %v562
                  %v564 = vld [vmem:[%s506 + $0xb0] sm:%s499]
                  %565 = vst [vmem:[%s507 + $0x70] sm:%s499] %v564
                  %v566 = vld [vmem:[%s506 + $0xb4] sm:%s499]
                  %567 = vst [vmem:[%s507 + $0x74] sm:%s499] %v566
                  %v568 = vld [vmem:[%s506 + $0xb8] sm:%s499]
                  %569 = vst [vmem:[%s507 + $0x78] sm:%s499] %v568
                  %v570 = vld [vmem:[%s506 + $0xbc] sm:%s499]
                  %571 = vst [vmem:[%s507 + $0x7c] sm:%s499] %v570
                  %v572 = vld [vmem:[%s506 + $0x100] sm:%s499]
                  %573 = vst [vmem:[%s507 + $0x80] sm:%s499] %v572
                  %v574 = vld [vmem:[%s506 + $0x104] sm:%s499]
                  %575 = vst [vmem:[%s507 + $0x84] sm:%s499] %v574
                  %v576 = vld [vmem:[%s506 + $0x108] sm:%s499]
                  %577 = vst [vmem:[%s507 + $0x88] sm:%s499] %v576
                  %v578 = vld [vmem:[%s506 + $0x10c] sm:%s499]
                  %579 = vst [vmem:[%s507 + $0x8c] sm:%s499] %v578
                  %v580 = vld [vmem:[%s506 + $0x110] sm:%s499]
                  %581 = vst [vmem:[%s507 + $0x90] sm:%s499] %v580
                  %v582 = vld [vmem:[%s506 + $0x114] sm:%s499]
                  %583 = vst [vmem:[%s507 + $0x94] sm:%s499] %v582
                  %v584 = vld [vmem:[%s506 + $0x118] sm:%s499]
                  %585 = vst [vmem:[%s507 + $0x98] sm:%s499] %v584
                  %v586 = vld [vmem:[%s506 + $0x11c] sm:%s499]
                  %587 = vst [vmem:[%s507 + $0x9c] sm:%s499] %v586
                  %v588 = vld [vmem:[%s506 + $0x120] sm:%s499]
                  %589 = vst [vmem:[%s507 + $0xa0] sm:%s499] %v588
                  %v590 = vld [vmem:[%s506 + $0x124] sm:%s499]
                  %591 = vst [vmem:[%s507 + $0xa4] sm:%s499] %v590
                  %v592 = vld [vmem:[%s506 + $0x128] sm:%s499]
                  %593 = vst [vmem:[%s507 + $0xa8] sm:%s499] %v592
                  %v594 = vld [vmem:[%s506 + $0x12c] sm:%s499]
                  %595 = vst [vmem:[%s507 + $0xac] sm:%s499] %v594
                  %v596 = vld [vmem:[%s506 + $0x130] sm:%s499]
                  %597 = vst [vmem:[%s507 + $0xb0] sm:%s499] %v596
                  %v598 = vld [vmem:[%s506 + $0x134] sm:%s499]
                  %599 = vst [vmem:[%s507 + $0xb4] sm:%s499] %v598
                  %v600 = vld [vmem:[%s506 + $0x138] sm:%s499]
                  %601 = vst [vmem:[%s507 + $0xb8] sm:%s499] %v600
                  %v602 = vld [vmem:[%s506 + $0x13c] sm:%s499]
                  %603 = vst [vmem:[%s507 + $0xbc] sm:%s499] %v602
                  %v604 = vld [vmem:[%s506 + $0x180] sm:%s499]
                  %605 = vst [vmem:[%s507 + $0xc0] sm:%s499] %v604
                  %v606 = vld [vmem:[%s506 + $0x184] sm:%s499]
                  %607 = vst [vmem:[%s507 + $0xc4] sm:%s499] %v606
                  %v608 = vld [vmem:[%s506 + $0x188] sm:%s499]
                  %609 = vst [vmem:[%s507 + $0xc8] sm:%s499] %v608
                  %v610 = vld [vmem:[%s506 + $0x18c] sm:%s499]
                  %611 = vst [vmem:[%s507 + $0xcc] sm:%s499] %v610
                  %v612 = vld [vmem:[%s506 + $0x190] sm:%s499]
                  %613 = vst [vmem:[%s507 + $0xd0] sm:%s499] %v612
                  %v614 = vld [vmem:[%s506 + $0x194] sm:%s499]
                  %615 = vst [vmem:[%s507 + $0xd4] sm:%s499] %v614
                  %v616 = vld [vmem:[%s506 + $0x198] sm:%s499]
                  %617 = vst [vmem:[%s507 + $0xd8] sm:%s499] %v616
                  %v618 = vld [vmem:[%s506 + $0x19c] sm:%s499]
                  %619 = vst [vmem:[%s507 + $0xdc] sm:%s499] %v618
                  %v620 = vld [vmem:[%s506 + $0x1a0] sm:%s499]
                  %621 = vst [vmem:[%s507 + $0xe0] sm:%s499] %v620
                  %v622 = vld [vmem:[%s506 + $0x1a4] sm:%s499]
                  %623 = vst [vmem:[%s507 + $0xe4] sm:%s499] %v622
                  %v624 = vld [vmem:[%s506 + $0x1a8] sm:%s499]
                  %625 = vst [vmem:[%s507 + $0xe8] sm:%s499] %v624
                  %v626 = vld [vmem:[%s506 + $0x1ac] sm:%s499]
                  %627 = vst [vmem:[%s507 + $0xec] sm:%s499] %v626
                  %v628 = vld [vmem:[%s506 + $0x1b0] sm:%s499]
                  %629 = vst [vmem:[%s507 + $0xf0] sm:%s499] %v628
                  %v630 = vld [vmem:[%s506 + $0x1b4] sm:%s499]
                  %631 = vst [vmem:[%s507 + $0xf4] sm:%s499] %v630
                  %v632 = vld [vmem:[%s506 + $0x1b8] sm:%s499]
                  %633 = vst [vmem:[%s507 + $0xf8] sm:%s499] %v632
                  %v634 = vld [vmem:[%s506 + $0x1bc] sm:%s499]
                  %635 = vst [vmem:[%s507 + $0xfc] sm:%s499] %v634
                  %v636 = vld [vmem:[%s506 + $0x200] sm:%s499]
                  %637 = vst [vmem:[%s507 + $0x100] sm:%s499] %v636
                  %v638 = vld [vmem:[%s506 + $0x204] sm:%s499]
                  %639 = vst [vmem:[%s507 + $0x104] sm:%s499] %v638
                  %v640 = vld [vmem:[%s506 + $0x208] sm:%s499]
                  %641 = vst [vmem:[%s507 + $0x108] sm:%s499] %v640
                  %v642 = vld [vmem:[%s506 + $0x20c] sm:%s499]
                  %643 = vst [vmem:[%s507 + $0x10c] sm:%s499] %v642
                  %v644 = vld [vmem:[%s506 + $0x210] sm:%s499]
                  %645 = vst [vmem:[%s507 + $0x110] sm:%s499] %v644
                  %v646 = vld [vmem:[%s506 + $0x214] sm:%s499]
                  %647 = vst [vmem:[%s507 + $0x114] sm:%s499] %v646
                  %v648 = vld [vmem:[%s506 + $0x218] sm:%s499]
                  %649 = vst [vmem:[%s507 + $0x118] sm:%s499] %v648
                  %v650 = vld [vmem:[%s506 + $0x21c] sm:%s499]
                  %651 = vst [vmem:[%s507 + $0x11c] sm:%s499] %v650
                  %v652 = vld [vmem:[%s506 + $0x220] sm:%s499]
                  %653 = vst [vmem:[%s507 + $0x120] sm:%s499] %v652
                  %v654 = vld [vmem:[%s506 + $0x224] sm:%s499]
                  %655 = vst [vmem:[%s507 + $0x124] sm:%s499] %v654
                  %v656 = vld [vmem:[%s506 + $0x228] sm:%s499]
                  %657 = vst [vmem:[%s507 + $0x128] sm:%s499] %v656
                  %v658 = vld [vmem:[%s506 + $0x22c] sm:%s499]
                  %659 = vst [vmem:[%s507 + $0x12c] sm:%s499] %v658
                  %v660 = vld [vmem:[%s506 + $0x230] sm:%s499]
                  %661 = vst [vmem:[%s507 + $0x130] sm:%s499] %v660
                  %v662 = vld [vmem:[%s506 + $0x234] sm:%s499]
                  %663 = vst [vmem:[%s507 + $0x134] sm:%s499] %v662
                  %v664 = vld [vmem:[%s506 + $0x238] sm:%s499]
                  %665 = vst [vmem:[%s507 + $0x138] sm:%s499] %v664
                  %v666 = vld [vmem:[%s506 + $0x23c] sm:%s499]
                  %667 = vst [vmem:[%s507 + $0x13c] sm:%s499] %v666
                  %v668 = vld [vmem:[%s506 + $0x280] sm:%s499]
                  %669 = vst [vmem:[%s507 + $0x140] sm:%s499] %v668
                  %v670 = vld [vmem:[%s506 + $0x284] sm:%s499]
                  %671 = vst [vmem:[%s507 + $0x144] sm:%s499] %v670
                  %v672 = vld [vmem:[%s506 + $0x288] sm:%s499]
                  %673 = vst [vmem:[%s507 + $0x148] sm:%s499] %v672
                  %v674 = vld [vmem:[%s506 + $0x28c] sm:%s499]
                  %675 = vst [vmem:[%s507 + $0x14c] sm:%s499] %v674
                  %v676 = vld [vmem:[%s506 + $0x290] sm:%s499]
                  %677 = vst [vmem:[%s507 + $0x150] sm:%s499] %v676
                  %v678 = vld [vmem:[%s506 + $0x294] sm:%s499]
                  %679 = vst [vmem:[%s507 + $0x154] sm:%s499] %v678
                  %v680 = vld [vmem:[%s506 + $0x298] sm:%s499]
                  %681 = vst [vmem:[%s507 + $0x158] sm:%s499] %v680
                  %v682 = vld [vmem:[%s506 + $0x29c] sm:%s499]
                  %683 = vst [vmem:[%s507 + $0x15c] sm:%s499] %v682
                  %v684 = vld [vmem:[%s506 + $0x2a0] sm:%s499]
                  %685 = vst [vmem:[%s507 + $0x160] sm:%s499] %v684
                  %v686 = vld [vmem:[%s506 + $0x2a4] sm:%s499]
                  %687 = vst [vmem:[%s507 + $0x164] sm:%s499] %v686
                  %v688 = vld [vmem:[%s506 + $0x2a8] sm:%s499]
                  %689 = vst [vmem:[%s507 + $0x168] sm:%s499] %v688
                  %v690 = vld [vmem:[%s506 + $0x2ac] sm:%s499]
                  %691 = vst [vmem:[%s507 + $0x16c] sm:%s499] %v690
                  %v692 = vld [vmem:[%s506 + $0x2b0] sm:%s499]
                  %693 = vst [vmem:[%s507 + $0x170] sm:%s499] %v692
                  %v694 = vld [vmem:[%s506 + $0x2b4] sm:%s499]
                  %695 = vst [vmem:[%s507 + $0x174] sm:%s499] %v694
                  %v696 = vld [vmem:[%s506 + $0x2b8] sm:%s499]
                  %697 = vst [vmem:[%s507 + $0x178] sm:%s499] %v696
                  %v698 = vld [vmem:[%s506 + $0x2bc] sm:%s499]
                  %699 = vst [vmem:[%s507 + $0x17c] sm:%s499] %v698
                $region71: #{forward.3} parent=58 // loop_footer
                  %s505 = sadd.s32 1, %s501
                $region72: #{forward.3} parent=58 // loop_footer_branch
                  %500 = sbr.rel target = $region68
                $region73: #{forward.3} parent=58 // loop_exit
                  _
              $region59: #{forward.3} parent=43 // pred_fallthru
                _
            $region44: #{forward.3} parent=39 // pred_fallthru
              _
            // Predicated region
            $region45: #{forward.3} parent=39 // pred_check
              _
            $region46: #{forward.3} parent=39 // pred_check_branch
              %285 = sbr.rel (0) target = $region48
            $region47: #{forward.3} parent=39 // pred_region
              %s287 = ssub.s32 16, 1
              loop: start=0, step=1, limit=1
              $region49: #{forward.3} parent=47 // loop_pre_header
                _
              $region50: #{forward.3} parent=47 // loop_header
                %s289 = sphi 0, %s293
                %p290 = scmp.ge.s32.totalorder %s289, 1
                %s294 = sphi %s279, %s279
                %s295 = sphi %s276, %s276
              $region51: #{forward.3} parent=47 // loop_header_branch
                %292 = sbr.rel (%p290) target = $region55
              $region52: #{forward.3} parent=47 // loop_body
                %v296 = vld [vmem:[%s294] sm:%s287]
                %297 = vst [vmem:[%s295] sm:%s287] %v296
                %v298 = vld [vmem:[%s294 + $0x4] sm:%s287]
                %299 = vst [vmem:[%s295 + $0x4] sm:%s287] %v298
                %v300 = vld [vmem:[%s294 + $0x8] sm:%s287]
                %301 = vst [vmem:[%s295 + $0x8] sm:%s287] %v300
                %v302 = vld [vmem:[%s294 + $0xc] sm:%s287]
                %303 = vst [vmem:[%s295 + $0xc] sm:%s287] %v302
                %v304 = vld [vmem:[%s294 + $0x10] sm:%s287]
                %305 = vst [vmem:[%s295 + $0x10] sm:%s287] %v304
                %v306 = vld [vmem:[%s294 + $0x14] sm:%s287]
                %307 = vst [vmem:[%s295 + $0x14] sm:%s287] %v306
                %v308 = vld [vmem:[%s294 + $0x18] sm:%s287]
                %309 = vst [vmem:[%s295 + $0x18] sm:%s287] %v308
                %v310 = vld [vmem:[%s294 + $0x1c] sm:%s287]
                %311 = vst [vmem:[%s295 + $0x1c] sm:%s287] %v310
                %v312 = vld [vmem:[%s294 + $0x20] sm:%s287]
                %313 = vst [vmem:[%s295 + $0x20] sm:%s287] %v312
                %v314 = vld [vmem:[%s294 + $0x24] sm:%s287]
                %315 = vst [vmem:[%s295 + $0x24] sm:%s287] %v314
                %v316 = vld [vmem:[%s294 + $0x28] sm:%s287]
                %317 = vst [vmem:[%s295 + $0x28] sm:%s287] %v316
                %v318 = vld [vmem:[%s294 + $0x2c] sm:%s287]
                %319 = vst [vmem:[%s295 + $0x2c] sm:%s287] %v318
                %v320 = vld [vmem:[%s294 + $0x30] sm:%s287]
                %321 = vst [vmem:[%s295 + $0x30] sm:%s287] %v320
                %v322 = vld [vmem:[%s294 + $0x34] sm:%s287]
                %323 = vst [vmem:[%s295 + $0x34] sm:%s287] %v322
                %v324 = vld [vmem:[%s294 + $0x38] sm:%s287]
                %325 = vst [vmem:[%s295 + $0x38] sm:%s287] %v324
                %v326 = vld [vmem:[%s294 + $0x3c] sm:%s287]
                %327 = vst [vmem:[%s295 + $0x3c] sm:%s287] %v326
                %v328 = vld [vmem:[%s294 + $0x80] sm:%s287]
                %329 = vst [vmem:[%s295 + $0x40] sm:%s287] %v328
                %v330 = vld [vmem:[%s294 + $0x84] sm:%s287]
                %331 = vst [vmem:[%s295 + $0x44] sm:%s287] %v330
                %v332 = vld [vmem:[%s294 + $0x88] sm:%s287]
                %333 = vst [vmem:[%s295 + $0x48] sm:%s287] %v332
                %v334 = vld [vmem:[%s294 + $0x8c] sm:%s287]
                %335 = vst [vmem:[%s295 + $0x4c] sm:%s287] %v334
                %v336 = vld [vmem:[%s294 + $0x90] sm:%s287]
                %337 = vst [vmem:[%s295 + $0x50] sm:%s287] %v336
                %v338 = vld [vmem:[%s294 + $0x94] sm:%s287]
                %339 = vst [vmem:[%s295 + $0x54] sm:%s287] %v338
                %v340 = vld [vmem:[%s294 + $0x98] sm:%s287]
                %341 = vst [vmem:[%s295 + $0x58] sm:%s287] %v340
                %v342 = vld [vmem:[%s294 + $0x9c] sm:%s287]
                %343 = vst [vmem:[%s295 + $0x5c] sm:%s287] %v342
                %v344 = vld [vmem:[%s294 + $0xa0] sm:%s287]
                %345 = vst [vmem:[%s295 + $0x60] sm:%s287] %v344
                %v346 = vld [vmem:[%s294 + $0xa4] sm:%s287]
                %347 = vst [vmem:[%s295 + $0x64] sm:%s287] %v346
                %v348 = vld [vmem:[%s294 + $0xa8] sm:%s287]
                %349 = vst [vmem:[%s295 + $0x68] sm:%s287] %v348
                %v350 = vld [vmem:[%s294 + $0xac] sm:%s287]
                %351 = vst [vmem:[%s295 + $0x6c] sm:%s287] %v350
                %v352 = vld [vmem:[%s294 + $0xb0] sm:%s287]
                %353 = vst [vmem:[%s295 + $0x70] sm:%s287] %v352
                %v354 = vld [vmem:[%s294 + $0xb4] sm:%s287]
                %355 = vst [vmem:[%s295 + $0x74] sm:%s287] %v354
                %v356 = vld [vmem:[%s294 + $0xb8] sm:%s287]
                %357 = vst [vmem:[%s295 + $0x78] sm:%s287] %v356
                %v358 = vld [vmem:[%s294 + $0xbc] sm:%s287]
                %359 = vst [vmem:[%s295 + $0x7c] sm:%s287] %v358
                %v360 = vld [vmem:[%s294 + $0x100] sm:%s287]
                %361 = vst [vmem:[%s295 + $0x80] sm:%s287] %v360
                %v362 = vld [vmem:[%s294 + $0x104] sm:%s287]
                %363 = vst [vmem:[%s295 + $0x84] sm:%s287] %v362
                %v364 = vld [vmem:[%s294 + $0x108] sm:%s287]
                %365 = vst [vmem:[%s295 + $0x88] sm:%s287] %v364
                %v366 = vld [vmem:[%s294 + $0x10c] sm:%s287]
                %367 = vst [vmem:[%s295 + $0x8c] sm:%s287] %v366
                %v368 = vld [vmem:[%s294 + $0x110] sm:%s287]
                %369 = vst [vmem:[%s295 + $0x90] sm:%s287] %v368
                %v370 = vld [vmem:[%s294 + $0x114] sm:%s287]
                %371 = vst [vmem:[%s295 + $0x94] sm:%s287] %v370
                %v372 = vld [vmem:[%s294 + $0x118] sm:%s287]
                %373 = vst [vmem:[%s295 + $0x98] sm:%s287] %v372
                %v374 = vld [vmem:[%s294 + $0x11c] sm:%s287]
                %375 = vst [vmem:[%s295 + $0x9c] sm:%s287] %v374
                %v376 = vld [vmem:[%s294 + $0x120] sm:%s287]
                %377 = vst [vmem:[%s295 + $0xa0] sm:%s287] %v376
                %v378 = vld [vmem:[%s294 + $0x124] sm:%s287]
                %379 = vst [vmem:[%s295 + $0xa4] sm:%s287] %v378
                %v380 = vld [vmem:[%s294 + $0x128] sm:%s287]
                %381 = vst [vmem:[%s295 + $0xa8] sm:%s287] %v380
                %v382 = vld [vmem:[%s294 + $0x12c] sm:%s287]
                %383 = vst [vmem:[%s295 + $0xac] sm:%s287] %v382
                %v384 = vld [vmem:[%s294 + $0x130] sm:%s287]
                %385 = vst [vmem:[%s295 + $0xb0] sm:%s287] %v384
                %v386 = vld [vmem:[%s294 + $0x134] sm:%s287]
                %387 = vst [vmem:[%s295 + $0xb4] sm:%s287] %v386
                %v388 = vld [vmem:[%s294 + $0x138] sm:%s287]
                %389 = vst [vmem:[%s295 + $0xb8] sm:%s287] %v388
                %v390 = vld [vmem:[%s294 + $0x13c] sm:%s287]
                %391 = vst [vmem:[%s295 + $0xbc] sm:%s287] %v390
                %v392 = vld [vmem:[%s294 + $0x180] sm:%s287]
                %393 = vst [vmem:[%s295 + $0xc0] sm:%s287] %v392
                %v394 = vld [vmem:[%s294 + $0x184] sm:%s287]
                %395 = vst [vmem:[%s295 + $0xc4] sm:%s287] %v394
                %v396 = vld [vmem:[%s294 + $0x188] sm:%s287]
                %397 = vst [vmem:[%s295 + $0xc8] sm:%s287] %v396
                %v398 = vld [vmem:[%s294 + $0x18c] sm:%s287]
                %399 = vst [vmem:[%s295 + $0xcc] sm:%s287] %v398
                %v400 = vld [vmem:[%s294 + $0x190] sm:%s287]
                %401 = vst [vmem:[%s295 + $0xd0] sm:%s287] %v400
                %v402 = vld [vmem:[%s294 + $0x194] sm:%s287]
                %403 = vst [vmem:[%s295 + $0xd4] sm:%s287] %v402
                %v404 = vld [vmem:[%s294 + $0x198] sm:%s287]
                %405 = vst [vmem:[%s295 + $0xd8] sm:%s287] %v404
                %v406 = vld [vmem:[%s294 + $0x19c] sm:%s287]
                %407 = vst [vmem:[%s295 + $0xdc] sm:%s287] %v406
                %v408 = vld [vmem:[%s294 + $0x1a0] sm:%s287]
                %409 = vst [vmem:[%s295 + $0xe0] sm:%s287] %v408
                %v410 = vld [vmem:[%s294 + $0x1a4] sm:%s287]
                %411 = vst [vmem:[%s295 + $0xe4] sm:%s287] %v410
                %v412 = vld [vmem:[%s294 + $0x1a8] sm:%s287]
                %413 = vst [vmem:[%s295 + $0xe8] sm:%s287] %v412
                %v414 = vld [vmem:[%s294 + $0x1ac] sm:%s287]
                %415 = vst [vmem:[%s295 + $0xec] sm:%s287] %v414
                %v416 = vld [vmem:[%s294 + $0x1b0] sm:%s287]
                %417 = vst [vmem:[%s295 + $0xf0] sm:%s287] %v416
                %v418 = vld [vmem:[%s294 + $0x1b4] sm:%s287]
                %419 = vst [vmem:[%s295 + $0xf4] sm:%s287] %v418
                %v420 = vld [vmem:[%s294 + $0x1b8] sm:%s287]
                %421 = vst [vmem:[%s295 + $0xf8] sm:%s287] %v420
                %v422 = vld [vmem:[%s294 + $0x1bc] sm:%s287]
                %423 = vst [vmem:[%s295 + $0xfc] sm:%s287] %v422
                %v424 = vld [vmem:[%s294 + $0x200] sm:%s287]
                %425 = vst [vmem:[%s295 + $0x100] sm:%s287] %v424
                %v426 = vld [vmem:[%s294 + $0x204] sm:%s287]
                %427 = vst [vmem:[%s295 + $0x104] sm:%s287] %v426
                %v428 = vld [vmem:[%s294 + $0x208] sm:%s287]
                %429 = vst [vmem:[%s295 + $0x108] sm:%s287] %v428
                %v430 = vld [vmem:[%s294 + $0x20c] sm:%s287]
                %431 = vst [vmem:[%s295 + $0x10c] sm:%s287] %v430
                %v432 = vld [vmem:[%s294 + $0x210] sm:%s287]
                %433 = vst [vmem:[%s295 + $0x110] sm:%s287] %v432
                %v434 = vld [vmem:[%s294 + $0x214] sm:%s287]
                %435 = vst [vmem:[%s295 + $0x114] sm:%s287] %v434
                %v436 = vld [vmem:[%s294 + $0x218] sm:%s287]
                %437 = vst [vmem:[%s295 + $0x118] sm:%s287] %v436
                %v438 = vld [vmem:[%s294 + $0x21c] sm:%s287]
                %439 = vst [vmem:[%s295 + $0x11c] sm:%s287] %v438
                %v440 = vld [vmem:[%s294 + $0x220] sm:%s287]
                %441 = vst [vmem:[%s295 + $0x120] sm:%s287] %v440
                %v442 = vld [vmem:[%s294 + $0x224] sm:%s287]
                %443 = vst [vmem:[%s295 + $0x124] sm:%s287] %v442
                %v444 = vld [vmem:[%s294 + $0x228] sm:%s287]
                %445 = vst [vmem:[%s295 + $0x128] sm:%s287] %v444
                %v446 = vld [vmem:[%s294 + $0x22c] sm:%s287]
                %447 = vst [vmem:[%s295 + $0x12c] sm:%s287] %v446
                %v448 = vld [vmem:[%s294 + $0x230] sm:%s287]
                %449 = vst [vmem:[%s295 + $0x130] sm:%s287] %v448
                %v450 = vld [vmem:[%s294 + $0x234] sm:%s287]
                %451 = vst [vmem:[%s295 + $0x134] sm:%s287] %v450
                %v452 = vld [vmem:[%s294 + $0x238] sm:%s287]
                %453 = vst [vmem:[%s295 + $0x138] sm:%s287] %v452
                %v454 = vld [vmem:[%s294 + $0x23c] sm:%s287]
                %455 = vst [vmem:[%s295 + $0x13c] sm:%s287] %v454
                %v456 = vld [vmem:[%s294 + $0x280] sm:%s287]
                %457 = vst [vmem:[%s295 + $0x140] sm:%s287] %v456
                %v458 = vld [vmem:[%s294 + $0x284] sm:%s287]
                %459 = vst [vmem:[%s295 + $0x144] sm:%s287] %v458
                %v460 = vld [vmem:[%s294 + $0x288] sm:%s287]
                %461 = vst [vmem:[%s295 + $0x148] sm:%s287] %v460
                %v462 = vld [vmem:[%s294 + $0x28c] sm:%s287]
                %463 = vst [vmem:[%s295 + $0x14c] sm:%s287] %v462
                %v464 = vld [vmem:[%s294 + $0x290] sm:%s287]
                %465 = vst [vmem:[%s295 + $0x150] sm:%s287] %v464
                %v466 = vld [vmem:[%s294 + $0x294] sm:%s287]
                %467 = vst [vmem:[%s295 + $0x154] sm:%s287] %v466
                %v468 = vld [vmem:[%s294 + $0x298] sm:%s287]
                %469 = vst [vmem:[%s295 + $0x158] sm:%s287] %v468
                %v470 = vld [vmem:[%s294 + $0x29c] sm:%s287]
                %471 = vst [vmem:[%s295 + $0x15c] sm:%s287] %v470
                %v472 = vld [vmem:[%s294 + $0x2a0] sm:%s287]
                %473 = vst [vmem:[%s295 + $0x160] sm:%s287] %v472
                %v474 = vld [vmem:[%s294 + $0x2a4] sm:%s287]
                %475 = vst [vmem:[%s295 + $0x164] sm:%s287] %v474
                %v476 = vld [vmem:[%s294 + $0x2a8] sm:%s287]
                %477 = vst [vmem:[%s295 + $0x168] sm:%s287] %v476
                %v478 = vld [vmem:[%s294 + $0x2ac] sm:%s287]
                %479 = vst [vmem:[%s295 + $0x16c] sm:%s287] %v478
                %v480 = vld [vmem:[%s294 + $0x2b0] sm:%s287]
                %481 = vst [vmem:[%s295 + $0x170] sm:%s287] %v480
                %v482 = vld [vmem:[%s294 + $0x2b4] sm:%s287]
                %483 = vst [vmem:[%s295 + $0x174] sm:%s287] %v482
                %v484 = vld [vmem:[%s294 + $0x2b8] sm:%s287]
                %485 = vst [vmem:[%s295 + $0x178] sm:%s287] %v484
                %v486 = vld [vmem:[%s294 + $0x2bc] sm:%s287]
                %487 = vst [vmem:[%s295 + $0x17c] sm:%s287] %v486
              $region53: #{forward.3} parent=47 // loop_footer
                %s293 = sadd.s32 1, %s289
              $region54: #{forward.3} parent=47 // loop_footer_branch
                %288 = sbr.rel target = $region50
              $region55: #{forward.3} parent=47 // loop_exit
                _
            $region48: #{forward.3} parent=39 // pred_fallthru
              _
          $region40: #{forward.3} parent=35 // pred_fallthru
            _
          %700 = vnop
        $region36: #{forward.3} parent=27 // pred_fallthru
          _
        // Predicated region
        $region74: #{forward.3} parent=27 // pred_check
          %p701 = pneg %p86
        $region75: #{forward.3} parent=27 // pred_check_branch
          %703 = sbr.rel (%p701) target = $region77
        $region76: #{forward.3} parent=27 // pred_region
          %s704 = smul.u32 16, %s14
          %p705 = scmp.lt.s32.totalorder %s704, 31
          %s706 = scalar_select %p705, %s704, 31
          %s707 = smul.addr %s706, 4
          %s708 = scalar_lea.vmem %s2, %s707
          %s709 = smul.u32 16, %s14
        $region77: #{forward.3} parent=27 // pred_fallthru
          _
        // Predicated region
        $region78: #{forward.3} parent=27 // pred_check
          %p710 = pneg %p112
        $region79: #{forward.3} parent=27 // pred_check_branch
          %712 = sbr.rel (%p710) target = $region81
        $region80: #{forward.3} parent=27 // pred_region
          %s713 = smul.u32 16, %s14
          %p714 = scmp.lt.s32.totalorder %s713, 31
          %s715 = scalar_select %p714, %s713, 31
          %s716 = smul.addr %s715, 4
          %s717 = scalar_lea.vmem %s3, %s716
          %s718 = smul.u32 16, %s14
        $region81: #{forward.3} parent=27 // pred_fallthru
          _
        // Predicated region
        $region82: #{forward.3} parent=27 // pred_check
          %p719 = pneg %p138
        $region83: #{forward.3} parent=27 // pred_check_branch
          %721 = sbr.rel (%p719) target = $region85
        $region84: #{forward.3} parent=27 // pred_region
          %s722 = smul.u32 16, %s14
          %p723 = scmp.lt.s32.totalorder %s722, 31
          %s724 = scalar_select %p723, %s722, 31
          %s725 = smul.addr %s724, 4
          %s726 = scalar_lea.vmem %s4, %s725
          %s727 = smul.u32 16, %s14
        $region85: #{forward.3} parent=27 // pred_fallthru
          _
      $region28: #{forward.3} parent=5 // pred_fallthru
        _
      %p728 = scmp.le.s32.totalorder 1, %s14
      %p729 = scmp.lt.s32.totalorder %s14, 3
      %p730 = pnand %p728, %p729
      %p731 = pneg %p730
      // Predicated region
      $region86: #{forward.3} parent=5 // pred_check
        _
      $region87: #{forward.3} parent=5 // pred_check_branch
        %733 = sbr.rel (%p730) target = $region89
      $region88: #{forward.3} parent=5 // pred_region
        %s734 = ssub.s32 %s14, 1
        %s735 = sand.u32 %s53, 1
        %s736 = sand.u32 %s53, 1
        %s737 = smul.addr %s736, 384
        %s738 = scalar_lea.vmem [#allocation2], %s737
        // Predicated region
        $region90: #{forward.3} parent=88 // pred_check
          %p739 = pneg %p66
        $region91: #{forward.3} parent=88 // pred_check_branch
          %741 = sbr.rel (%p739) target = $region93
        $region92: #{forward.3} parent=88 // pred_region
          _
        $region93: #{forward.3} parent=88 // pred_fallthru
          _
        %s742 = smul.u32 16, %s19
        %p743 = scmp.lt.s32.totalorder %s742, 31
        %s744 = scalar_select %p743, %s742, 31
        %s745 = smul.addr %s744, 4
        %s746 = scalar_lea.vmem %s0, %s745
        %p747 = pneg %p40
        %p748 = pneg %p37
        %s749 = sand.u32 %s53, 1
        %s750 = sand.u32 %s53, 1
        %s751 = smul.addr %s750, 384
        %s752 = scalar_lea.vmem [#allocation2], %s751
        %p753 = pneg %p66
        %p754 = pneg %p63
        %s755 = smul.u32 16, %s19
        %p756 = scmp.lt.s32.totalorder %s755, 31
        %s757 = scalar_select %p756, %s755, 31
        %s758 = smul.addr %s757, 4
        %s759 = scalar_lea.vmem %s2, %s758
        %p760 = pneg %p92
        %p761 = pneg %p89
        %s762 = smul.u32 16, %s19
        %p763 = scmp.lt.s32.totalorder %s762, 31
        %s764 = scalar_select %p763, %s762, 31
        %s765 = smul.addr %s764, 4
        %s766 = scalar_lea.vmem %s3, %s765
        %p767 = pneg %p118
        %p768 = pneg %p115
        %s769 = smul.u32 16, %s19
        %p770 = scmp.lt.s32.totalorder %s769, 31
        %s771 = scalar_select %p770, %s769, 31
        %s772 = smul.addr %s771, 4
        %s773 = scalar_lea.vmem %s4, %s772
        %p774 = pneg %p144
        %p775 = pneg %p141
        %p776 = pneg %p165
        %p777 = pneg %p162
        %p778 = pneg %p186
        %p779 = pneg %p183
        %p780 = pneg %p207
        %p781 = pneg %p204
        %p782 = pneg %p233
        %p783 = pneg %p230
        %s784 = smul.u32 16, %s19
        %p785 = scmp.lt.s32.totalorder %s784, 31
        %s786 = scalar_select %p785, %s784, 31
        %s787 = smul.addr %s786, 8
        %s788 = scalar_lea.vmem %s8, %s787
        %s789 = smul.u32 16, %s19
        %p790 = scmp.lt.s32.totalorder %s789, 31
        %s791 = scalar_select %p790, %s789, 31
        %s792 = smul.addr %s791, 4
        %s793 = scalar_lea.vmem %s0, %s792
        %s794 = smul.u32 16, %s19
        %s795 = smul.u32 16, %s19
        %s796 = smul.u32 16, %s19
        %p797 = scmp.lt.s32.totalorder %s796, 31
        %s798 = scalar_select %p797, %s796, 31
        %s799 = smul.addr %s798, 4
        %s800 = scalar_lea.vmem %s2, %s799
        %s801 = smul.u32 16, %s19
        %s802 = smul.u32 16, %s19
        %p803 = scmp.lt.s32.totalorder %s802, 31
        %s804 = scalar_select %p803, %s802, 31
        %s805 = smul.addr %s804, 4
        %s806 = scalar_lea.vmem %s3, %s805
        %s807 = smul.u32 16, %s19
        %s808 = smul.u32 16, %s19
        %p809 = scmp.lt.s32.totalorder %s808, 31
        %s810 = scalar_select %p809, %s808, 31
        %s811 = smul.addr %s810, 4
        %s812 = scalar_lea.vmem %s4, %s811
        %s813 = smul.u32 16, %s19
        %s814 = smul.u32 16, %s19
        %p815 = scmp.lt.s32.totalorder %s814, 31
        %s816 = scalar_select %p815, %s814, 31
        %s817 = smul.addr %s816, 8
        %s818 = scalar_lea.vmem %s8, %s817
        %s819 = smul.u32 16, %s19
        %v821 = vld [vmem:[%s793] sm:$0xf]
        %v822 = vld [vmem:[%s793 + $0x4] sm:$0xf]
        %v823 = vld [vmem:[%s793 + $0x8] sm:$0xf]
        %v824 = vld [vmem:[%s793 + $0xc] sm:$0xf]
        %v825 = vld [vmem:[%s793 + $0x10] sm:$0xf]
        %v826 = vld [vmem:[%s793 + $0x14] sm:$0xf]
        %v827 = vld [vmem:[%s793 + $0x18] sm:$0xf]
        %v828 = vld [vmem:[%s793 + $0x1c] sm:$0xf]
        %v829 = vld [vmem:[%s793 + $0x20] sm:$0xf]
        %v830 = vld [vmem:[%s793 + $0x24] sm:$0xf]
        %v831 = vld [vmem:[%s793 + $0x28] sm:$0xf]
        %v832 = vld [vmem:[%s793 + $0x2c] sm:$0xf]
        %v833 = vld [vmem:[%s793 + $0x30] sm:$0xf]
        %v834 = vld [vmem:[%s793 + $0x34] sm:$0xf]
        %v835 = vld [vmem:[%s793 + $0x38] sm:$0xf]
        %v836 = vld [vmem:[%s793 + $0x3c] sm:$0xf]
        %v837 = vld [vmem:[%s5] sm:$0x7]
        %v838 = vld [vmem:[%s738] sm:$0xf]
        %v839 = vld [vmem:[%s738 + $0x4] sm:$0xf]
        %v840 = vld [vmem:[%s738 + $0x8] sm:$0xf]
        %v841 = vld [vmem:[%s738 + $0xc] sm:$0xf]
        %v842 = vld [vmem:[%s738 + $0x10] sm:$0xf]
        %v843 = vld [vmem:[%s738 + $0x14] sm:$0xf]
        %v844 = vld [vmem:[%s738 + $0x18] sm:$0xf]
        %v845 = vld [vmem:[%s738 + $0x1c] sm:$0xf]
        %v846 = vld [vmem:[%s738 + $0x20] sm:$0xf]
        %v847 = vld [vmem:[%s738 + $0x24] sm:$0xf]
        %v848 = vld [vmem:[%s738 + $0x28] sm:$0xf]
        %v849 = vld [vmem:[%s738 + $0x2c] sm:$0xf]
        %v850 = vld [vmem:[%s738 + $0x30] sm:$0xf]
        %v851 = vld [vmem:[%s738 + $0x34] sm:$0xf]
        %v852 = vld [vmem:[%s738 + $0x38] sm:$0xf]
        %v853 = vld [vmem:[%s738 + $0x3c] sm:$0xf]
        %v854 = vld [vmem:[%s6] sm:$0xf]
        %v855 = vld [vmem:[%s6 + $0x4] sm:$0xf]
        %v856 = vld [vmem:[%s6 + $0x8] sm:$0xf]
        %v857 = vld [vmem:[%s6 + $0xc] sm:$0xf]
        %v858 = vld [vmem:[%s6 + $0x10] sm:$0xf]
        %v859 = vld [vmem:[%s6 + $0x14] sm:$0xf]
        %v860 = vld [vmem:[%s6 + $0x18] sm:$0xf]
        %v861 = vld [vmem:[%s6 + $0x1c] sm:$0xf]
        %v862 = vld [vmem:[%s6 + $0x20] sm:$0x3]
        %v879 = vunpack.c.l.b16 %v838
        %v880 = vunpack.c.l.b16 %v839
        %v881 = vunpack.c.l.b16 %v840
        %v882 = vunpack.c.l.b16 %v841
        %v883 = vunpack.c.l.b16 %v842
        %v884 = vunpack.c.l.b16 %v843
        %v885 = vunpack.c.l.b16 %v844
        %v886 = vunpack.c.l.b16 %v845
        %v887 = vunpack.c.l.b16 %v846
        %v888 = vunpack.c.l.b16 %v847
        %v889 = vunpack.c.l.b16 %v848
        %v890 = vunpack.c.l.b16 %v849
        %v891 = vunpack.c.l.b16 %v850
        %v892 = vunpack.c.l.b16 %v851
        %v893 = vunpack.c.l.b16 %v852
        %v894 = vunpack.c.l.b16 %v853
        %v895 = vpack.c.b16 %v880, %v879
        %v896 = vpack.c.b16 %v882, %v881
        %v897 = vpack.c.b16 %v884, %v883
        %v898 = vpack.c.b16 %v886, %v885
        %v899 = vpack.c.b16 %v888, %v887
        %v900 = vpack.c.b16 %v890, %v889
        %v901 = vpack.c.b16 %v892, %v891
        %v902 = vpack.c.b16 %v894, %v893
        %v912 = vunpack.c.l.b16 %v854
        %v913 = vunpack.c.l.b16 %v855
        %v914 = vunpack.c.l.b16 %v856
        %v915 = vunpack.c.l.b16 %v857
        %v916 = vunpack.c.l.b16 %v858
        %v917 = vunpack.c.l.b16 %v859
        %v918 = vunpack.c.l.b16 %v860
        %v919 = vunpack.c.l.b16 %v861
        %v920 = vunpack.c.l.b16 %v862
        %v921 = vpack.c.b16 %v913, %v912
        %v922 = vpack.c.b16 %v915, %v914
        %v923 = vpack.c.b16 %v917, %v916
        %v924 = vpack.c.b16 %v919, %v918
        %v925 = vpack.c.b16 %v920, %v920
        %vm930 = vcmask 547840
        %v932 = vsel %vm930, %v895, 0
        %v935 = vsel %vm930, %v896, 0
        %v938 = vsel %vm930, %v897, 0
        %v941 = vsel %vm930, %v898, 0
        %v944 = vsel %vm930, %v899, 0
        %v947 = vsel %vm930, %v900, 0
        %v950 = vsel %vm930, %v901, 0
        %v953 = vsel %vm930, %v902, 0
        %vm955 = vcmask 1040384
        %vm956 = vcmask 1041408
        %v957 = vsel %vm955, 4294967295, 65535
        %v958 = vsel %vm956, %v957, 0
        %v960 = vand.u32 %v925, %v958
        %962 = vmatpush.bf16.msra.mxu0 0
        %963 = vmatpush.bf16.msra.mxu0 0
        %964 = vmatpush.bf16.msra.mxu0 0
        %965 = vmatpush.bf16.msra.mxu0 %v960
        %966 = vmatpush.bf16.msra.mxu0 %v924
        %967 = vmatpush.bf16.msra.mxu0 %v923
        %968 = vmatpush.bf16.msra.mxu0 %v922
        %969 = vmatpush.bf16.msra.mxu0 %v921
        %970 = vmatmul.bf16.gmra.mxu0 %v932
        %v971 = vpop.f32.mrf.mxu0
        %v972 = vadd.f32 0.0, %v971
        %v973 = vpop.f32.mrf.mxu0
        %v974 = vadd.f32 0.0, %v973
        %975 = vmatmul.bf16.gmra.mxu0 %v935
        %v976 = vpop.f32.mrf.mxu0
        %v977 = vadd.f32 0.0, %v976
        %v978 = vpop.f32.mrf.mxu0
        %v979 = vadd.f32 0.0, %v978
        %980 = vmatmul.bf16.gmra.mxu0 %v938
        %v981 = vpop.f32.mrf.mxu0
        %v982 = vadd.f32 0.0, %v981
        %v983 = vpop.f32.mrf.mxu0
        %v984 = vadd.f32 0.0, %v983
        %985 = vmatmul.bf16.gmra.mxu0 %v941
        %v986 = vpop.f32.mrf.mxu0
        %v987 = vadd.f32 0.0, %v986
        %v988 = vpop.f32.mrf.mxu0
        %v989 = vadd.f32 0.0, %v988
        %990 = vmatmul.bf16.gmra.mxu0 %v944
        %v991 = vpop.f32.mrf.mxu0
        %v992 = vadd.f32 0.0, %v991
        %v993 = vpop.f32.mrf.mxu0
        %v994 = vadd.f32 0.0, %v993
        %995 = vmatmul.bf16.gmra.mxu0 %v947
        %v996 = vpop.f32.mrf.mxu0
        %v997 = vadd.f32 0.0, %v996
        %v998 = vpop.f32.mrf.mxu0
        %v999 = vadd.f32 0.0, %v998
        %1000 = vmatmul.bf16.gmra.mxu0 %v950
        %v1001 = vpop.f32.mrf.mxu0
        %v1002 = vadd.f32 0.0, %v1001
        %v1003 = vpop.f32.mrf.mxu0
        %v1004 = vadd.f32 0.0, %v1003
        %1005 = vmatmul.bf16.gmra.mxu0 %v953
        %v1006 = vpop.f32.mrf.mxu0
        %v1007 = vadd.f32 0.0, %v1006
        %v1008 = vpop.f32.mrf.mxu0
        %v1009 = vadd.f32 0.0, %v1008
        %1010 = vdwg.mxu0
        %v1027 = vunpack.c.l.b16 %v821
        %v1028 = vunpack.c.l.b16 %v822
        %v1029 = vunpack.c.l.b16 %v823
        %v1030 = vunpack.c.l.b16 %v824
        %v1031 = vunpack.c.l.b16 %v825
        %v1032 = vunpack.c.l.b16 %v826
        %v1033 = vunpack.c.l.b16 %v827
        %v1034 = vunpack.c.l.b16 %v828
        %v1035 = vunpack.c.l.b16 %v829
        %v1036 = vunpack.c.l.b16 %v830
        %v1037 = vunpack.c.l.b16 %v831
        %v1038 = vunpack.c.l.b16 %v832
        %v1039 = vunpack.c.l.b16 %v833
        %v1040 = vunpack.c.l.b16 %v834
        %v1041 = vunpack.c.l.b16 %v835
        %v1042 = vunpack.c.l.b16 %v836
        %v1043 = vpack.c.b16 %v1028, %v1027
        %v1044 = vpack.c.b16 %v1030, %v1029
        %v1045 = vpack.c.b16 %v1032, %v1031
        %v1046 = vpack.c.b16 %v1034, %v1033
        %v1047 = vpack.c.b16 %v1036, %v1035
        %v1048 = vpack.c.b16 %v1038, %v1037
        %v1049 = vpack.c.b16 %v1040, %v1039
        %v1050 = vpack.c.b16 %v1042, %v1041
        %vm1051 = vcmask 48128
        %v1053 = vsel %vm1051, %v1043, 0
        %v1056 = vsel %vm1051, %v1044, 0
        %v1059 = vsel %vm1051, %v1045, 0
        %v1062 = vsel %vm1051, %v1046, 0
        %v1065 = vsel %vm1051, %v1047, 0
        %v1068 = vsel %vm1051, %v1048, 0
        %v1071 = vsel %vm1051, %v1049, 0
        %v1074 = vsel %vm1051, %v1050, 0
        %vm1076 = vcmask 1042432
        %v1078 = vsel %vm1076, %v837, 0
        %1080 = vmatpush.bf16.msra.mxu0 0
        %1081 = vmatpush.bf16.msra.mxu0 0
        %1082 = vmatpush.bf16.msra.mxu0 0
        %1083 = vmatpush.bf16.msra.mxu0 0
        %1084 = vmatpush.bf16.msra.mxu0 0
        %1085 = vmatpush.bf16.msra.mxu0 0
        %1086 = vmatpush.bf16.msra.mxu0 0
        %1087 = vmatpush.bf16.msra.mxu0 %v1078
        %1088 = vmatmul.bf16.gmra.mxu0 %v1053
        %v1089 = vpop.f32.mrf.mxu0
        %v1090 = vadd.f32 %v972, %v1089
        %v1091 = vpop.f32.mrf.mxu0
        %v1092 = vadd.f32 %v974, %v1091
        %1093 = vmatmul.bf16.gmra.mxu0 %v1056
        %v1094 = vpop.f32.mrf.mxu0
        %v1095 = vadd.f32 %v977, %v1094
        %v1096 = vpop.f32.mrf.mxu0
        %v1097 = vadd.f32 %v979, %v1096
        %1098 = vmatmul.bf16.gmra.mxu0 %v1059
        %v1099 = vpop.f32.mrf.mxu0
        %v1100 = vadd.f32 %v982, %v1099
        %v1101 = vpop.f32.mrf.mxu0
        %v1102 = vadd.f32 %v984, %v1101
        %1103 = vmatmul.bf16.gmra.mxu0 %v1062
        %v1104 = vpop.f32.mrf.mxu0
        %v1105 = vadd.f32 %v987, %v1104
        %v1106 = vpop.f32.mrf.mxu0
        %v1107 = vadd.f32 %v989, %v1106
        %1108 = vmatmul.bf16.gmra.mxu0 %v1065
        %v1109 = vpop.f32.mrf.mxu0
        %v1110 = vadd.f32 %v992, %v1109
        %v1111 = vpop.f32.mrf.mxu0
        %v1112 = vadd.f32 %v994, %v1111
        %1113 = vmatmul.bf16.gmra.mxu0 %v1068
        %v1114 = vpop.f32.mrf.mxu0
        %v1115 = vadd.f32 %v997, %v1114
        %v1116 = vpop.f32.mrf.mxu0
        %v1117 = vadd.f32 %v999, %v1116
        %1118 = vmatmul.bf16.gmra.mxu0 %v1071
        %v1119 = vpop.f32.mrf.mxu0
        %v1120 = vadd.f32 %v1002, %v1119
        %v1121 = vpop.f32.mrf.mxu0
        %v1122 = vadd.f32 %v1004, %v1121
        %1123 = vmatmul.bf16.gmra.mxu0 %v1074
        %v1124 = vpop.f32.mrf.mxu0
        %v1125 = vadd.f32 %v1007, %v1124
        %v1126 = vpop.f32.mrf.mxu0
        %v1127 = vadd.f32 %v1009, %v1126
        %1128 = vdwg.mxu0
        %s1129 = scalar_lea.vmem %s738, 64 [#allocation2]
        %v1130 = vld [vmem:[%s1129] sm:$0xf]
        %v1131 = vld [vmem:[%s1129 + $0x4] sm:$0xf]
        %v1132 = vld [vmem:[%s1129 + $0x8] sm:$0xf]
        %v1133 = vld [vmem:[%s1129 + $0xc] sm:$0xf]
        %v1134 = vld [vmem:[%s1129 + $0x10] sm:$0xf]
        %v1135 = vld [vmem:[%s1129 + $0x14] sm:$0xf]
        %v1136 = vld [vmem:[%s1129 + $0x18] sm:$0xf]
        %v1137 = vld [vmem:[%s1129 + $0x1c] sm:$0xf]
        %v1138 = vld [vmem:[%s1129 + $0x20] sm:$0xf]
        %v1139 = vld [vmem:[%s1129 + $0x24] sm:$0xf]
        %v1140 = vld [vmem:[%s1129 + $0x28] sm:$0xf]
        %v1141 = vld [vmem:[%s1129 + $0x2c] sm:$0xf]
        %v1142 = vld [vmem:[%s1129 + $0x30] sm:$0xf]
        %v1143 = vld [vmem:[%s1129 + $0x34] sm:$0xf]
        %v1144 = vld [vmem:[%s1129 + $0x38] sm:$0xf]
        %v1145 = vld [vmem:[%s1129 + $0x3c] sm:$0xf]
        %s1146 = scalar_lea.vmem %s6, 36
        %v1147 = vld [vmem:[%s1146] sm:$0xf]
        %v1148 = vld [vmem:[%s1146 + $0x4] sm:$0xf]
        %v1149 = vld [vmem:[%s1146 + $0x8] sm:$0xf]
        %v1150 = vld [vmem:[%s1146 + $0xc] sm:$0xf]
        %v1151 = vld [vmem:[%s1146 + $0x10] sm:$0xf]
        %v1152 = vld [vmem:[%s1146 + $0x14] sm:$0xf]
        %v1153 = vld [vmem:[%s1146 + $0x18] sm:$0xf]
        %v1154 = vld [vmem:[%s1146 + $0x1c] sm:$0xf]
        %v1155 = vld [vmem:[%s1146 + $0x20] sm:$0x3]
        %v1172 = vunpack.c.l.b16 %v1130
        %v1173 = vunpack.c.l.b16 %v1131
        %v1174 = vunpack.c.l.b16 %v1132
        %v1175 = vunpack.c.l.b16 %v1133
        %v1176 = vunpack.c.l.b16 %v1134
        %v1177 = vunpack.c.l.b16 %v1135
        %v1178 = vunpack.c.l.b16 %v1136
        %v1179 = vunpack.c.l.b16 %v1137
        %v1180 = vunpack.c.l.b16 %v1138
        %v1181 = vunpack.c.l.b16 %v1139
        %v1182 = vunpack.c.l.b16 %v1140
        %v1183 = vunpack.c.l.b16 %v1141
        %v1184 = vunpack.c.l.b16 %v1142
        %v1185 = vunpack.c.l.b16 %v1143
        %v1186 = vunpack.c.l.b16 %v1144
        %v1187 = vunpack.c.l.b16 %v1145
        %v1188 = vpack.c.b16 %v1173, %v1172
        %v1189 = vpack.c.b16 %v1175, %v1174
        %v1190 = vpack.c.b16 %v1177, %v1176
        %v1191 = vpack.c.b16 %v1179, %v1178
        %v1192 = vpack.c.b16 %v1181, %v1180
        %v1193 = vpack.c.b16 %v1183, %v1182
        %v1194 = vpack.c.b16 %v1185, %v1184
        %v1195 = vpack.c.b16 %v1187, %v1186
        %v1205 = vunpack.c.l.b16 %v1147
        %v1206 = vunpack.c.l.b16 %v1148
        %v1207 = vunpack.c.l.b16 %v1149
        %v1208 = vunpack.c.l.b16 %v1150
        %v1209 = vunpack.c.l.b16 %v1151
        %v1210 = vunpack.c.l.b16 %v1152
        %v1211 = vunpack.c.l.b16 %v1153
        %v1212 = vunpack.c.l.b16 %v1154
        %v1213 = vunpack.c.l.b16 %v1155
        %v1214 = vpack.c.b16 %v1206, %v1205
        %v1215 = vpack.c.b16 %v1208, %v1207
        %v1216 = vpack.c.b16 %v1210, %v1209
        %v1217 = vpack.c.b16 %v1212, %v1211
        %v1218 = vpack.c.b16 %v1213, %v1213
        %v1224 = vsel %vm930, %v1188, 0
        %v1227 = vsel %vm930, %v1189, 0
        %v1230 = vsel %vm930, %v1190, 0
        %v1233 = vsel %vm930, %v1191, 0
        %v1236 = vsel %vm930, %v1192, 0
        %v1239 = vsel %vm930, %v1193, 0
        %v1242 = vsel %vm930, %v1194, 0
        %v1245 = vsel %vm930, %v1195, 0
        %v1248 = vand.u32 %v1218, %v958
        %1250 = vmatpush.bf16.msra.mxu0 0
        %1251 = vmatpush.bf16.msra.mxu0 0
        %1252 = vmatpush.bf16.msra.mxu0 0
        %1253 = vmatpush.bf16.msra.mxu0 %v1248
        %1254 = vmatpush.bf16.msra.mxu0 %v1217
        %1255 = vmatpush.bf16.msra.mxu0 %v1216
        %1256 = vmatpush.bf16.msra.mxu0 %v1215
        %1257 = vmatpush.bf16.msra.mxu0 %v1214
        %1258 = vmatmul.bf16.gmra.mxu0 %v1224
        %v1259 = vpop.f32.mrf.mxu0
        %v1260 = vadd.f32 0.0, %v1259
        %v1261 = vpop.f32.mrf.mxu0
        %v1262 = vadd.f32 0.0, %v1261
        %1263 = vmatmul.bf16.gmra.mxu0 %v1227
        %v1264 = vpop.f32.mrf.mxu0
        %v1265 = vadd.f32 0.0, %v1264
        %v1266 = vpop.f32.mrf.mxu0
        %v1267 = vadd.f32 0.0, %v1266
        %1268 = vmatmul.bf16.gmra.mxu0 %v1230
        %v1269 = vpop.f32.mrf.mxu0
        %v1270 = vadd.f32 0.0, %v1269
        %v1271 = vpop.f32.mrf.mxu0
        %v1272 = vadd.f32 0.0, %v1271
        %1273 = vmatmul.bf16.gmra.mxu0 %v1233
        %v1274 = vpop.f32.mrf.mxu0
        %v1275 = vadd.f32 0.0, %v1274
        %v1276 = vpop.f32.mrf.mxu0
        %v1277 = vadd.f32 0.0, %v1276
        %1278 = vmatmul.bf16.gmra.mxu0 %v1236
        %v1279 = vpop.f32.mrf.mxu0
        %v1280 = vadd.f32 0.0, %v1279
        %v1281 = vpop.f32.mrf.mxu0
        %v1282 = vadd.f32 0.0, %v1281
        %1283 = vmatmul.bf16.gmra.mxu0 %v1239
        %v1284 = vpop.f32.mrf.mxu0
        %v1285 = vadd.f32 0.0, %v1284
        %v1286 = vpop.f32.mrf.mxu0
        %v1287 = vadd.f32 0.0, %v1286
        %1288 = vmatmul.bf16.gmra.mxu0 %v1242
        %v1289 = vpop.f32.mrf.mxu0
        %v1290 = vadd.f32 0.0, %v1289
        %v1291 = vpop.f32.mrf.mxu0
        %v1292 = vadd.f32 0.0, %v1291
        %1293 = vmatmul.bf16.gmra.mxu0 %v1245
        %v1294 = vpop.f32.mrf.mxu0
        %v1295 = vadd.f32 0.0, %v1294
        %v1296 = vpop.f32.mrf.mxu0
        %v1297 = vadd.f32 0.0, %v1296
        %1298 = vdwg.mxu0
        %v1299 = vadd.f32 %v1090, %v1260
        %v1300 = vadd.f32 %v1092, %v1262
        %v1301 = vadd.f32 %v1095, %v1265
        %v1302 = vadd.f32 %v1097, %v1267
        %v1303 = vadd.f32 %v1100, %v1270
        %v1304 = vadd.f32 %v1102, %v1272
        %v1305 = vadd.f32 %v1105, %v1275
        %v1306 = vadd.f32 %v1107, %v1277
        %v1307 = vadd.f32 %v1110, %v1280
        %v1308 = vadd.f32 %v1112, %v1282
        %v1309 = vadd.f32 %v1115, %v1285
        %v1310 = vadd.f32 %v1117, %v1287
        %v1311 = vadd.f32 %v1120, %v1290
        %v1312 = vadd.f32 %v1122, %v1292
        %v1313 = vadd.f32 %v1125, %v1295
        %v1314 = vadd.f32 %v1127, %v1297
        %s1315 = scalar_lea.vmem %s738, 128 [#allocation2]
        %v1316 = vld [vmem:[%s1315] sm:$0xf]
        %v1317 = vld [vmem:[%s1315 + $0x4] sm:$0xf]
        %v1318 = vld [vmem:[%s1315 + $0x8] sm:$0xf]
        %v1319 = vld [vmem:[%s1315 + $0xc] sm:$0xf]
        %v1320 = vld [vmem:[%s1315 + $0x10] sm:$0xf]
        %v1321 = vld [vmem:[%s1315 + $0x14] sm:$0xf]
        %v1322 = vld [vmem:[%s1315 + $0x18] sm:$0xf]
        %v1323 = vld [vmem:[%s1315 + $0x1c] sm:$0xf]
        %v1324 = vld [vmem:[%s1315 + $0x20] sm:$0xf]
        %v1325 = vld [vmem:[%s1315 + $0x24] sm:$0xf]
        %v1326 = vld [vmem:[%s1315 + $0x28] sm:$0xf]
        %v1327 = vld [vmem:[%s1315 + $0x2c] sm:$0xf]
        %v1328 = vld [vmem:[%s1315 + $0x30] sm:$0xf]
        %v1329 = vld [vmem:[%s1315 + $0x34] sm:$0xf]
        %v1330 = vld [vmem:[%s1315 + $0x38] sm:$0xf]
        %v1331 = vld [vmem:[%s1315 + $0x3c] sm:$0xf]
        %s1332 = scalar_lea.vmem %s6, 72
        %v1333 = vld [vmem:[%s1332] sm:$0xf]
        %v1334 = vld [vmem:[%s1332 + $0x4] sm:$0xf]
        %v1335 = vld [vmem:[%s1332 + $0x8] sm:$0xf]
        %v1336 = vld [vmem:[%s1332 + $0xc] sm:$0xf]
        %v1337 = vld [vmem:[%s1332 + $0x10] sm:$0xf]
        %v1338 = vld [vmem:[%s1332 + $0x14] sm:$0xf]
        %v1339 = vld [vmem:[%s1332 + $0x18] sm:$0xf]
        %v1340 = vld [vmem:[%s1332 + $0x1c] sm:$0xf]
        %v1341 = vld [vmem:[%s1332 + $0x20] sm:$0x3]
        %v1358 = vunpack.c.l.b16 %v1316
        %v1359 = vunpack.c.l.b16 %v1317
        %v1360 = vunpack.c.l.b16 %v1318
        %v1361 = vunpack.c.l.b16 %v1319
        %v1362 = vunpack.c.l.b16 %v1320
        %v1363 = vunpack.c.l.b16 %v1321
        %v1364 = vunpack.c.l.b16 %v1322
        %v1365 = vunpack.c.l.b16 %v1323
        %v1366 = vunpack.c.l.b16 %v1324
        %v1367 = vunpack.c.l.b16 %v1325
        %v1368 = vunpack.c.l.b16 %v1326
        %v1369 = vunpack.c.l.b16 %v1327
        %v1370 = vunpack.c.l.b16 %v1328
        %v1371 = vunpack.c.l.b16 %v1329
        %v1372 = vunpack.c.l.b16 %v1330
        %v1373 = vunpack.c.l.b16 %v1331
        %v1374 = vpack.c.b16 %v1359, %v1358
        %v1375 = vpack.c.b16 %v1361, %v1360
        %v1376 = vpack.c.b16 %v1363, %v1362
        %v1377 = vpack.c.b16 %v1365, %v1364
        %v1378 = vpack.c.b16 %v1367, %v1366
        %v1379 = vpack.c.b16 %v1369, %v1368
        %v1380 = vpack.c.b16 %v1371, %v1370
        %v1381 = vpack.c.b16 %v1373, %v1372
        %v1391 = vunpack.c.l.b16 %v1333
        %v1392 = vunpack.c.l.b16 %v1334
        %v1393 = vunpack.c.l.b16 %v1335
        %v1394 = vunpack.c.l.b16 %v1336
        %v1395 = vunpack.c.l.b16 %v1337
        %v1396 = vunpack.c.l.b16 %v1338
        %v1397 = vunpack.c.l.b16 %v1339
        %v1398 = vunpack.c.l.b16 %v1340
        %v1399 = vunpack.c.l.b16 %v1341
        %v1400 = vpack.c.b16 %v1392, %v1391
        %v1401 = vpack.c.b16 %v1394, %v1393
        %v1402 = vpack.c.b16 %v1396, %v1395
        %v1403 = vpack.c.b16 %v1398, %v1397
        %v1404 = vpack.c.b16 %v1399, %v1399
        %v1410 = vsel %vm930, %v1374, 0
        %v1413 = vsel %vm930, %v1375, 0
        %v1416 = vsel %vm930, %v1376, 0
        %v1419 = vsel %vm930, %v1377, 0
        %v1422 = vsel %vm930, %v1378, 0
        %v1425 = vsel %vm930, %v1379, 0
        %v1428 = vsel %vm930, %v1380, 0
        %v1431 = vsel %vm930, %v1381, 0
        %v1434 = vand.u32 %v1404, %v958
        %1436 = vmatpush.bf16.msra.mxu0 0
        %1437 = vmatpush.bf16.msra.mxu0 0
        %1438 = vmatpush.bf16.msra.mxu0 0
        %1439 = vmatpush.bf16.msra.mxu0 %v1434
        %1440 = vmatpush.bf16.msra.mxu0 %v1403
        %1441 = vmatpush.bf16.msra.mxu0 %v1402
        %1442 = vmatpush.bf16.msra.mxu0 %v1401
        %1443 = vmatpush.bf16.msra.mxu0 %v1400
        %1444 = vmatmul.bf16.gmra.mxu0 %v1410
        %v1445 = vpop.f32.mrf.mxu0
        %v1446 = vadd.f32 0.0, %v1445
        %v1447 = vpop.f32.mrf.mxu0
        %v1448 = vadd.f32 0.0, %v1447
        %1449 = vmatmul.bf16.gmra.mxu0 %v1413
        %v1450 = vpop.f32.mrf.mxu0
        %v1451 = vadd.f32 0.0, %v1450
        %v1452 = vpop.f32.mrf.mxu0
        %v1453 = vadd.f32 0.0, %v1452
        %1454 = vmatmul.bf16.gmra.mxu0 %v1416
        %v1455 = vpop.f32.mrf.mxu0
        %v1456 = vadd.f32 0.0, %v1455
        %v1457 = vpop.f32.mrf.mxu0
        %v1458 = vadd.f32 0.0, %v1457
        %1459 = vmatmul.bf16.gmra.mxu0 %v1419
        %v1460 = vpop.f32.mrf.mxu0
        %v1461 = vadd.f32 0.0, %v1460
        %v1462 = vpop.f32.mrf.mxu0
        %v1463 = vadd.f32 0.0, %v1462
        %1464 = vmatmul.bf16.gmra.mxu0 %v1422
        %v1465 = vpop.f32.mrf.mxu0
        %v1466 = vadd.f32 0.0, %v1465
        %v1467 = vpop.f32.mrf.mxu0
        %v1468 = vadd.f32 0.0, %v1467
        %1469 = vmatmul.bf16.gmra.mxu0 %v1425
        %v1470 = vpop.f32.mrf.mxu0
        %v1471 = vadd.f32 0.0, %v1470
        %v1472 = vpop.f32.mrf.mxu0
        %v1473 = vadd.f32 0.0, %v1472
        %1474 = vmatmul.bf16.gmra.mxu0 %v1428
        %v1475 = vpop.f32.mrf.mxu0
        %v1476 = vadd.f32 0.0, %v1475
        %v1477 = vpop.f32.mrf.mxu0
        %v1478 = vadd.f32 0.0, %v1477
        %1479 = vmatmul.bf16.gmra.mxu0 %v1431
        %v1480 = vpop.f32.mrf.mxu0
        %v1481 = vadd.f32 0.0, %v1480
        %v1482 = vpop.f32.mrf.mxu0
        %v1483 = vadd.f32 0.0, %v1482
        %1484 = vdwg.mxu0
        %v1485 = vadd.f32 %v1299, %v1446
        %v1486 = vadd.f32 %v1300, %v1448
        %v1487 = vadd.f32 %v1301, %v1451
        %v1488 = vadd.f32 %v1302, %v1453
        %v1489 = vadd.f32 %v1303, %v1456
        %v1490 = vadd.f32 %v1304, %v1458
        %v1491 = vadd.f32 %v1305, %v1461
        %v1492 = vadd.f32 %v1306, %v1463
        %v1493 = vadd.f32 %v1307, %v1466
        %v1494 = vadd.f32 %v1308, %v1468
        %v1495 = vadd.f32 %v1309, %v1471
        %v1496 = vadd.f32 %v1310, %v1473
        %v1497 = vadd.f32 %v1311, %v1476
        %v1498 = vadd.f32 %v1312, %v1478
        %v1499 = vadd.f32 %v1313, %v1481
        %v1500 = vadd.f32 %v1314, %v1483
        %s1501 = scalar_lea.vmem %s738, 192 [#allocation2]
        %v1502 = vld [vmem:[%s1501] sm:$0xf]
        %v1503 = vld [vmem:[%s1501 + $0x4] sm:$0xf]
        %v1504 = vld [vmem:[%s1501 + $0x8] sm:$0xf]
        %v1505 = vld [vmem:[%s1501 + $0xc] sm:$0xf]
        %v1506 = vld [vmem:[%s1501 + $0x10] sm:$0xf]
        %v1507 = vld [vmem:[%s1501 + $0x14] sm:$0xf]
        %v1508 = vld [vmem:[%s1501 + $0x18] sm:$0xf]
        %v1509 = vld [vmem:[%s1501 + $0x1c] sm:$0xf]
        %v1510 = vld [vmem:[%s1501 + $0x20] sm:$0xf]
        %v1511 = vld [vmem:[%s1501 + $0x24] sm:$0xf]
        %v1512 = vld [vmem:[%s1501 + $0x28] sm:$0xf]
        %v1513 = vld [vmem:[%s1501 + $0x2c] sm:$0xf]
        %v1514 = vld [vmem:[%s1501 + $0x30] sm:$0xf]
        %v1515 = vld [vmem:[%s1501 + $0x34] sm:$0xf]
        %v1516 = vld [vmem:[%s1501 + $0x38] sm:$0xf]
        %v1517 = vld [vmem:[%s1501 + $0x3c] sm:$0xf]
        %s1518 = scalar_lea.vmem %s6, 108
        %v1519 = vld [vmem:[%s1518] sm:$0xf]
        %v1520 = vld [vmem:[%s1518 + $0x4] sm:$0xf]
        %v1521 = vld [vmem:[%s1518 + $0x8] sm:$0xf]
        %v1522 = vld [vmem:[%s1518 + $0xc] sm:$0xf]
        %v1523 = vld [vmem:[%s1518 + $0x10] sm:$0xf]
        %v1524 = vld [vmem:[%s1518 + $0x14] sm:$0xf]
        %v1525 = vld [vmem:[%s1518 + $0x18] sm:$0xf]
        %v1526 = vld [vmem:[%s1518 + $0x1c] sm:$0xf]
        %v1527 = vld [vmem:[%s1518 + $0x20] sm:$0x3]
        %v1544 = vunpack.c.l.b16 %v1502
        %v1545 = vunpack.c.l.b16 %v1503
        %v1546 = vunpack.c.l.b16 %v1504
        %v1547 = vunpack.c.l.b16 %v1505
        %v1548 = vunpack.c.l.b16 %v1506
        %v1549 = vunpack.c.l.b16 %v1507
        %v1550 = vunpack.c.l.b16 %v1508
        %v1551 = vunpack.c.l.b16 %v1509
        %v1552 = vunpack.c.l.b16 %v1510
        %v1553 = vunpack.c.l.b16 %v1511
        %v1554 = vunpack.c.l.b16 %v1512
        %v1555 = vunpack.c.l.b16 %v1513
        %v1556 = vunpack.c.l.b16 %v1514
        %v1557 = vunpack.c.l.b16 %v1515
        %v1558 = vunpack.c.l.b16 %v1516
        %v1559 = vunpack.c.l.b16 %v1517
        %v1560 = vpack.c.b16 %v1545, %v1544
        %v1561 = vpack.c.b16 %v1547, %v1546
        %v1562 = vpack.c.b16 %v1549, %v1548
        %v1563 = vpack.c.b16 %v1551, %v1550
        %v1564 = vpack.c.b16 %v1553, %v1552
        %v1565 = vpack.c.b16 %v1555, %v1554
        %v1566 = vpack.c.b16 %v1557, %v1556
        %v1567 = vpack.c.b16 %v1559, %v1558
        %v1577 = vunpack.c.l.b16 %v1519
        %v1578 = vunpack.c.l.b16 %v1520
        %v1579 = vunpack.c.l.b16 %v1521
        %v1580 = vunpack.c.l.b16 %v1522
        %v1581 = vunpack.c.l.b16 %v1523
        %v1582 = vunpack.c.l.b16 %v1524
        %v1583 = vunpack.c.l.b16 %v1525
        %v1584 = vunpack.c.l.b16 %v1526
        %v1585 = vunpack.c.l.b16 %v1527
        %v1586 = vpack.c.b16 %v1578, %v1577
        %v1587 = vpack.c.b16 %v1580, %v1579
        %v1588 = vpack.c.b16 %v1582, %v1581
        %v1589 = vpack.c.b16 %v1584, %v1583
        %v1590 = vpack.c.b16 %v1585, %v1585
        %v1596 = vsel %vm930, %v1560, 0
        %v1599 = vsel %vm930, %v1561, 0
        %v1602 = vsel %vm930, %v1562, 0
        %v1605 = vsel %vm930, %v1563, 0
        %v1608 = vsel %vm930, %v1564, 0
        %v1611 = vsel %vm930, %v1565, 0
        %v1614 = vsel %vm930, %v1566, 0
        %v1617 = vsel %vm930, %v1567, 0
        %v1620 = vand.u32 %v1590, %v958
        %1622 = vmatpush.bf16.msra.mxu0 0
        %1623 = vmatpush.bf16.msra.mxu0 0
        %1624 = vmatpush.bf16.msra.mxu0 0
        %1625 = vmatpush.bf16.msra.mxu0 %v1620
        %1626 = vmatpush.bf16.msra.mxu0 %v1589
        %1627 = vmatpush.bf16.msra.mxu0 %v1588
        %1628 = vmatpush.bf16.msra.mxu0 %v1587
        %1629 = vmatpush.bf16.msra.mxu0 %v1586
        %1630 = vmatmul.bf16.gmra.mxu0 %v1596
        %v1631 = vpop.f32.mrf.mxu0
        %v1632 = vadd.f32 0.0, %v1631
        %v1633 = vpop.f32.mrf.mxu0
        %v1634 = vadd.f32 0.0, %v1633
        %1635 = vmatmul.bf16.gmra.mxu0 %v1599
        %v1636 = vpop.f32.mrf.mxu0
        %v1637 = vadd.f32 0.0, %v1636
        %v1638 = vpop.f32.mrf.mxu0
        %v1639 = vadd.f32 0.0, %v1638
        %1640 = vmatmul.bf16.gmra.mxu0 %v1602
        %v1641 = vpop.f32.mrf.mxu0
        %v1642 = vadd.f32 0.0, %v1641
        %v1643 = vpop.f32.mrf.mxu0
        %v1644 = vadd.f32 0.0, %v1643
        %1645 = vmatmul.bf16.gmra.mxu0 %v1605
        %v1646 = vpop.f32.mrf.mxu0
        %v1647 = vadd.f32 0.0, %v1646
        %v1648 = vpop.f32.mrf.mxu0
        %v1649 = vadd.f32 0.0, %v1648
        %1650 = vmatmul.bf16.gmra.mxu0 %v1608
        %v1651 = vpop.f32.mrf.mxu0
        %v1652 = vadd.f32 0.0, %v1651
        %v1653 = vpop.f32.mrf.mxu0
        %v1654 = vadd.f32 0.0, %v1653
        %1655 = vmatmul.bf16.gmra.mxu0 %v1611
        %v1656 = vpop.f32.mrf.mxu0
        %v1657 = vadd.f32 0.0, %v1656
        %v1658 = vpop.f32.mrf.mxu0
        %v1659 = vadd.f32 0.0, %v1658
        %1660 = vmatmul.bf16.gmra.mxu0 %v1614
        %v1661 = vpop.f32.mrf.mxu0
        %v1662 = vadd.f32 0.0, %v1661
        %v1663 = vpop.f32.mrf.mxu0
        %v1664 = vadd.f32 0.0, %v1663
        %1665 = vmatmul.bf16.gmra.mxu0 %v1617
        %v1666 = vpop.f32.mrf.mxu0
        %v1667 = vadd.f32 0.0, %v1666
        %v1668 = vpop.f32.mrf.mxu0
        %v1669 = vadd.f32 0.0, %v1668
        %1670 = vdwg.mxu0
        %v1671 = vadd.f32 %v1485, %v1632
        %v1672 = vadd.f32 %v1486, %v1634
        %v1673 = vadd.f32 %v1487, %v1637
        %v1674 = vadd.f32 %v1488, %v1639
        %v1675 = vadd.f32 %v1489, %v1642
        %v1676 = vadd.f32 %v1490, %v1644
        %v1677 = vadd.f32 %v1491, %v1647
        %v1678 = vadd.f32 %v1492, %v1649
        %v1679 = vadd.f32 %v1493, %v1652
        %v1680 = vadd.f32 %v1494, %v1654
        %v1681 = vadd.f32 %v1495, %v1657
        %v1682 = vadd.f32 %v1496, %v1659
        %v1683 = vadd.f32 %v1497, %v1662
        %v1684 = vadd.f32 %v1498, %v1664
        %v1685 = vadd.f32 %v1499, %v1667
        %v1686 = vadd.f32 %v1500, %v1669
        %s1687 = scalar_lea.vmem %s738, 256 [#allocation2]
        %v1688 = vld [vmem:[%s1687] sm:$0xf]
        %v1689 = vld [vmem:[%s1687 + $0x4] sm:$0xf]
        %v1690 = vld [vmem:[%s1687 + $0x8] sm:$0xf]
        %v1691 = vld [vmem:[%s1687 + $0xc] sm:$0xf]
        %v1692 = vld [vmem:[%s1687 + $0x10] sm:$0xf]
        %v1693 = vld [vmem:[%s1687 + $0x14] sm:$0xf]
        %v1694 = vld [vmem:[%s1687 + $0x18] sm:$0xf]
        %v1695 = vld [vmem:[%s1687 + $0x1c] sm:$0xf]
        %v1696 = vld [vmem:[%s1687 + $0x20] sm:$0xf]
        %v1697 = vld [vmem:[%s1687 + $0x24] sm:$0xf]
        %v1698 = vld [vmem:[%s1687 + $0x28] sm:$0xf]
        %v1699 = vld [vmem:[%s1687 + $0x2c] sm:$0xf]
        %v1700 = vld [vmem:[%s1687 + $0x30] sm:$0xf]
        %v1701 = vld [vmem:[%s1687 + $0x34] sm:$0xf]
        %v1702 = vld [vmem:[%s1687 + $0x38] sm:$0xf]
        %v1703 = vld [vmem:[%s1687 + $0x3c] sm:$0xf]
        %s1704 = scalar_lea.vmem %s6, 144
        %v1705 = vld [vmem:[%s1704] sm:$0xf]
        %v1706 = vld [vmem:[%s1704 + $0x4] sm:$0xf]
        %v1707 = vld [vmem:[%s1704 + $0x8] sm:$0xf]
        %v1708 = vld [vmem:[%s1704 + $0xc] sm:$0xf]
        %v1709 = vld [vmem:[%s1704 + $0x10] sm:$0xf]
        %v1710 = vld [vmem:[%s1704 + $0x14] sm:$0xf]
        %v1711 = vld [vmem:[%s1704 + $0x18] sm:$0xf]
        %v1712 = vld [vmem:[%s1704 + $0x1c] sm:$0xf]
        %v1713 = vld [vmem:[%s1704 + $0x20] sm:$0x3]
        %v1730 = vunpack.c.l.b16 %v1688
        %v1731 = vunpack.c.l.b16 %v1689
        %v1732 = vunpack.c.l.b16 %v1690
        %v1733 = vunpack.c.l.b16 %v1691
        %v1734 = vunpack.c.l.b16 %v1692
        %v1735 = vunpack.c.l.b16 %v1693
        %v1736 = vunpack.c.l.b16 %v1694
        %v1737 = vunpack.c.l.b16 %v1695
        %v1738 = vunpack.c.l.b16 %v1696
        %v1739 = vunpack.c.l.b16 %v1697
        %v1740 = vunpack.c.l.b16 %v1698
        %v1741 = vunpack.c.l.b16 %v1699
        %v1742 = vunpack.c.l.b16 %v1700
        %v1743 = vunpack.c.l.b16 %v1701
        %v1744 = vunpack.c.l.b16 %v1702
        %v1745 = vunpack.c.l.b16 %v1703
        %v1746 = vpack.c.b16 %v1731, %v1730
        %v1747 = vpack.c.b16 %v1733, %v1732
        %v1748 = vpack.c.b16 %v1735, %v1734
        %v1749 = vpack.c.b16 %v1737, %v1736
        %v1750 = vpack.c.b16 %v1739, %v1738
        %v1751 = vpack.c.b16 %v1741, %v1740
        %v1752 = vpack.c.b16 %v1743, %v1742
        %v1753 = vpack.c.b16 %v1745, %v1744
        %v1763 = vunpack.c.l.b16 %v1705
        %v1764 = vunpack.c.l.b16 %v1706
        %v1765 = vunpack.c.l.b16 %v1707
        %v1766 = vunpack.c.l.b16 %v1708
        %v1767 = vunpack.c.l.b16 %v1709
        %v1768 = vunpack.c.l.b16 %v1710
        %v1769 = vunpack.c.l.b16 %v1711
        %v1770 = vunpack.c.l.b16 %v1712
        %v1771 = vunpack.c.l.b16 %v1713
        %v1772 = vpack.c.b16 %v1764, %v1763
        %v1773 = vpack.c.b16 %v1766, %v1765
        %v1774 = vpack.c.b16 %v1768, %v1767
        %v1775 = vpack.c.b16 %v1770, %v1769
        %v1776 = vpack.c.b16 %v1771, %v1771
        %v1782 = vsel %vm930, %v1746, 0
        %v1785 = vsel %vm930, %v1747, 0
        %v1788 = vsel %vm930, %v1748, 0
        %v1791 = vsel %vm930, %v1749, 0
        %v1794 = vsel %vm930, %v1750, 0
        %v1797 = vsel %vm930, %v1751, 0
        %v1800 = vsel %vm930, %v1752, 0
        %v1803 = vsel %vm930, %v1753, 0
        %v1806 = vand.u32 %v1776, %v958
        %1808 = vmatpush.bf16.msra.mxu0 0
        %1809 = vmatpush.bf16.msra.mxu0 0
        %1810 = vmatpush.bf16.msra.mxu0 0
        %1811 = vmatpush.bf16.msra.mxu0 %v1806
        %1812 = vmatpush.bf16.msra.mxu0 %v1775
        %1813 = vmatpush.bf16.msra.mxu0 %v1774
        %1814 = vmatpush.bf16.msra.mxu0 %v1773
        %1815 = vmatpush.bf16.msra.mxu0 %v1772
        %1816 = vmatmul.bf16.gmra.mxu0 %v1782
        %v1817 = vpop.f32.mrf.mxu0
        %v1818 = vadd.f32 0.0, %v1817
        %v1819 = vpop.f32.mrf.mxu0
        %v1820 = vadd.f32 0.0, %v1819
        %1821 = vmatmul.bf16.gmra.mxu0 %v1785
        %v1822 = vpop.f32.mrf.mxu0
        %v1823 = vadd.f32 0.0, %v1822
        %v1824 = vpop.f32.mrf.mxu0
        %v1825 = vadd.f32 0.0, %v1824
        %1826 = vmatmul.bf16.gmra.mxu0 %v1788
        %v1827 = vpop.f32.mrf.mxu0
        %v1828 = vadd.f32 0.0, %v1827
        %v1829 = vpop.f32.mrf.mxu0
        %v1830 = vadd.f32 0.0, %v1829
        %1831 = vmatmul.bf16.gmra.mxu0 %v1791
        %v1832 = vpop.f32.mrf.mxu0
        %v1833 = vadd.f32 0.0, %v1832
        %v1834 = vpop.f32.mrf.mxu0
        %v1835 = vadd.f32 0.0, %v1834
        %1836 = vmatmul.bf16.gmra.mxu0 %v1794
        %v1837 = vpop.f32.mrf.mxu0
        %v1838 = vadd.f32 0.0, %v1837
        %v1839 = vpop.f32.mrf.mxu0
        %v1840 = vadd.f32 0.0, %v1839
        %1841 = vmatmul.bf16.gmra.mxu0 %v1797
        %v1842 = vpop.f32.mrf.mxu0
        %v1843 = vadd.f32 0.0, %v1842
        %v1844 = vpop.f32.mrf.mxu0
        %v1845 = vadd.f32 0.0, %v1844
        %1846 = vmatmul.bf16.gmra.mxu0 %v1800
        %v1847 = vpop.f32.mrf.mxu0
        %v1848 = vadd.f32 0.0, %v1847
        %v1849 = vpop.f32.mrf.mxu0
        %v1850 = vadd.f32 0.0, %v1849
        %1851 = vmatmul.bf16.gmra.mxu0 %v1803
        %v1852 = vpop.f32.mrf.mxu0
        %v1853 = vadd.f32 0.0, %v1852
        %v1854 = vpop.f32.mrf.mxu0
        %v1855 = vadd.f32 0.0, %v1854
        %1856 = vdwg.mxu0
        %v1857 = vadd.f32 %v1671, %v1818
        %v1858 = vadd.f32 %v1672, %v1820
        %v1859 = vadd.f32 %v1673, %v1823
        %v1860 = vadd.f32 %v1674, %v1825
        %v1861 = vadd.f32 %v1675, %v1828
        %v1862 = vadd.f32 %v1676, %v1830
        %v1863 = vadd.f32 %v1677, %v1833
        %v1864 = vadd.f32 %v1678, %v1835
        %v1865 = vadd.f32 %v1679, %v1838
        %v1866 = vadd.f32 %v1680, %v1840
        %v1867 = vadd.f32 %v1681, %v1843
        %v1868 = vadd.f32 %v1682, %v1845
        %v1869 = vadd.f32 %v1683, %v1848
        %v1870 = vadd.f32 %v1684, %v1850
        %v1871 = vadd.f32 %v1685, %v1853
        %v1872 = vadd.f32 %v1686, %v1855
        %s1873 = scalar_lea.vmem %s738, 320 [#allocation2]
        %v1874 = vld [vmem:[%s1873] sm:$0xf]
        %v1875 = vld [vmem:[%s1873 + $0x4] sm:$0xf]
        %v1876 = vld [vmem:[%s1873 + $0x8] sm:$0xf]
        %v1877 = vld [vmem:[%s1873 + $0xc] sm:$0xf]
        %v1878 = vld [vmem:[%s1873 + $0x10] sm:$0xf]
        %v1879 = vld [vmem:[%s1873 + $0x14] sm:$0xf]
        %v1880 = vld [vmem:[%s1873 + $0x18] sm:$0xf]
        %v1881 = vld [vmem:[%s1873 + $0x1c] sm:$0xf]
        %v1882 = vld [vmem:[%s1873 + $0x20] sm:$0xf]
        %v1883 = vld [vmem:[%s1873 + $0x24] sm:$0xf]
        %v1884 = vld [vmem:[%s1873 + $0x28] sm:$0xf]
        %v1885 = vld [vmem:[%s1873 + $0x2c] sm:$0xf]
        %v1886 = vld [vmem:[%s1873 + $0x30] sm:$0xf]
        %v1887 = vld [vmem:[%s1873 + $0x34] sm:$0xf]
        %v1888 = vld [vmem:[%s1873 + $0x38] sm:$0xf]
        %v1889 = vld [vmem:[%s1873 + $0x3c] sm:$0xf]
        %s1890 = scalar_lea.vmem %s6, 180
        %v1891 = vld [vmem:[%s1890] sm:$0xf]
        %v1892 = vld [vmem:[%s1890 + $0x4] sm:$0xf]
        %v1893 = vld [vmem:[%s1890 + $0x8] sm:$0xf]
        %v1894 = vld [vmem:[%s1890 + $0xc] sm:$0xf]
        %v1895 = vld [vmem:[%s1890 + $0x10] sm:$0xf]
        %v1896 = vld [vmem:[%s1890 + $0x14] sm:$0xf]
        %v1897 = vld [vmem:[%s1890 + $0x18] sm:$0xf]
        %v1898 = vld [vmem:[%s1890 + $0x1c] sm:$0xf]
        %v1899 = vld [vmem:[%s1890 + $0x20] sm:$0x3]
        %v1916 = vunpack.c.l.b16 %v1874
        %v1917 = vunpack.c.l.b16 %v1875
        %v1918 = vunpack.c.l.b16 %v1876
        %v1919 = vunpack.c.l.b16 %v1877
        %v1920 = vunpack.c.l.b16 %v1878
        %v1921 = vunpack.c.l.b16 %v1879
        %v1922 = vunpack.c.l.b16 %v1880
        %v1923 = vunpack.c.l.b16 %v1881
        %v1924 = vunpack.c.l.b16 %v1882
        %v1925 = vunpack.c.l.b16 %v1883
        %v1926 = vunpack.c.l.b16 %v1884
        %v1927 = vunpack.c.l.b16 %v1885
        %v1928 = vunpack.c.l.b16 %v1886
        %v1929 = vunpack.c.l.b16 %v1887
        %v1930 = vunpack.c.l.b16 %v1888
        %v1931 = vunpack.c.l.b16 %v1889
        %v1932 = vpack.c.b16 %v1917, %v1916
        %v1933 = vpack.c.b16 %v1919, %v1918
        %v1934 = vpack.c.b16 %v1921, %v1920
        %v1935 = vpack.c.b16 %v1923, %v1922
        %v1936 = vpack.c.b16 %v1925, %v1924
        %v1937 = vpack.c.b16 %v1927, %v1926
        %v1938 = vpack.c.b16 %v1929, %v1928
        %v1939 = vpack.c.b16 %v1931, %v1930
        %v1949 = vunpack.c.l.b16 %v1891
        %v1950 = vunpack.c.l.b16 %v1892
        %v1951 = vunpack.c.l.b16 %v1893
        %v1952 = vunpack.c.l.b16 %v1894
        %v1953 = vunpack.c.l.b16 %v1895
        %v1954 = vunpack.c.l.b16 %v1896
        %v1955 = vunpack.c.l.b16 %v1897
        %v1956 = vunpack.c.l.b16 %v1898
        %v1957 = vunpack.c.l.b16 %v1899
        %v1958 = vpack.c.b16 %v1950, %v1949
        %v1959 = vpack.c.b16 %v1952, %v1951
        %v1960 = vpack.c.b16 %v1954, %v1953
        %v1961 = vpack.c.b16 %v1956, %v1955
        %v1962 = vpack.c.b16 %v1957, %v1957
        %v1968 = vsel %vm930, %v1932, 0
        %v1971 = vsel %vm930, %v1933, 0
        %v1974 = vsel %vm930, %v1934, 0
        %v1977 = vsel %vm930, %v1935, 0
        %v1980 = vsel %vm930, %v1936, 0
        %v1983 = vsel %vm930, %v1937, 0
        %v1986 = vsel %vm930, %v1938, 0
        %v1989 = vsel %vm930, %v1939, 0
        %v1992 = vand.u32 %v1962, %v958
        %1994 = vmatpush.bf16.msra.mxu0 0
        %1995 = vmatpush.bf16.msra.mxu0 0
        %1996 = vmatpush.bf16.msra.mxu0 0
        %1997 = vmatpush.bf16.msra.mxu0 %v1992
        %1998 = vmatpush.bf16.msra.mxu0 %v1961
        %1999 = vmatpush.bf16.msra.mxu0 %v1960
        %2000 = vmatpush.bf16.msra.mxu0 %v1959
        %2001 = vmatpush.bf16.msra.mxu0 %v1958
        %2002 = vmatmul.bf16.gmra.mxu0 %v1968
        %v2003 = vpop.f32.mrf.mxu0
        %v2004 = vadd.f32 0.0, %v2003
        %v2005 = vpop.f32.mrf.mxu0
        %v2006 = vadd.f32 0.0, %v2005
        %2007 = vmatmul.bf16.gmra.mxu0 %v1971
        %v2008 = vpop.f32.mrf.mxu0
        %v2009 = vadd.f32 0.0, %v2008
        %v2010 = vpop.f32.mrf.mxu0
        %v2011 = vadd.f32 0.0, %v2010
        %2012 = vmatmul.bf16.gmra.mxu0 %v1974
        %v2013 = vpop.f32.mrf.mxu0
        %v2014 = vadd.f32 0.0, %v2013
        %v2015 = vpop.f32.mrf.mxu0
        %v2016 = vadd.f32 0.0, %v2015
        %2017 = vmatmul.bf16.gmra.mxu0 %v1977
        %v2018 = vpop.f32.mrf.mxu0
        %v2019 = vadd.f32 0.0, %v2018
        %v2020 = vpop.f32.mrf.mxu0
        %v2021 = vadd.f32 0.0, %v2020
        %2022 = vmatmul.bf16.gmra.mxu0 %v1980
        %v2023 = vpop.f32.mrf.mxu0
        %v2024 = vadd.f32 0.0, %v2023
        %v2025 = vpop.f32.mrf.mxu0
        %v2026 = vadd.f32 0.0, %v2025
        %2027 = vmatmul.bf16.gmra.mxu0 %v1983
        %v2028 = vpop.f32.mrf.mxu0
        %v2029 = vadd.f32 0.0, %v2028
        %v2030 = vpop.f32.mrf.mxu0
        %v2031 = vadd.f32 0.0, %v2030
        %2032 = vmatmul.bf16.gmra.mxu0 %v1986
        %v2033 = vpop.f32.mrf.mxu0
        %v2034 = vadd.f32 0.0, %v2033
        %v2035 = vpop.f32.mrf.mxu0
        %v2036 = vadd.f32 0.0, %v2035
        %2037 = vmatmul.bf16.gmra.mxu0 %v1989
        %v2038 = vpop.f32.mrf.mxu0
        %v2039 = vadd.f32 0.0, %v2038
        %v2040 = vpop.f32.mrf.mxu0
        %v2041 = vadd.f32 0.0, %v2040
        %2042 = vdwg.mxu0
        %v2043 = vadd.f32 %v1857, %v2004
        %v2044 = vadd.f32 %v1858, %v2006
        %v2045 = vadd.f32 %v1859, %v2009
        %v2046 = vadd.f32 %v1860, %v2011
        %v2047 = vadd.f32 %v1861, %v2014
        %v2048 = vadd.f32 %v1862, %v2016
        %v2049 = vadd.f32 %v1863, %v2019
        %v2050 = vadd.f32 %v1864, %v2021
        %v2051 = vadd.f32 %v1865, %v2024
        %v2052 = vadd.f32 %v1866, %v2026
        %v2053 = vadd.f32 %v1867, %v2029
        %v2054 = vadd.f32 %v1868, %v2031
        %v2055 = vadd.f32 %v1869, %v2034
        %v2056 = vadd.f32 %v1870, %v2036
        %v2057 = vadd.f32 %v1871, %v2039
        %v2058 = vadd.f32 %v1872, %v2041
        %v2059 = vld [vmem:[%s7] sm:$0x1]
        %v2061 = vperm.slane %v2059, 0
        %v2063 = vadd.f32 %v2043, %v2061
        %v2064 = vadd.f32 %v2044, %v2061
        %v2065 = vadd.f32 %v2045, %v2061
        %v2066 = vadd.f32 %v2046, %v2061
        %v2067 = vadd.f32 %v2047, %v2061
        %v2068 = vadd.f32 %v2048, %v2061
        %v2069 = vadd.f32 %v2049, %v2061
        %v2070 = vadd.f32 %v2050, %v2061
        %v2071 = vadd.f32 %v2051, %v2061
        %v2072 = vadd.f32 %v2052, %v2061
        %v2073 = vadd.f32 %v2053, %v2061
        %v2074 = vadd.f32 %v2054, %v2061
        %v2075 = vadd.f32 %v2055, %v2061
        %v2076 = vadd.f32 %v2056, %v2061
        %v2077 = vadd.f32 %v2057, %v2061
        %v2078 = vadd.f32 %v2058, %v2061
        %vm2079 = vcmask 785408
        %v2080 = vsel %vm2079, %v2063, -inf
        %2081 = vmax.xlane.f32.xlu0 %v2080
        %v2082 = vpop.xlane.xlu0 %2081
        %v2083 = vsel %vm2079, %v2064, -inf
        %2084 = vmax.xlane.f32.xlu0 %v2083
        %v2085 = vpop.xlane.xlu0 %2084
        %v2086 = vsel %vm2079, %v2065, -inf
        %2087 = vmax.xlane.f32.xlu0 %v2086
        %v2088 = vpop.xlane.xlu0 %2087
        %v2089 = vsel %vm2079, %v2066, -inf
        %2090 = vmax.xlane.f32.xlu0 %v2089
        %v2091 = vpop.xlane.xlu0 %2090
        %v2092 = vsel %vm2079, %v2067, -inf
        %2093 = vmax.xlane.f32.xlu0 %v2092
        %v2094 = vpop.xlane.xlu0 %2093
        %v2095 = vsel %vm2079, %v2068, -inf
        %2096 = vmax.xlane.f32.xlu0 %v2095
        %v2097 = vpop.xlane.xlu0 %2096
        %v2098 = vsel %vm2079, %v2069, -inf
        %2099 = vmax.xlane.f32.xlu0 %v2098
        %v2100 = vpop.xlane.xlu0 %2099
        %v2101 = vsel %vm2079, %v2070, -inf
        %2102 = vmax.xlane.f32.xlu0 %v2101
        %v2103 = vpop.xlane.xlu0 %2102
        %v2104 = vsel %vm2079, %v2071, -inf
        %2105 = vmax.xlane.f32.xlu0 %v2104
        %v2106 = vpop.xlane.xlu0 %2105
        %v2107 = vsel %vm2079, %v2072, -inf
        %2108 = vmax.xlane.f32.xlu0 %v2107
        %v2109 = vpop.xlane.xlu0 %2108
        %v2110 = vsel %vm2079, %v2073, -inf
        %2111 = vmax.xlane.f32.xlu0 %v2110
        %v2112 = vpop.xlane.xlu0 %2111
        %v2113 = vsel %vm2079, %v2074, -inf
        %2114 = vmax.xlane.f32.xlu0 %v2113
        %v2115 = vpop.xlane.xlu0 %2114
        %v2116 = vsel %vm2079, %v2075, -inf
        %2117 = vmax.xlane.f32.xlu0 %v2116
        %v2118 = vpop.xlane.xlu0 %2117
        %v2119 = vsel %vm2079, %v2076, -inf
        %2120 = vmax.xlane.f32.xlu0 %v2119
        %v2121 = vpop.xlane.xlu0 %2120
        %v2122 = vsel %vm2079, %v2077, -inf
        %2123 = vmax.xlane.f32.xlu0 %v2122
        %v2124 = vpop.xlane.xlu0 %2123
        %v2125 = vsel %vm2079, %v2078, -inf
        %2126 = vmax.xlane.f32.xlu0 %v2125
        %v2127 = vpop.xlane.xlu0 %2126
        %v2128 = vsub.f32 %v2063, %v2082
        %v2129 = vsub.f32 %v2064, %v2085
        %v2130 = vsub.f32 %v2065, %v2088
        %v2131 = vsub.f32 %v2066, %v2091
        %v2132 = vsub.f32 %v2067, %v2094
        %v2133 = vsub.f32 %v2068, %v2097
        %v2134 = vsub.f32 %v2069, %v2100
        %v2135 = vsub.f32 %v2070, %v2103
        %v2136 = vsub.f32 %v2071, %v2106
        %v2137 = vsub.f32 %v2072, %v2109
        %v2138 = vsub.f32 %v2073, %v2112
        %v2139 = vsub.f32 %v2074, %v2115
        %v2140 = vsub.f32 %v2075, %v2118
        %v2141 = vsub.f32 %v2076, %v2121
        %v2142 = vsub.f32 %v2077, %v2124
        %v2143 = vsub.f32 %v2078, %v2127
        %v2144 = vmul.f32 %v2128, 1.442695
        %v2145 = vpow.pop %v2144
        %v2146 = vmul.f32 %v2129, 1.442695
        %v2147 = vpow.pop %v2146
        %v2148 = vmul.f32 %v2130, 1.442695
        %v2149 = vpow.pop %v2148
        %v2150 = vmul.f32 %v2131, 1.442695
        %v2151 = vpow.pop %v2150
        %v2152 = vmul.f32 %v2132, 1.442695
        %v2153 = vpow.pop %v2152
        %v2154 = vmul.f32 %v2133, 1.442695
        %v2155 = vpow.pop %v2154
        %v2156 = vmul.f32 %v2134, 1.442695
        %v2157 = vpow.pop %v2156
        %v2158 = vmul.f32 %v2135, 1.442695
        %v2159 = vpow.pop %v2158
        %v2160 = vmul.f32 %v2136, 1.442695
        %v2161 = vpow.pop %v2160
        %v2162 = vmul.f32 %v2137, 1.442695
        %v2163 = vpow.pop %v2162
        %v2164 = vmul.f32 %v2138, 1.442695
        %v2165 = vpow.pop %v2164
        %v2166 = vmul.f32 %v2139, 1.442695
        %v2167 = vpow.pop %v2166
        %v2168 = vmul.f32 %v2140, 1.442695
        %v2169 = vpow.pop %v2168
        %v2170 = vmul.f32 %v2141, 1.442695
        %v2171 = vpow.pop %v2170
        %v2172 = vmul.f32 %v2142, 1.442695
        %v2173 = vpow.pop %v2172
        %v2174 = vmul.f32 %v2143, 1.442695
        %v2175 = vpow.pop %v2174
        %v2176 = vsel %vm2079, %v2145, 0.0
        %2177 = vadd.xlane.f32.xlu0 %v2176
        %v2178 = vpop.xlane.xlu0 %2177
        %v2179 = vsel %vm2079, %v2147, 0.0
        %2180 = vadd.xlane.f32.xlu0 %v2179
        %v2181 = vpop.xlane.xlu0 %2180
        %v2182 = vsel %vm2079, %v2149, 0.0
        %2183 = vadd.xlane.f32.xlu0 %v2182
        %v2184 = vpop.xlane.xlu0 %2183
        %v2185 = vsel %vm2079, %v2151, 0.0
        %2186 = vadd.xlane.f32.xlu0 %v2185
        %v2187 = vpop.xlane.xlu0 %2186
        %v2188 = vsel %vm2079, %v2153, 0.0
        %2189 = vadd.xlane.f32.xlu0 %v2188
        %v2190 = vpop.xlane.xlu0 %2189
        %v2191 = vsel %vm2079, %v2155, 0.0
        %2192 = vadd.xlane.f32.xlu0 %v2191
        %v2193 = vpop.xlane.xlu0 %2192
        %v2194 = vsel %vm2079, %v2157, 0.0
        %2195 = vadd.xlane.f32.xlu0 %v2194
        %v2196 = vpop.xlane.xlu0 %2195
        %v2197 = vsel %vm2079, %v2159, 0.0
        %2198 = vadd.xlane.f32.xlu0 %v2197
        %v2199 = vpop.xlane.xlu0 %2198
        %v2200 = vsel %vm2079, %v2161, 0.0
        %2201 = vadd.xlane.f32.xlu0 %v2200
        %v2202 = vpop.xlane.xlu0 %2201
        %v2203 = vsel %vm2079, %v2163, 0.0
        %2204 = vadd.xlane.f32.xlu0 %v2203
        %v2205 = vpop.xlane.xlu0 %2204
        %v2206 = vsel %vm2079, %v2165, 0.0
        %2207 = vadd.xlane.f32.xlu0 %v2206
        %v2208 = vpop.xlane.xlu0 %2207
        %v2209 = vsel %vm2079, %v2167, 0.0
        %2210 = vadd.xlane.f32.xlu0 %v2209
        %v2211 = vpop.xlane.xlu0 %2210
        %v2212 = vsel %vm2079, %v2169, 0.0
        %2213 = vadd.xlane.f32.xlu0 %v2212
        %v2214 = vpop.xlane.xlu0 %2213
        %v2215 = vsel %vm2079, %v2171, 0.0
        %2216 = vadd.xlane.f32.xlu0 %v2215
        %v2217 = vpop.xlane.xlu0 %2216
        %v2218 = vsel %vm2079, %v2173, 0.0
        %2219 = vadd.xlane.f32.xlu0 %v2218
        %v2220 = vpop.xlane.xlu0 %2219
        %v2221 = vsel %vm2079, %v2175, 0.0
        %2222 = vadd.xlane.f32.xlu0 %v2221
        %v2223 = vpop.xlane.xlu0 %2222
        %v2224 = vrcp.pop %v2178
        %v2225 = vmul.f32 %v2178, %v2224
        %v2226 = vsub.f32 1.0, %v2225
        %v2227 = vmul.f32 %v2224, %v2226
        %v2228 = vadd.f32 %v2224, %v2227
        %vm2229 = vweird.f32 %v2178
        %vm2230 = vweird.f32 %v2224
        %vm2231 = vmor %vm2229, %vm2230
        %v2232 = vsel %vm2231, %v2224, %v2228
        %v2233 = vand.u32 2147483647, %v2178
        %vm2234 = vcmp.eq.f32.partialorder %v2233, 8.507059e+37
        %v2235 = vand.u32 %v2178, 2147483648
        %v2236 = vor.u32 1.1754944e-38, %v2235
        %v2237 = vsel %vm2234, %v2236, %v2232
        %v2238 = vmul.f32 %v2145, %v2237
        %v2239 = vrcp.pop %v2181
        %v2240 = vmul.f32 %v2181, %v2239
        %v2241 = vsub.f32 1.0, %v2240
        %v2242 = vmul.f32 %v2239, %v2241
        %v2243 = vadd.f32 %v2239, %v2242
        %vm2244 = vweird.f32 %v2181
        %vm2245 = vweird.f32 %v2239
        %vm2246 = vmor %vm2244, %vm2245
        %v2247 = vsel %vm2246, %v2239, %v2243
        %v2248 = vand.u32 2147483647, %v2181
        %vm2249 = vcmp.eq.f32.partialorder %v2248, 8.507059e+37
        %v2250 = vand.u32 %v2181, 2147483648
        %v2251 = vor.u32 1.1754944e-38, %v2250
        %v2252 = vsel %vm2249, %v2251, %v2247
        %v2253 = vmul.f32 %v2147, %v2252
        %v2254 = vrcp.pop %v2184
        %v2255 = vmul.f32 %v2184, %v2254
        %v2256 = vsub.f32 1.0, %v2255
        %v2257 = vmul.f32 %v2254, %v2256
        %v2258 = vadd.f32 %v2254, %v2257
        %vm2259 = vweird.f32 %v2184
        %vm2260 = vweird.f32 %v2254
        %vm2261 = vmor %vm2259, %vm2260
        %v2262 = vsel %vm2261, %v2254, %v2258
        %v2263 = vand.u32 2147483647, %v2184
        %vm2264 = vcmp.eq.f32.partialorder %v2263, 8.507059e+37
        %v2265 = vand.u32 %v2184, 2147483648
        %v2266 = vor.u32 1.1754944e-38, %v2265
        %v2267 = vsel %vm2264, %v2266, %v2262
        %v2268 = vmul.f32 %v2149, %v2267
        %v2269 = vrcp.pop %v2187
        %v2270 = vmul.f32 %v2187, %v2269
        %v2271 = vsub.f32 1.0, %v2270
        %v2272 = vmul.f32 %v2269, %v2271
        %v2273 = vadd.f32 %v2269, %v2272
        %vm2274 = vweird.f32 %v2187
        %vm2275 = vweird.f32 %v2269
        %vm2276 = vmor %vm2274, %vm2275
        %v2277 = vsel %vm2276, %v2269, %v2273
        %v2278 = vand.u32 2147483647, %v2187
        %vm2279 = vcmp.eq.f32.partialorder %v2278, 8.507059e+37
        %v2280 = vand.u32 %v2187, 2147483648
        %v2281 = vor.u32 1.1754944e-38, %v2280
        %v2282 = vsel %vm2279, %v2281, %v2277
        %v2283 = vmul.f32 %v2151, %v2282
        %v2284 = vrcp.pop %v2190
        %v2285 = vmul.f32 %v2190, %v2284
        %v2286 = vsub.f32 1.0, %v2285
        %v2287 = vmul.f32 %v2284, %v2286
        %v2288 = vadd.f32 %v2284, %v2287
        %vm2289 = vweird.f32 %v2190
        %vm2290 = vweird.f32 %v2284
        %vm2291 = vmor %vm2289, %vm2290
        %v2292 = vsel %vm2291, %v2284, %v2288
        %v2293 = vand.u32 2147483647, %v2190
        %vm2294 = vcmp.eq.f32.partialorder %v2293, 8.507059e+37
        %v2295 = vand.u32 %v2190, 2147483648
        %v2296 = vor.u32 1.1754944e-38, %v2295
        %v2297 = vsel %vm2294, %v2296, %v2292
        %v2298 = vmul.f32 %v2153, %v2297
        %v2299 = vrcp.pop %v2193
        %v2300 = vmul.f32 %v2193, %v2299
        %v2301 = vsub.f32 1.0, %v2300
        %v2302 = vmul.f32 %v2299, %v2301
        %v2303 = vadd.f32 %v2299, %v2302
        %vm2304 = vweird.f32 %v2193
        %vm2305 = vweird.f32 %v2299
        %vm2306 = vmor %vm2304, %vm2305
        %v2307 = vsel %vm2306, %v2299, %v2303
        %v2308 = vand.u32 2147483647, %v2193
        %vm2309 = vcmp.eq.f32.partialorder %v2308, 8.507059e+37
        %v2310 = vand.u32 %v2193, 2147483648
        %v2311 = vor.u32 1.1754944e-38, %v2310
        %v2312 = vsel %vm2309, %v2311, %v2307
        %v2313 = vmul.f32 %v2155, %v2312
        %v2314 = vrcp.pop %v2196
        %v2315 = vmul.f32 %v2196, %v2314
        %v2316 = vsub.f32 1.0, %v2315
        %v2317 = vmul.f32 %v2314, %v2316
        %v2318 = vadd.f32 %v2314, %v2317
        %vm2319 = vweird.f32 %v2196
        %vm2320 = vweird.f32 %v2314
        %vm2321 = vmor %vm2319, %vm2320
        %v2322 = vsel %vm2321, %v2314, %v2318
        %v2323 = vand.u32 2147483647, %v2196
        %vm2324 = vcmp.eq.f32.partialorder %v2323, 8.507059e+37
        %v2325 = vand.u32 %v2196, 2147483648
        %v2326 = vor.u32 1.1754944e-38, %v2325
        %v2327 = vsel %vm2324, %v2326, %v2322
        %v2328 = vmul.f32 %v2157, %v2327
        %v2329 = vrcp.pop %v2199
        %v2330 = vmul.f32 %v2199, %v2329
        %v2331 = vsub.f32 1.0, %v2330
        %v2332 = vmul.f32 %v2329, %v2331
        %v2333 = vadd.f32 %v2329, %v2332
        %vm2334 = vweird.f32 %v2199
        %vm2335 = vweird.f32 %v2329
        %vm2336 = vmor %vm2334, %vm2335
        %v2337 = vsel %vm2336, %v2329, %v2333
        %v2338 = vand.u32 2147483647, %v2199
        %vm2339 = vcmp.eq.f32.partialorder %v2338, 8.507059e+37
        %v2340 = vand.u32 %v2199, 2147483648
        %v2341 = vor.u32 1.1754944e-38, %v2340
        %v2342 = vsel %vm2339, %v2341, %v2337
        %v2343 = vmul.f32 %v2159, %v2342
        %v2344 = vrcp.pop %v2202
        %v2345 = vmul.f32 %v2202, %v2344
        %v2346 = vsub.f32 1.0, %v2345
        %v2347 = vmul.f32 %v2344, %v2346
        %v2348 = vadd.f32 %v2344, %v2347
        %vm2349 = vweird.f32 %v2202
        %vm2350 = vweird.f32 %v2344
        %vm2351 = vmor %vm2349, %vm2350
        %v2352 = vsel %vm2351, %v2344, %v2348
        %v2353 = vand.u32 2147483647, %v2202
        %vm2354 = vcmp.eq.f32.partialorder %v2353, 8.507059e+37
        %v2355 = vand.u32 %v2202, 2147483648
        %v2356 = vor.u32 1.1754944e-38, %v2355
        %v2357 = vsel %vm2354, %v2356, %v2352
        %v2358 = vmul.f32 %v2161, %v2357
        %v2359 = vrcp.pop %v2205
        %v2360 = vmul.f32 %v2205, %v2359
        %v2361 = vsub.f32 1.0, %v2360
        %v2362 = vmul.f32 %v2359, %v2361
        %v2363 = vadd.f32 %v2359, %v2362
        %vm2364 = vweird.f32 %v2205
        %vm2365 = vweird.f32 %v2359
        %vm2366 = vmor %vm2364, %vm2365
        %v2367 = vsel %vm2366, %v2359, %v2363
        %v2368 = vand.u32 2147483647, %v2205
        %vm2369 = vcmp.eq.f32.partialorder %v2368, 8.507059e+37
        %v2370 = vand.u32 %v2205, 2147483648
        %v2371 = vor.u32 1.1754944e-38, %v2370
        %v2372 = vsel %vm2369, %v2371, %v2367
        %v2373 = vmul.f32 %v2163, %v2372
        %v2374 = vrcp.pop %v2208
        %v2375 = vmul.f32 %v2208, %v2374
        %v2376 = vsub.f32 1.0, %v2375
        %v2377 = vmul.f32 %v2374, %v2376
        %v2378 = vadd.f32 %v2374, %v2377
        %vm2379 = vweird.f32 %v2208
        %vm2380 = vweird.f32 %v2374
        %vm2381 = vmor %vm2379, %vm2380
        %v2382 = vsel %vm2381, %v2374, %v2378
        %v2383 = vand.u32 2147483647, %v2208
        %vm2384 = vcmp.eq.f32.partialorder %v2383, 8.507059e+37
        %v2385 = vand.u32 %v2208, 2147483648
        %v2386 = vor.u32 1.1754944e-38, %v2385
        %v2387 = vsel %vm2384, %v2386, %v2382
        %v2388 = vmul.f32 %v2165, %v2387
        %v2389 = vrcp.pop %v2211
        %v2390 = vmul.f32 %v2211, %v2389
        %v2391 = vsub.f32 1.0, %v2390
        %v2392 = vmul.f32 %v2389, %v2391
        %v2393 = vadd.f32 %v2389, %v2392
        %vm2394 = vweird.f32 %v2211
        %vm2395 = vweird.f32 %v2389
        %vm2396 = vmor %vm2394, %vm2395
        %v2397 = vsel %vm2396, %v2389, %v2393
        %v2398 = vand.u32 2147483647, %v2211
        %vm2399 = vcmp.eq.f32.partialorder %v2398, 8.507059e+37
        %v2400 = vand.u32 %v2211, 2147483648
        %v2401 = vor.u32 1.1754944e-38, %v2400
        %v2402 = vsel %vm2399, %v2401, %v2397
        %v2403 = vmul.f32 %v2167, %v2402
        %v2404 = vrcp.pop %v2214
        %v2405 = vmul.f32 %v2214, %v2404
        %v2406 = vsub.f32 1.0, %v2405
        %v2407 = vmul.f32 %v2404, %v2406
        %v2408 = vadd.f32 %v2404, %v2407
        %vm2409 = vweird.f32 %v2214
        %vm2410 = vweird.f32 %v2404
        %vm2411 = vmor %vm2409, %vm2410
        %v2412 = vsel %vm2411, %v2404, %v2408
        %v2413 = vand.u32 2147483647, %v2214
        %vm2414 = vcmp.eq.f32.partialorder %v2413, 8.507059e+37
        %v2415 = vand.u32 %v2214, 2147483648
        %v2416 = vor.u32 1.1754944e-38, %v2415
        %v2417 = vsel %vm2414, %v2416, %v2412
        %v2418 = vmul.f32 %v2169, %v2417
        %v2419 = vrcp.pop %v2217
        %v2420 = vmul.f32 %v2217, %v2419
        %v2421 = vsub.f32 1.0, %v2420
        %v2422 = vmul.f32 %v2419, %v2421
        %v2423 = vadd.f32 %v2419, %v2422
        %vm2424 = vweird.f32 %v2217
        %vm2425 = vweird.f32 %v2419
        %vm2426 = vmor %vm2424, %vm2425
        %v2427 = vsel %vm2426, %v2419, %v2423
        %v2428 = vand.u32 2147483647, %v2217
        %vm2429 = vcmp.eq.f32.partialorder %v2428, 8.507059e+37
        %v2430 = vand.u32 %v2217, 2147483648
        %v2431 = vor.u32 1.1754944e-38, %v2430
        %v2432 = vsel %vm2429, %v2431, %v2427
        %v2433 = vmul.f32 %v2171, %v2432
        %v2434 = vrcp.pop %v2220
        %v2435 = vmul.f32 %v2220, %v2434
        %v2436 = vsub.f32 1.0, %v2435
        %v2437 = vmul.f32 %v2434, %v2436
        %v2438 = vadd.f32 %v2434, %v2437
        %vm2439 = vweird.f32 %v2220
        %vm2440 = vweird.f32 %v2434
        %vm2441 = vmor %vm2439, %vm2440
        %v2442 = vsel %vm2441, %v2434, %v2438
        %v2443 = vand.u32 2147483647, %v2220
        %vm2444 = vcmp.eq.f32.partialorder %v2443, 8.507059e+37
        %v2445 = vand.u32 %v2220, 2147483648
        %v2446 = vor.u32 1.1754944e-38, %v2445
        %v2447 = vsel %vm2444, %v2446, %v2442
        %v2448 = vmul.f32 %v2173, %v2447
        %v2449 = vrcp.pop %v2223
        %v2450 = vmul.f32 %v2223, %v2449
        %v2451 = vsub.f32 1.0, %v2450
        %v2452 = vmul.f32 %v2449, %v2451
        %v2453 = vadd.f32 %v2449, %v2452
        %vm2454 = vweird.f32 %v2223
        %vm2455 = vweird.f32 %v2449
        %vm2456 = vmor %vm2454, %vm2455
        %v2457 = vsel %vm2456, %v2449, %v2453
        %v2458 = vand.u32 2147483647, %v2223
        %vm2459 = vcmp.eq.f32.partialorder %v2458, 8.507059e+37
        %v2460 = vand.u32 %v2223, 2147483648
        %v2461 = vor.u32 1.1754944e-38, %v2460
        %v2462 = vsel %vm2459, %v2461, %v2457
        %v2463 = vmul.f32 %v2175, %v2462
        %v2464 = vld [vmem:[%s800] sm:$0xf]
        %v2465 = vld [vmem:[%s800 + $0x4] sm:$0xf]
        %v2466 = vld [vmem:[%s800 + $0x8] sm:$0xf]
        %v2467 = vld [vmem:[%s800 + $0xc] sm:$0xf]
        %v2468 = vld [vmem:[%s800 + $0x10] sm:$0xf]
        %v2469 = vld [vmem:[%s800 + $0x14] sm:$0xf]
        %v2470 = vld [vmem:[%s800 + $0x18] sm:$0xf]
        %v2471 = vld [vmem:[%s800 + $0x1c] sm:$0xf]
        %v2472 = vld [vmem:[%s800 + $0x20] sm:$0xf]
        %v2473 = vld [vmem:[%s800 + $0x24] sm:$0xf]
        %v2474 = vld [vmem:[%s800 + $0x28] sm:$0xf]
        %v2475 = vld [vmem:[%s800 + $0x2c] sm:$0xf]
        %v2476 = vld [vmem:[%s800 + $0x30] sm:$0xf]
        %v2477 = vld [vmem:[%s800 + $0x34] sm:$0xf]
        %v2478 = vld [vmem:[%s800 + $0x38] sm:$0xf]
        %v2479 = vld [vmem:[%s800 + $0x3c] sm:$0xf]
        %v2480 = vunpack.c.l.bf16 %v2464
        %v2481 = vunpack.c.l.bf16 %v2465
        %v2482 = vunpack.c.l.bf16 %v2466
        %v2483 = vunpack.c.l.bf16 %v2467
        %v2484 = vunpack.c.l.bf16 %v2468
        %v2485 = vunpack.c.l.bf16 %v2469
        %v2486 = vunpack.c.l.bf16 %v2470
        %v2487 = vunpack.c.l.bf16 %v2471
        %v2488 = vunpack.c.l.bf16 %v2472
        %v2489 = vunpack.c.l.bf16 %v2473
        %v2490 = vunpack.c.l.bf16 %v2474
        %v2491 = vunpack.c.l.bf16 %v2475
        %v2492 = vunpack.c.l.bf16 %v2476
        %v2493 = vunpack.c.l.bf16 %v2477
        %v2494 = vunpack.c.l.bf16 %v2478
        %v2495 = vunpack.c.l.bf16 %v2479
        %v2496 = vmul.f32 %v2480, %v2238
        %v2497 = vmul.f32 %v2481, %v2253
        %v2498 = vmul.f32 %v2482, %v2268
        %v2499 = vmul.f32 %v2483, %v2283
        %v2500 = vmul.f32 %v2484, %v2298
        %v2501 = vmul.f32 %v2485, %v2313
        %v2502 = vmul.f32 %v2486, %v2328
        %v2503 = vmul.f32 %v2487, %v2343
        %v2504 = vmul.f32 %v2488, %v2358
        %v2505 = vmul.f32 %v2489, %v2373
        %v2506 = vmul.f32 %v2490, %v2388
        %v2507 = vmul.f32 %v2491, %v2403
        %v2508 = vmul.f32 %v2492, %v2418
        %v2509 = vmul.f32 %v2493, %v2433
        %v2510 = vmul.f32 %v2494, %v2448
        %v2511 = vmul.f32 %v2495, %v2463
        %v2512 = vsel %vm2079, %v2496, 0.0
        %2513 = vadd.xlane.f32.xlu0 %v2512
        %v2514 = vpop.xlane.xlu0 %2513
        %v2515 = vsel %vm2079, %v2497, 0.0
        %2516 = vadd.xlane.f32.xlu0 %v2515
        %v2517 = vpop.xlane.xlu0 %2516
        %v2518 = vsel %vm2079, %v2498, 0.0
        %2519 = vadd.xlane.f32.xlu0 %v2518
        %v2520 = vpop.xlane.xlu0 %2519
        %v2521 = vsel %vm2079, %v2499, 0.0
        %2522 = vadd.xlane.f32.xlu0 %v2521
        %v2523 = vpop.xlane.xlu0 %2522
        %v2524 = vsel %vm2079, %v2500, 0.0
        %2525 = vadd.xlane.f32.xlu0 %v2524
        %v2526 = vpop.xlane.xlu0 %2525
        %v2527 = vsel %vm2079, %v2501, 0.0
        %2528 = vadd.xlane.f32.xlu0 %v2527
        %v2529 = vpop.xlane.xlu0 %2528
        %v2530 = vsel %vm2079, %v2502, 0.0
        %2531 = vadd.xlane.f32.xlu0 %v2530
        %v2532 = vpop.xlane.xlu0 %2531
        %v2533 = vsel %vm2079, %v2503, 0.0
        %2534 = vadd.xlane.f32.xlu0 %v2533
        %v2535 = vpop.xlane.xlu0 %2534
        %v2536 = vsel %vm2079, %v2504, 0.0
        %2537 = vadd.xlane.f32.xlu0 %v2536
        %v2538 = vpop.xlane.xlu0 %2537
        %v2539 = vsel %vm2079, %v2505, 0.0
        %2540 = vadd.xlane.f32.xlu0 %v2539
        %v2541 = vpop.xlane.xlu0 %2540
        %v2542 = vsel %vm2079, %v2506, 0.0
        %2543 = vadd.xlane.f32.xlu0 %v2542
        %v2544 = vpop.xlane.xlu0 %2543
        %v2545 = vsel %vm2079, %v2507, 0.0
        %2546 = vadd.xlane.f32.xlu0 %v2545
        %v2547 = vpop.xlane.xlu0 %2546
        %v2548 = vsel %vm2079, %v2508, 0.0
        %2549 = vadd.xlane.f32.xlu0 %v2548
        %v2550 = vpop.xlane.xlu0 %2549
        %v2551 = vsel %vm2079, %v2509, 0.0
        %2552 = vadd.xlane.f32.xlu0 %v2551
        %v2553 = vpop.xlane.xlu0 %2552
        %v2554 = vsel %vm2079, %v2510, 0.0
        %2555 = vadd.xlane.f32.xlu0 %v2554
        %v2556 = vpop.xlane.xlu0 %2555
        %v2557 = vsel %vm2079, %v2511, 0.0
        %2558 = vadd.xlane.f32.xlu0 %v2557
        %v2559 = vpop.xlane.xlu0 %2558
        %v2560 = vld [vmem:[%s806] sm:$0xf]
        %v2561 = vld [vmem:[%s806 + $0x4] sm:$0xf]
        %v2562 = vld [vmem:[%s806 + $0x8] sm:$0xf]
        %v2563 = vld [vmem:[%s806 + $0xc] sm:$0xf]
        %v2564 = vld [vmem:[%s806 + $0x10] sm:$0xf]
        %v2565 = vld [vmem:[%s806 + $0x14] sm:$0xf]
        %v2566 = vld [vmem:[%s806 + $0x18] sm:$0xf]
        %v2567 = vld [vmem:[%s806 + $0x1c] sm:$0xf]
        %v2568 = vld [vmem:[%s806 + $0x20] sm:$0xf]
        %v2569 = vld [vmem:[%s806 + $0x24] sm:$0xf]
        %v2570 = vld [vmem:[%s806 + $0x28] sm:$0xf]
        %v2571 = vld [vmem:[%s806 + $0x2c] sm:$0xf]
        %v2572 = vld [vmem:[%s806 + $0x30] sm:$0xf]
        %v2573 = vld [vmem:[%s806 + $0x34] sm:$0xf]
        %v2574 = vld [vmem:[%s806 + $0x38] sm:$0xf]
        %v2575 = vld [vmem:[%s806 + $0x3c] sm:$0xf]
        %v2576 = vunpack.c.l.bf16 %v2560
        %v2577 = vunpack.c.l.bf16 %v2561
        %v2578 = vunpack.c.l.bf16 %v2562
        %v2579 = vunpack.c.l.bf16 %v2563
        %v2580 = vunpack.c.l.bf16 %v2564
        %v2581 = vunpack.c.l.bf16 %v2565
        %v2582 = vunpack.c.l.bf16 %v2566
        %v2583 = vunpack.c.l.bf16 %v2567
        %v2584 = vunpack.c.l.bf16 %v2568
        %v2585 = vunpack.c.l.bf16 %v2569
        %v2586 = vunpack.c.l.bf16 %v2570
        %v2587 = vunpack.c.l.bf16 %v2571
        %v2588 = vunpack.c.l.bf16 %v2572
        %v2589 = vunpack.c.l.bf16 %v2573
        %v2590 = vunpack.c.l.bf16 %v2574
        %v2591 = vunpack.c.l.bf16 %v2575
        %v2592 = vmul.f32 %v2576, %v2238
        %v2593 = vmul.f32 %v2577, %v2253
        %v2594 = vmul.f32 %v2578, %v2268
        %v2595 = vmul.f32 %v2579, %v2283
        %v2596 = vmul.f32 %v2580, %v2298
        %v2597 = vmul.f32 %v2581, %v2313
        %v2598 = vmul.f32 %v2582, %v2328
        %v2599 = vmul.f32 %v2583, %v2343
        %v2600 = vmul.f32 %v2584, %v2358
        %v2601 = vmul.f32 %v2585, %v2373
        %v2602 = vmul.f32 %v2586, %v2388
        %v2603 = vmul.f32 %v2587, %v2403
        %v2604 = vmul.f32 %v2588, %v2418
        %v2605 = vmul.f32 %v2589, %v2433
        %v2606 = vmul.f32 %v2590, %v2448
        %v2607 = vmul.f32 %v2591, %v2463
        %v2608 = vsel %vm2079, %v2592, 0.0
        %2609 = vadd.xlane.f32.xlu0 %v2608
        %v2610 = vpop.xlane.xlu0 %2609
        %v2611 = vsel %vm2079, %v2593, 0.0
        %2612 = vadd.xlane.f32.xlu0 %v2611
        %v2613 = vpop.xlane.xlu0 %2612
        %v2614 = vsel %vm2079, %v2594, 0.0
        %2615 = vadd.xlane.f32.xlu0 %v2614
        %v2616 = vpop.xlane.xlu0 %2615
        %v2617 = vsel %vm2079, %v2595, 0.0
        %2618 = vadd.xlane.f32.xlu0 %v2617
        %v2619 = vpop.xlane.xlu0 %2618
        %v2620 = vsel %vm2079, %v2596, 0.0
        %2621 = vadd.xlane.f32.xlu0 %v2620
        %v2622 = vpop.xlane.xlu0 %2621
        %v2623 = vsel %vm2079, %v2597, 0.0
        %2624 = vadd.xlane.f32.xlu0 %v2623
        %v2625 = vpop.xlane.xlu0 %2624
        %v2626 = vsel %vm2079, %v2598, 0.0
        %2627 = vadd.xlane.f32.xlu0 %v2626
        %v2628 = vpop.xlane.xlu0 %2627
        %v2629 = vsel %vm2079, %v2599, 0.0
        %2630 = vadd.xlane.f32.xlu0 %v2629
        %v2631 = vpop.xlane.xlu0 %2630
        %v2632 = vsel %vm2079, %v2600, 0.0
        %2633 = vadd.xlane.f32.xlu0 %v2632
        %v2634 = vpop.xlane.xlu0 %2633
        %v2635 = vsel %vm2079, %v2601, 0.0
        %2636 = vadd.xlane.f32.xlu0 %v2635
        %v2637 = vpop.xlane.xlu0 %2636
        %v2638 = vsel %vm2079, %v2602, 0.0
        %2639 = vadd.xlane.f32.xlu0 %v2638
        %v2640 = vpop.xlane.xlu0 %2639
        %v2641 = vsel %vm2079, %v2603, 0.0
        %2642 = vadd.xlane.f32.xlu0 %v2641
        %v2643 = vpop.xlane.xlu0 %2642
        %v2644 = vsel %vm2079, %v2604, 0.0
        %2645 = vadd.xlane.f32.xlu0 %v2644
        %v2646 = vpop.xlane.xlu0 %2645
        %v2647 = vsel %vm2079, %v2605, 0.0
        %2648 = vadd.xlane.f32.xlu0 %v2647
        %v2649 = vpop.xlane.xlu0 %2648
        %v2650 = vsel %vm2079, %v2606, 0.0
        %2651 = vadd.xlane.f32.xlu0 %v2650
        %v2652 = vpop.xlane.xlu0 %2651
        %v2653 = vsel %vm2079, %v2607, 0.0
        %2654 = vadd.xlane.f32.xlu0 %v2653
        %v2655 = vpop.xlane.xlu0 %2654
        %v2656 = vld [vmem:[%s812] sm:$0xf]
        %v2657 = vld [vmem:[%s812 + $0x4] sm:$0xf]
        %v2658 = vld [vmem:[%s812 + $0x8] sm:$0xf]
        %v2659 = vld [vmem:[%s812 + $0xc] sm:$0xf]
        %v2660 = vld [vmem:[%s812 + $0x10] sm:$0xf]
        %v2661 = vld [vmem:[%s812 + $0x14] sm:$0xf]
        %v2662 = vld [vmem:[%s812 + $0x18] sm:$0xf]
        %v2663 = vld [vmem:[%s812 + $0x1c] sm:$0xf]
        %v2664 = vld [vmem:[%s812 + $0x20] sm:$0xf]
        %v2665 = vld [vmem:[%s812 + $0x24] sm:$0xf]
        %v2666 = vld [vmem:[%s812 + $0x28] sm:$0xf]
        %v2667 = vld [vmem:[%s812 + $0x2c] sm:$0xf]
        %v2668 = vld [vmem:[%s812 + $0x30] sm:$0xf]
        %v2669 = vld [vmem:[%s812 + $0x34] sm:$0xf]
        %v2670 = vld [vmem:[%s812 + $0x38] sm:$0xf]
        %v2671 = vld [vmem:[%s812 + $0x3c] sm:$0xf]
        %v2672 = vunpack.c.l.bf16 %v2656
        %v2673 = vunpack.c.l.bf16 %v2657
        %v2674 = vunpack.c.l.bf16 %v2658
        %v2675 = vunpack.c.l.bf16 %v2659
        %v2676 = vunpack.c.l.bf16 %v2660
        %v2677 = vunpack.c.l.bf16 %v2661
        %v2678 = vunpack.c.l.bf16 %v2662
        %v2679 = vunpack.c.l.bf16 %v2663
        %v2680 = vunpack.c.l.bf16 %v2664
        %v2681 = vunpack.c.l.bf16 %v2665
        %v2682 = vunpack.c.l.bf16 %v2666
        %v2683 = vunpack.c.l.bf16 %v2667
        %v2684 = vunpack.c.l.bf16 %v2668
        %v2685 = vunpack.c.l.bf16 %v2669
        %v2686 = vunpack.c.l.bf16 %v2670
        %v2687 = vunpack.c.l.bf16 %v2671
        %v2688 = vmul.f32 %v2672, %v2238
        %v2689 = vmul.f32 %v2673, %v2253
        %v2690 = vmul.f32 %v2674, %v2268
        %v2691 = vmul.f32 %v2675, %v2283
        %v2692 = vmul.f32 %v2676, %v2298
        %v2693 = vmul.f32 %v2677, %v2313
        %v2694 = vmul.f32 %v2678, %v2328
        %v2695 = vmul.f32 %v2679, %v2343
        %v2696 = vmul.f32 %v2680, %v2358
        %v2697 = vmul.f32 %v2681, %v2373
        %v2698 = vmul.f32 %v2682, %v2388
        %v2699 = vmul.f32 %v2683, %v2403
        %v2700 = vmul.f32 %v2684, %v2418
        %v2701 = vmul.f32 %v2685, %v2433
        %v2702 = vmul.f32 %v2686, %v2448
        %v2703 = vmul.f32 %v2687, %v2463
        %v2704 = vsel %vm2079, %v2688, 0.0
        %2705 = vadd.xlane.f32.xlu0 %v2704
        %v2706 = vpop.xlane.xlu0 %2705
        %v2707 = vsel %vm2079, %v2689, 0.0
        %2708 = vadd.xlane.f32.xlu0 %v2707
        %v2709 = vpop.xlane.xlu0 %2708
        %v2710 = vsel %vm2079, %v2690, 0.0
        %2711 = vadd.xlane.f32.xlu0 %v2710
        %v2712 = vpop.xlane.xlu0 %2711
        %v2713 = vsel %vm2079, %v2691, 0.0
        %2714 = vadd.xlane.f32.xlu0 %v2713
        %v2715 = vpop.xlane.xlu0 %2714
        %v2716 = vsel %vm2079, %v2692, 0.0
        %2717 = vadd.xlane.f32.xlu0 %v2716
        %v2718 = vpop.xlane.xlu0 %2717
        %v2719 = vsel %vm2079, %v2693, 0.0
        %2720 = vadd.xlane.f32.xlu0 %v2719
        %v2721 = vpop.xlane.xlu0 %2720
        %v2722 = vsel %vm2079, %v2694, 0.0
        %2723 = vadd.xlane.f32.xlu0 %v2722
        %v2724 = vpop.xlane.xlu0 %2723
        %v2725 = vsel %vm2079, %v2695, 0.0
        %2726 = vadd.xlane.f32.xlu0 %v2725
        %v2727 = vpop.xlane.xlu0 %2726
        %v2728 = vsel %vm2079, %v2696, 0.0
        %2729 = vadd.xlane.f32.xlu0 %v2728
        %v2730 = vpop.xlane.xlu0 %2729
        %v2731 = vsel %vm2079, %v2697, 0.0
        %2732 = vadd.xlane.f32.xlu0 %v2731
        %v2733 = vpop.xlane.xlu0 %2732
        %v2734 = vsel %vm2079, %v2698, 0.0
        %2735 = vadd.xlane.f32.xlu0 %v2734
        %v2736 = vpop.xlane.xlu0 %2735
        %v2737 = vsel %vm2079, %v2699, 0.0
        %2738 = vadd.xlane.f32.xlu0 %v2737
        %v2739 = vpop.xlane.xlu0 %2738
        %v2740 = vsel %vm2079, %v2700, 0.0
        %2741 = vadd.xlane.f32.xlu0 %v2740
        %v2742 = vpop.xlane.xlu0 %2741
        %v2743 = vsel %vm2079, %v2701, 0.0
        %2744 = vadd.xlane.f32.xlu0 %v2743
        %v2745 = vpop.xlane.xlu0 %2744
        %v2746 = vsel %vm2079, %v2702, 0.0
        %2747 = vadd.xlane.f32.xlu0 %v2746
        %v2748 = vpop.xlane.xlu0 %2747
        %v2749 = vsel %vm2079, %v2703, 0.0
        %2750 = vadd.xlane.f32.xlu0 %v2749
        %v2751 = vpop.xlane.xlu0 %2750
        %vm2752 = vcmask 7168
        %v2753 = vsel %vm2752, %v2514, %v2610
        %v2754 = vsel %vm2752, %v2517, %v2613
        %v2755 = vsel %vm2752, %v2520, %v2616
        %v2756 = vsel %vm2752, %v2523, %v2619
        %v2757 = vsel %vm2752, %v2526, %v2622
        %v2758 = vsel %vm2752, %v2529, %v2625
        %v2759 = vsel %vm2752, %v2532, %v2628
        %v2760 = vsel %vm2752, %v2535, %v2631
        %v2761 = vsel %vm2752, %v2538, %v2634
        %v2762 = vsel %vm2752, %v2541, %v2637
        %v2763 = vsel %vm2752, %v2544, %v2640
        %v2764 = vsel %vm2752, %v2547, %v2643
        %v2765 = vsel %vm2752, %v2550, %v2646
        %v2766 = vsel %vm2752, %v2553, %v2649
        %v2767 = vsel %vm2752, %v2556, %v2652
        %v2768 = vsel %vm2752, %v2559, %v2655
        %vm2769 = vcmask 15360
        %v2770 = vsel %vm2769, %v2753, %v2706
        %v2771 = vsel %vm2769, %v2754, %v2709
        %v2772 = vsel %vm2769, %v2755, %v2712
        %v2773 = vsel %vm2769, %v2756, %v2715
        %v2774 = vsel %vm2769, %v2757, %v2718
        %v2775 = vsel %vm2769, %v2758, %v2721
        %v2776 = vsel %vm2769, %v2759, %v2724
        %v2777 = vsel %vm2769, %v2760, %v2727
        %v2778 = vsel %vm2769, %v2761, %v2730
        %v2779 = vsel %vm2769, %v2762, %v2733
        %v2780 = vsel %vm2769, %v2763, %v2736
        %v2781 = vsel %vm2769, %v2764, %v2739
        %v2782 = vsel %vm2769, %v2765, %v2742
        %v2783 = vsel %vm2769, %v2766, %v2745
        %v2784 = vsel %vm2769, %v2767, %v2748
        %v2785 = vsel %vm2769, %v2768, %v2751
        %vm2786 = vcmask 23552
        %v2787 = vsel %vm2786, %v2770, 0.0
        %v2788 = vsel %vm2786, %v2771, 0.0
        %v2789 = vsel %vm2786, %v2772, 0.0
        %v2790 = vsel %vm2786, %v2773, 0.0
        %v2791 = vsel %vm2786, %v2774, 0.0
        %v2792 = vsel %vm2786, %v2775, 0.0
        %v2793 = vsel %vm2786, %v2776, 0.0
        %v2794 = vsel %vm2786, %v2777, 0.0
        %v2795 = vsel %vm2786, %v2778, 0.0
        %v2796 = vsel %vm2786, %v2779, 0.0
        %v2797 = vsel %vm2786, %v2780, 0.0
        %v2798 = vsel %vm2786, %v2781, 0.0
        %v2799 = vsel %vm2786, %v2782, 0.0
        %v2800 = vsel %vm2786, %v2783, 0.0
        %v2801 = vsel %vm2786, %v2784, 0.0
        %v2802 = vsel %vm2786, %v2785, 0.0
        %vm2803 = vcmask 64512
        %2804 = vst.msk [vmem:[%s818] sm:$0xff] %vm2803, %v2787
        %2805 = vst.msk [vmem:[%s818 + $0x8] sm:$0xff] %vm2803, %v2788
        %2806 = vst.msk [vmem:[%s818 + $0x10] sm:$0xff] %vm2803, %v2789
        %2807 = vst.msk [vmem:[%s818 + $0x18] sm:$0xff] %vm2803, %v2790
        %2808 = vst.msk [vmem:[%s818 + $0x20] sm:$0xff] %vm2803, %v2791
        %2809 = vst.msk [vmem:[%s818 + $0x28] sm:$0xff] %vm2803, %v2792
        %2810 = vst.msk [vmem:[%s818 + $0x30] sm:$0xff] %vm2803, %v2793
        %2811 = vst.msk [vmem:[%s818 + $0x38] sm:$0xff] %vm2803, %v2794
        %2812 = vst.msk [vmem:[%s818 + $0x40] sm:$0xff] %vm2803, %v2795
        %2813 = vst.msk [vmem:[%s818 + $0x48] sm:$0xff] %vm2803, %v2796
        %2814 = vst.msk [vmem:[%s818 + $0x50] sm:$0xff] %vm2803, %v2797
        %2815 = vst.msk [vmem:[%s818 + $0x58] sm:$0xff] %vm2803, %v2798
        %2816 = vst.msk [vmem:[%s818 + $0x60] sm:$0xff] %vm2803, %v2799
        %2817 = vst.msk [vmem:[%s818 + $0x68] sm:$0xff] %vm2803, %v2800
        %2818 = vst.msk [vmem:[%s818 + $0x70] sm:$0xff] %vm2803, %v2801
        %2819 = vst.msk [vmem:[%s818 + $0x78] sm:$0xff] %vm2803, %v2802
        %s2820 = smul.u32 16, %s19
        %p2821 = scmp.lt.s32.totalorder %s2820, 31
        %s2822 = scalar_select %p2821, %s2820, 31
        %s2823 = smul.addr %s2822, 8
        %s2824 = scalar_lea.vmem %s8, %s2823
        // Predicated region
        $region94: #{forward.3} parent=88 // pred_check
          %p2825 = pneg %p230
        $region95: #{forward.3} parent=88 // pred_check_branch
          %2827 = sbr.rel (%p2825) target = $region97
        $region96: #{forward.3} parent=88 // pred_region
          %s2828 = smul.u32 16, %s19
        $region97: #{forward.3} parent=88 // pred_fallthru
          _
      $region89: #{forward.3} parent=5 // pred_fallthru
        _
      %p2829 = scmp.le.s32.totalorder 2, %s14
      // Predicated region
      $region98: #{forward.3} parent=5 // pred_check
        %p2830 = pneg %p2829
      $region99: #{forward.3} parent=5 // pred_check_branch
        %2832 = sbr.rel (%p2830) target = $region101
      $region100: #{forward.3} parent=5 // pred_region
        %s2833 = ssub.s32 %s14, 2
        // Predicated region
        $region102: #{forward.3} parent=100 // pred_check
          %p2834 = pneg %p236
        $region103: #{forward.3} parent=100 // pred_check_branch
          %2836 = sbr.rel (%p2834) target = $region105
        $region104: #{forward.3} parent=100 // pred_region
          %s2837 = smul.u32 16, %s20
          %p2838 = scmp.lt.s32.totalorder %s2837, 31
          %s2839 = scalar_select %p2838, %s2837, 31
          %s2840 = smul.addr %s2839, 8
          %s2841 = scalar_lea.vmem %s8, %s2840
        $region105: #{forward.3} parent=100 // pred_fallthru
          _
      $region101: #{forward.3} parent=5 // pred_fallthru
        _
    $region6: #{forward.3} parent=1 // loop_footer
      %s18 = sadd.s32 1, %s14
    $region7: #{forward.3} parent=1 // loop_footer_branch
      %13 = sbr.rel target = $region3
    $region8: #{forward.3} parent=1 // loop_exit
      _

</llo_original>
